<compile_context>
chip_gen: v7x
topology: tpu7x:2x2x1
jax: 0.10.0
libtpu: 0.0.40
codegen_flags: <defaults>
</compile_context>

<pallas_src>
import functools

import numpy as np

import jax
import jax.numpy as jnp
from jax import lax
from jax.experimental import pallas as pl
from jax.experimental.pallas import tpu as pltpu

_BIG = 1e30            # finite "infinity" used for masking
_USED = 3.0e38         # sentinel written over already-selected kNN keys
_USED_THRESH = 1.0e38  # any key >= this was selected (real keys are <= ~1e30)


def _elu(v):
    # ELU(alpha=1): x if x > 0 else exp(x) - 1
    return jnp.where(v > 0.0, v, jnp.exp(jnp.minimum(v, 0.0)) - 1.0)


def _gravnet_tile_kernel(
    x_ref, bcol_ref, brow_ref,
    ws_ref, bs_ref, wsT_ref, bs_col_ref,
    wh_ref, bh_ref, whT_ref, bh_col_ref,
    wlin_mean_ref, wlin_max_ref, blin_ref,
    wpg1_x_ref, wpg1_s_ref, bpg1_ref,
    wpg2_ref, bpg2_ref,
    wout_mean_ref, wout_min_ref, wout_max_ref, wout_x_ref, bout_ref,
    out_ref, nbr_ref,
    accmax_ref,
    *, k, graphs_per_tile, knn_unroll, per_step_agg, agg_dtype,
):
    f32 = jnp.float32
    x = x_ref[...]                       # (T, C)  this tile's nodes
    bcol = bcol_ref[...]                 # (T, 1)  local graph id (f32)
    brow = brow_ref[0]                   # (1, T)  local graph id (f32)
    t = x.shape[0]
    p_dim = wh_ref.shape[1]

    # --- GravNetConv: learned space coords + features to propagate ----------
    # Transposed copies come from transposed-weight matmuls (no in-kernel
    # transpose): s_lT is (S, T).
    s_l = jnp.dot(x, ws_ref[...], preferred_element_type=f32) + bs_ref[...]      # (T, S)
    s_lT = lax.dot_general(wsT_ref[...], x, (((1,), (1,)), ((), ())),
                           preferred_element_type=f32) + bs_col_ref[...]          # (S, T)
    h_l = jnp.dot(x, wh_ref[...], preferred_element_type=f32) + bh_ref[...]       # (T, P)
    h_agg = h_l.astype(agg_dtype)

    # pairwise squared distances: |s_i|^2 + |s_j|^2 - 2 s_i . s_j  (f32 ordering path)
    norm_col = jnp.sum(s_l * s_l, axis=1, keepdims=True)                          # (T, 1)
    norm_row = jnp.sum(s_lT * s_lT, axis=0, keepdims=True)                        # (1, T)
    gram = jnp.dot(s_l, s_lT, preferred_element_type=f32)                         # (T, T)
    d2 = jnp.maximum(norm_col + norm_row - 2.0 * gram, 0.0)

    same_graph = bcol == brow                                                     # (T, T)
    dist = jnp.where(same_graph, d2, _BIG)
    # Cross-graph entries: exp(-10 * 1e30) flushes to exactly 0 -> no extra mask.
    w_full = jnp.exp((-10.0 * dist).astype(agg_dtype))                            # (T, T)

    # --- kNN selection: one fused lane reduction per step ---------------------
    col_iota = lax.broadcasted_iota(jnp.int32, (t, t), 1)
    idx_bits = max((t - 1).bit_length(), 1)
    low_mask = (1 << idx_bits) - 1
    # Pack (distance, column) into a single f32 key: bias by +1 so every key is
    # a normal positive float, clear the low idx_bits mantissa bits
    # (order-preserving up to tie-breaking) and OR in the column index.  One
    # jnp.min then yields both the argmin column and the removal mask.
    key_bits = (pltpu.bitcast(dist + 1.0, jnp.int32) & jnp.int32(~low_mask)) | col_iota
    key0 = pltpu.bitcast(key_bits, jnp.float32)
    lane_iota_k = lax.broadcasted_iota(jnp.int32, (t, k), 1)
    used = jnp.float32(_USED)

    if per_step_agg:
        # Path A (k <= P): per-step MXU aggregation; no (T,T) selection carry.
        def knn_step(step, carry):
            key, acc_sum, acc_max, nbr = carry
            kmin = jnp.min(key, axis=1, keepdims=True)                # (T, 1)
            jsel = pltpu.bitcast(kmin, jnp.int32) & low_mask          # (T, 1)
            sel = col_iota == jsel                                    # one-hot per row
            key = jnp.where(sel, used, key)
            sel_w = jnp.where(sel, w_full, jnp.zeros((), agg_dtype))  # (T, T)
            contrib = jnp.dot(sel_w, h_agg, preferred_element_type=f32)   # (T, P)
            acc_sum = acc_sum + contrib
            acc_max = jnp.maximum(acc_max, contrib)
            nbr = nbr + jnp.where(lane_iota_k == step, jsel, 0)
            return key, acc_sum, acc_max, nbr

        _, acc_sum, acc_max, nbr = lax.fori_loop(
            0, k, knn_step,
            (key0, jnp.zeros((t, p_dim), f32),
             jnp.full((t, p_dim), -_BIG, f32),
             jnp.zeros((t, k), jnp.int32)),
            unroll=knn_unroll)
    else:
        # Path B (k > P): lean kNN loop, then one mean matmul + P masked
        # row-max passes written straight into VMEM scratch columns.
        def knn_step(step, carry):
            key, nbr = carry
            kmin = jnp.min(key, axis=1, keepdims=True)
            jsel = pltpu.bitcast(kmin, jnp.int32) & low_mask
            sel = col_iota == jsel
            key = jnp.where(sel, used, key)
            nbr = nbr + jnp.where(lane_iota_k == step, jsel, 0)
            return key, nbr

        key_fin, nbr = lax.fori_loop(
            0, k, knn_step, (key0, jnp.zeros((t, k), jnp.int32)), unroll=knn_unroll)

        sel_mask = key_fin >= jnp.float32(_USED_THRESH)                       # (T, T)
        w_sel = jnp.where(sel_mask, w_full, jnp.zeros((), agg_dtype))
        acc_sum = jnp.dot(w_sel, h_agg, preferred_element_type=f32)           # (T, P)

        h_lT = (lax.dot_general(whT_ref[...], x, (((1,), (1,)), ((), ())),
                                preferred_element_type=f32)
                + bh_col_ref[...]).astype(agg_dtype)                          # (P, T)
        neg = jnp.asarray(-_BIG, agg_dtype)
        for p in range(p_dim):
            cand = jnp.where(sel_mask, w_full * h_lT[p:p + 1, :], neg)        # (T, T)
            accmax_ref[:, p:p + 1] = jnp.max(cand, axis=1, keepdims=True).astype(f32)
        acc_max = accmax_ref[...]

    # lin(cat[mean, max]) via split weights (no lane concat)
    x_grav = (jnp.dot(acc_sum * (1.0 / k), wlin_mean_ref[...], preferred_element_type=f32)
              + jnp.dot(acc_max, wlin_max_ref[...], preferred_element_type=f32)
              + blin_ref[...])                                                 # (T, OUT)

    # post_gravnet(cat[x_grav, s_l]) via split weights
    h1 = _elu(jnp.dot(x_grav, wpg1_x_ref[...], preferred_element_type=f32)
              + jnp.dot(s_l, wpg1_s_ref[...], preferred_element_type=f32)
              + bpg1_ref[...])
    h2 = _elu(jnp.dot(h1, wpg2_ref[...], preferred_element_type=f32) + bpg2_ref[...])  # (T, C)

    # --- global_exchange over the graphs living in this tile ------------------
    # Per-graph mean via two MXU matmuls through a (T, G) one-hot.
    g_row = lax.broadcasted_iota(jnp.int32, (1, graphs_per_tile), 1).astype(f32)  # (1, G)
    onehot = jnp.where(bcol == g_row, 1.0, 0.0).astype(f32)                        # (T, G)
    gsum = lax.dot_general(onehot, h2, (((0,), (0,)), ((), ())),
                           preferred_element_type=f32)                             # (G, C)
    mean_nodes = jnp.dot(onehot, gsum, preferred_element_type=f32)                 # (T, C)
    counts = jnp.sum(onehot, axis=0, keepdims=True)                                # (1, G)
    node_cnt = jnp.sum(onehot * counts, axis=1, keepdims=True)                     # (T, 1) >= 1
    gmean = mean_nodes * (1.0 / node_cnt)

    # Per-graph min/max: masked passes inside a fori_loop (bounded live ranges).
    def gx_step(b, carry):
        gmin, gmax = carry
        b_f = jnp.asarray(b).astype(f32)
        mask = bcol == b_f                                                          # (T, 1)
        mask_f = jnp.where(mask, 1.0, 0.0)
        gmn = jnp.min(jnp.where(mask, h2, _BIG), axis=0, keepdims=True)             # (1, C)
        gmx = jnp.max(jnp.where(mask, h2, -_BIG), axis=0, keepdims=True)
        return gmin + mask_f * gmn, gmax + mask_f * gmx

    gmin, gmax = lax.fori_loop(
        0, graphs_per_tile, gx_step,
        (jnp.zeros_like(h2), jnp.zeros_like(h2)),
        unroll=True if graphs_per_tile <= 4 else 2)

    # output(cat[mean, min, max, x]) via split weights
    out = _elu(jnp.dot(gmean, wout_mean_ref[...], preferred_element_type=f32)
               + jnp.dot(gmin, wout_min_ref[...], preferred_element_type=f32)
               + jnp.dot(gmax, wout_max_ref[...], preferred_element_type=f32)
               + jnp.dot(h2, wout_x_ref[...], preferred_element_type=f32)
               + bout_ref[...])                                                     # (T, C)

    out_ref[...] = out
    # local tile-relative neighbor indices -> global node indices
    nbr_ref[...] = nbr + pl.program_id(0) * t


def _default_agg_dtype():
    # bf16 elementwise/EUP/MXU only pays off on v6e/v7x; v5e and older keep f32.
    try:
        kind = jax.devices()[0].device_kind.lower()
    except Exception:
        return jnp.float32
    return jnp.bfloat16 if ("v6" in kind or "v7" in kind) else jnp.float32


def _vmem_limit_bytes(tile_n, agg_bytes):
    # ~3 live f32 (T,T) buffers (dist / key / temporaries) + ~3 agg-dtype (T,T)
    # (edge weights, selection, candidates) + row tensors / weights / slack.
    tt = tile_n * tile_n
    est = int(1.5 * tt * (3 * 4 + 3 * agg_bytes)) + (8 << 20)
    return int(min(max(est, 32 << 20), 100 << 20))


def gravnet_block(x, batch, params, *, k, num_graphs, row_tiles=1, agg_dtype=None):
    """GravNetBlock forward.

    `row_tiles > 1` (parallel grid axis) requires the nodes to be grouped into
    `row_tiles` equal contiguous row tiles, each containing
    `num_graphs // row_tiles` whole graphs.  On v7x use an even `row_tiles >= 2`
    (2 TensorCores) and keep `tile_n = n // row_tiles` around 1024-1536; on
    v5e/v6e prefer the fewest tiles that fit VMEM.  `row_tiles=1` handles any
    batch vector.  `agg_dtype=None` auto-selects bf16 on v6e/v7x, f32 otherwise.
    """
    n, c = x.shape
    if n % row_tiles or num_graphs % row_tiles:
        raise ValueError("row_tiles must divide both the node count and num_graphs")
    tile_n = n // row_tiles
    gpt = num_graphs // row_tiles
    if row_tiles > 1:
        if tile_n % 8:
            raise ValueError("tile rows (n // row_tiles) must be a multiple of 8")
        try:
            b_np = np.asarray(batch)
        except Exception:
            # TODO(synk): traced batch under jit skips this layout check.
            b_np = None
        if b_np is not None and not np.array_equal(
                b_np.astype(np.int64) // gpt, np.arange(n) // tile_n):
            raise ValueError("row_tiles > 1 requires graphs grouped into equal, "
                             "contiguous row tiles (use row_tiles=1 otherwise)")

    if agg_dtype is None:
        agg_dtype = _default_agg_dtype()

    s_dim = params["w_s"].shape[1]
    p_dim = params["w_h"].shape[1]
    out_dim = params["w_lin"].shape[1]

    # batch ids local to their tile (in [0, graphs_per_tile)), as f32 col/row.
    batch_local = (batch.astype(jnp.int32) % gpt).astype(jnp.float32)
    bcol = batch_local.reshape(n, 1)
    brow = batch_local.reshape(row_tiles, 1, tile_n)

    # Weight splitting / transposition happens here (outside the kernel) so the
    # kernel never needs a lane-axis concatenate or an in-kernel transpose.
    wsT = params["w_s"].T                       # (S, C)
    whT = params["w_h"].T                       # (P, C)
    bs_col = params["b_s"].reshape(s_dim, 1)
    bh_col = params["b_h"].reshape(p_dim, 1)
    wlin_mean = params["w_lin"][:p_dim]
    wlin_max = params["w_lin"][p_dim:]
    wpg1_x = params["w_pg1"][:out_dim]
    wpg1_s = params["w_pg1"][out_dim:]
    wout_mean = params["w_out"][0 * c:1 * c]
    wout_min = params["w_out"][1 * c:2 * c]
    wout_max = params["w_out"][2 * c:3 * c]
    wout_x = params["w_out"][3 * c:4 * c]

    # TODO(synk): the ~21 tiny weight/bias inputs could be packed into a single
    # slab to save warm-up DMA descriptors/buffers; negligible at these sizes.
    inputs = [
        x, bcol, brow,
        params["w_s"], params["b_s"], wsT, bs_col,
        params["w_h"], params["b_h"], whT, bh_col,
        wlin_mean, wlin_max, params["b_lin"],
        wpg1_x, wpg1_s, params["b_pg1"],
        params["w_pg2"], params["b_pg2"],
        wout_mean, wout_min, wout_max, wout_x, params["b_out"],
    ]

    def row_spec(shape):
        r = len(shape)
        return pl.BlockSpec(shape, lambda i, _r=r: (i,) + (0,) * (_r - 1))

    def full_spec(shape):
        r = len(shape)
        return pl.BlockSpec(shape, lambda i, _r=r: (0,) * _r)

    in_specs = [row_spec((tile_n, c)), row_spec((tile_n, 1)), row_spec((1, 1, tile_n))]
    in_specs += [full_spec(tuple(a.shape)) for a in inputs[3:]]

    out_shape = (jax.ShapeDtypeStruct((n, c), jnp.float32),
                 jax.ShapeDtypeStruct((n, k), jnp.int32))
    out_specs = (row_spec((tile_n, c)), row_spec((tile_n, k)))

    per_step_agg = k <= p_dim
    kernel = functools.partial(
        _gravnet_tile_kernel, k=k, graphs_per_tile=gpt,
        knn_unroll=True if k <= 8 else 4,
        per_step_agg=per_step_agg, agg_dtype=agg_dtype)

    agg_bytes = jnp.dtype(agg_dtype).itemsize
    return pl.pallas_call(
        kernel,
        grid=(row_tiles,),
        in_specs=in_specs,
        out_specs=out_specs,
        out_shape=out_shape,
        scratch_shapes=[pltpu.VMEM((tile_n, p_dim), jnp.float32)],
        compiler_params=pltpu.CompilerParams(
            dimension_semantics=("parallel",),
            vmem_limit_bytes=_vmem_limit_bytes(tile_n, agg_bytes)),
    )(*inputs)


def _linear_params(key, fan_in, fan_out):
    # PyTorch nn.Linear default init: U(-1/sqrt(fan_in), 1/sqrt(fan_in)).
    kw, kb = jax.random.split(key)
    bound = 1.0 / float(fan_in) ** 0.5
    w = jax.random.uniform(kw, (fan_in, fan_out), jnp.float32, -bound, bound)
    b = jax.random.uniform(kb, (1, fan_out), jnp.float32, -bound, bound)
    return w, b


if __name__ == "__main__":
    in_channels = 8
    space_dim = 3
    prop_dim = 2 * in_channels          # 16
    out_channels = 2 * prop_dim         # 32
    n = 64                              # total nodes
    num_graphs = 2                      # two graphs of 32 nodes each

    key = jax.random.PRNGKey(0)
    keys = jax.random.split(key, 8)
    x = jax.random.normal(keys[0], (n, in_channels), jnp.float32)
    batch = jnp.concatenate([jnp.zeros(n // 2, jnp.int32),
                             jnp.ones(n // 2, jnp.int32)])

    params = {}
    params["w_s"], params["b_s"] = _linear_params(keys[1], in_channels, space_dim)
    params["w_h"], params["b_h"] = _linear_params(keys[2], in_channels, prop_dim)
    params["w_lin"], params["b_lin"] = _linear_params(keys[3], 2 * prop_dim, out_channels)
    params["w_pg1"], params["b_pg1"] = _linear_params(keys[4], out_channels + space_dim, in_channels)
    params["w_pg2"], params["b_pg2"] = _linear_params(keys[5], in_channels, in_channels)
    params["w_out"], params["b_out"] = _linear_params(keys[6], 4 * in_channels, in_channels)
    # TODO(synk): `pre_gravnet` exists in __init__ but is unused in forward(); not evaluated.

    # Path A (k <= propagate_dim): per-step MXU aggregation, two row tiles
    # (keeps both v7x TensorCores busy), agg dtype auto-selected per chip.
    out1, nbr1 = gravnet_block(x, batch, params, k=4, num_graphs=num_graphs, row_tiles=2)
    # Path B (k > propagate_dim, like the module default k=40): lean kNN loop,
    # post-loop mean matmul + scratch-stored row-max passes, f32 everywhere.
    out2, nbr2 = gravnet_block(x, batch, params, k=20, num_graphs=num_graphs,
                               row_tiles=1, agg_dtype=jnp.float32)
    jax.block_until_ready((out1, nbr1, out2, nbr2))

    assert out1.shape == (n, in_channels) and nbr1.shape == (n, 4)
    assert out2.shape == (n, in_channels) and nbr2.shape == (n, 20)
    assert bool(jnp.isfinite(out1).all()) and bool(jnp.isfinite(out2).all())
    for nbrs in (nbr1, nbr2):
        assert bool(((nbrs >= 0) & (nbrs < n)).all())
        # neighbors never cross graph boundaries (each graph has >= k nodes)
        assert bool((nbrs[: n // 2] < n // 2).all())
        assert bool((nbrs[n // 2:] >= n // 2).all())
    print("KERNEL_OK")
</pallas_src>

<mosaic_0001>
module attributes {stable_mosaic.version = 11 : i64} {
  func.func @_gravnet_tile_kernel(%arg0: i32, %arg1: memref<32x8xf32, #tpu.memory_space<vmem>>, %arg2: memref<32x1xf32, #tpu.memory_space<vmem>>, %arg3: memref<1x1x32xf32, #tpu.memory_space<vmem>>, %arg4: memref<8x3xf32, #tpu.memory_space<vmem>>, %arg5: memref<1x3xf32, #tpu.memory_space<vmem>>, %arg6: memref<3x8xf32, #tpu.memory_space<vmem>>, %arg7: memref<3x1xf32, #tpu.memory_space<vmem>>, %arg8: memref<8x16xf32, #tpu.memory_space<vmem>>, %arg9: memref<1x16xf32, #tpu.memory_space<vmem>>, %arg10: memref<16x8xf32, #tpu.memory_space<vmem>>, %arg11: memref<16x1xf32, #tpu.memory_space<vmem>>, %arg12: memref<16x32xf32, #tpu.memory_space<vmem>>, %arg13: memref<16x32xf32, #tpu.memory_space<vmem>>, %arg14: memref<1x32xf32, #tpu.memory_space<vmem>>, %arg15: memref<32x8xf32, #tpu.memory_space<vmem>>, %arg16: memref<3x8xf32, #tpu.memory_space<vmem>>, %arg17: memref<1x8xf32, #tpu.memory_space<vmem>>, %arg18: memref<8x8xf32, #tpu.memory_space<vmem>>, %arg19: memref<1x8xf32, #tpu.memory_space<vmem>>, %arg20: memref<8x8xf32, #tpu.memory_space<vmem>>, %arg21: memref<8x8xf32, #tpu.memory_space<vmem>>, %arg22: memref<8x8xf32, #tpu.memory_space<vmem>>, %arg23: memref<8x8xf32, #tpu.memory_space<vmem>>, %arg24: memref<1x8xf32, #tpu.memory_space<vmem>>, %arg25: memref<32x8xf32, #tpu.memory_space<vmem>>, %arg26: memref<32x4xi32, #tpu.memory_space<vmem>>, %arg27: memref<32x16xf32, #tpu.memory_space<vmem>>) attributes {dimension_semantics = [#tpu.dimension_semantics<parallel>], iteration_bounds = array<i64: 2>, scalar_prefetch = 0 : i64, scratch_operands = 1 : i64, tpu.core_type = #tpu.core_type<tc>, window_params = [{transform_indices = @transform_0, window_bounds = array<i64: 32, 8>}, {transform_indices = @transform_1, window_bounds = array<i64: 32, 1>}, {transform_indices = @transform_2, window_bounds = array<i64: 1, 1, 32>}, {pipeline_mode = #tpu.pipeline_mode<synchronous>, transform_indices = @transform_3, window_bounds = array<i64: 8, 3>}, {pipeline_mode = #tpu.pipeline_mode<synchronous>, transform_indices = @transform_4, window_bounds = array<i64: 1, 3>}, {pipeline_mode = #tpu.pipeline_mode<synchronous>, transform_indices = @transform_5, window_bounds = array<i64: 3, 8>}, {pipeline_mode = #tpu.pipeline_mode<synchronous>, transform_indices = @transform_6, window_bounds = array<i64: 3, 1>}, {pipeline_mode = #tpu.pipeline_mode<synchronous>, transform_indices = @transform_7, window_bounds = array<i64: 8, 16>}, {pipeline_mode = #tpu.pipeline_mode<synchronous>, transform_indices = @transform_8, window_bounds = array<i64: 1, 16>}, {pipeline_mode = #tpu.pipeline_mode<synchronous>, transform_indices = @transform_9, window_bounds = array<i64: 16, 8>}, {pipeline_mode = #tpu.pipeline_mode<synchronous>, transform_indices = @transform_10, window_bounds = array<i64: 16, 1>}, {pipeline_mode = #tpu.pipeline_mode<synchronous>, transform_indices = @transform_11, window_bounds = array<i64: 16, 32>}, {pipeline_mode = #tpu.pipeline_mode<synchronous>, transform_indices = @transform_12, window_bounds = array<i64: 16, 32>}, {pipeline_mode = #tpu.pipeline_mode<synchronous>, transform_indices = @transform_13, window_bounds = array<i64: 1, 32>}, {pipeline_mode = #tpu.pipeline_mode<synchronous>, transform_indices = @transform_14, window_bounds = array<i64: 32, 8>}, {pipeline_mode = #tpu.pipeline_mode<synchronous>, transform_indices = @transform_15, window_bounds = array<i64: 3, 8>}, {pipeline_mode = #tpu.pipeline_mode<synchronous>, transform_indices = @transform_16, window_bounds = array<i64: 1, 8>}, {pipeline_mode = #tpu.pipeline_mode<synchronous>, transform_indices = @transform_17, window_bounds = array<i64: 8, 8>}, {pipeline_mode = #tpu.pipeline_mode<synchronous>, transform_indices = @transform_18, window_bounds = array<i64: 1, 8>}, {pipeline_mode = #tpu.pipeline_mode<synchronous>, transform_indices = @transform_19, window_bounds = array<i64: 8, 8>}, {pipeline_mode = #tpu.pipeline_mode<synchronous>, transform_indices = @transform_20, window_bounds = array<i64: 8, 8>}, {pipeline_mode = #tpu.pipeline_mode<synchronous>, transform_indices = @transform_21, window_bounds = array<i64: 8, 8>}, {pipeline_mode = #tpu.pipeline_mode<synchronous>, transform_indices = @transform_22, window_bounds = array<i64: 8, 8>}, {pipeline_mode = #tpu.pipeline_mode<synchronous>, transform_indices = @transform_23, window_bounds = array<i64: 1, 8>}, {transform_indices = @transform_24, window_bounds = array<i64: 32, 8>}, {transform_indices = @transform_25, window_bounds = array<i64: 32, 4>}]} {
    %c0 = arith.constant 0 : index
    %c0_0 = arith.constant 0 : index
    %0 = vector.load %arg1[%c0, %c0_0] : memref<32x8xf32, #tpu.memory_space<vmem>>, vector<32x8xf32>
    %c0_1 = arith.constant 0 : index
    %c0_2 = arith.constant 0 : index
    %1 = vector.load %arg2[%c0_1, %c0_2] : memref<32x1xf32, #tpu.memory_space<vmem>>, vector<32x1xf32>
    %c0_3 = arith.constant 0 : index
    %c0_4 = arith.constant 0 : index
    %c0_5 = arith.constant 0 : index
    %2 = vector.load %arg3[%c0_3, %c0_4, %c0_5] : memref<1x1x32xf32, #tpu.memory_space<vmem>>, vector<1x1x32xf32>
    %3 = vector.shape_cast %2 : vector<1x1x32xf32> to vector<1x32xf32>
    %c0_6 = arith.constant 0 : index
    %c0_7 = arith.constant 0 : index
    %4 = vector.load %arg4[%c0_6, %c0_7] : memref<8x3xf32, #tpu.memory_space<vmem>>, vector<8x3xf32>
    %cst = arith.constant dense<0.000000e+00> : vector<32x3xf32>
    %5 = tpu.matmul %0, %4, %cst {dimension_numbers = #tpu.dot_dimension_numbers<[1], [0], [0], [1], [0, 0, 1, 1], [], []>} : vector<32x8xf32>, vector<8x3xf32>, vector<32x3xf32> -> vector<32x3xf32>
    %c0_8 = arith.constant 0 : index
    %c0_9 = arith.constant 0 : index
    %6 = vector.load %arg5[%c0_8, %c0_9] : memref<1x3xf32, #tpu.memory_space<vmem>>, vector<1x3xf32>
    %7 = vector.broadcast %6 : vector<1x3xf32> to vector<32x3xf32>
    %8 = arith.addf %5, %7 : vector<32x3xf32>
    %c0_10 = arith.constant 0 : index
    %c0_11 = arith.constant 0 : index
    %9 = vector.load %arg6[%c0_10, %c0_11] : memref<3x8xf32, #tpu.memory_space<vmem>>, vector<3x8xf32>
    %cst_12 = arith.constant dense<0.000000e+00> : vector<3x32xf32>
    %10 = tpu.matmul %9, %0, %cst_12 {dimension_numbers = #tpu.dot_dimension_numbers<[1], [1], [0], [0], [0, 0, 1, 0], [], []>} : vector<3x8xf32>, vector<32x8xf32>, vector<3x32xf32> -> vector<3x32xf32>
    %c0_13 = arith.constant 0 : index
    %c0_14 = arith.constant 0 : index
    %11 = vector.load %arg7[%c0_13, %c0_14] : memref<3x1xf32, #tpu.memory_space<vmem>>, vector<3x1xf32>
    %12 = vector.broadcast %11 : vector<3x1xf32> to vector<3x32xf32>
    %13 = arith.addf %10, %12 : vector<3x32xf32>
    %c0_15 = arith.constant 0 : index
    %c0_16 = arith.constant 0 : index
    %14 = vector.load %arg8[%c0_15, %c0_16] : memref<8x16xf32, #tpu.memory_space<vmem>>, vector<8x16xf32>
    %cst_17 = arith.constant dense<0.000000e+00> : vector<32x16xf32>
    %15 = tpu.matmul %0, %14, %cst_17 {dimension_numbers = #tpu.dot_dimension_numbers<[1], [0], [0], [1], [0, 0, 1, 1], [], []>} : vector<32x8xf32>, vector<8x16xf32>, vector<32x16xf32> -> vector<32x16xf32>
    %c0_18 = arith.constant 0 : index
    %c0_19 = arith.constant 0 : index
    %16 = vector.load %arg9[%c0_18, %c0_19] : memref<1x16xf32, #tpu.memory_space<vmem>>, vector<1x16xf32>
    %17 = vector.broadcast %16 : vector<1x16xf32> to vector<32x16xf32>
    %18 = arith.addf %15, %17 : vector<32x16xf32>
    %19 = arith.mulf %8, %8 : vector<32x3xf32>
    %cst_20 = arith.constant dense<0.000000e+00> : vector<32xf32>
    %20 = vector.multi_reduction <add>, %19, %cst_20 [1] : vector<32x3xf32> to vector<32xf32>
    %21 = vector.shape_cast %20 : vector<32xf32> to vector<32x1xf32>
    %22 = arith.mulf %13, %13 : vector<3x32xf32>
    %cst_21 = arith.constant dense<0.000000e+00> : vector<32xf32>
    %23 = vector.multi_reduction <add>, %22, %cst_21 [0] : vector<3x32xf32> to vector<32xf32>
    %24 = vector.shape_cast %23 : vector<32xf32> to vector<1x32xf32>
    %cst_22 = arith.constant dense<0.000000e+00> : vector<32x32xf32>
    %25 = tpu.matmul %8, %13, %cst_22 {dimension_numbers = #tpu.dot_dimension_numbers<[1], [0], [0], [1], [0, 0, 1, 1], [], []>} : vector<32x3xf32>, vector<3x32xf32>, vector<32x32xf32> -> vector<32x32xf32>
    %26 = vector.broadcast %21 : vector<32x1xf32> to vector<32x32xf32>
    %27 = vector.broadcast %24 : vector<1x32xf32> to vector<32x32xf32>
    %28 = arith.addf %26, %27 : vector<32x32xf32>
    %cst_23 = arith.constant 2.000000e+00 : f32
    %29 = vector.broadcast %cst_23 : f32 to vector<32x32xf32>
    %30 = arith.mulf %29, %25 : vector<32x32xf32>
    %31 = arith.subf %28, %30 : vector<32x32xf32>
    %cst_24 = arith.constant 0.000000e+00 : f32
    %32 = vector.broadcast %cst_24 : f32 to vector<32x32xf32>
    %33 = arith.maximumf %31, %32 : vector<32x32xf32>
    %34 = vector.broadcast %1 : vector<32x1xf32> to vector<32x32xf32>
    %35 = vector.broadcast %3 : vector<1x32xf32> to vector<32x32xf32>
    %36 = arith.cmpf oeq, %34, %35 : vector<32x32xf32>
    %cst_25 = arith.constant 1.000000e+30 : f32
    %37 = vector.broadcast %cst_25 : f32 to vector<32x32xf32>
    %38 = arith.select %36, %33, %37 : vector<32x32xi1>, vector<32x32xf32>
    %cst_26 = arith.constant -1.000000e+01 : f32
    %39 = vector.broadcast %cst_26 : f32 to vector<32x32xf32>
    %40 = arith.mulf %39, %38 : vector<32x32xf32>
    %41 = math.exp %40 : vector<32x32xf32>
    %42 = tpu.iota {dimensions = array<i32: 1>} : vector<32x32xi32>
    %cst_27 = arith.constant 1.000000e+00 : f32
    %43 = vector.broadcast %cst_27 : f32 to vector<32x32xf32>
    %44 = arith.addf %38, %43 : vector<32x32xf32>
    %45 = tpu.bitcast %44 : vector<32x32xf32> -> vector<32x32xi32>
    %c-32_i32 = arith.constant -32 : i32
    %46 = vector.broadcast %c-32_i32 : i32 to vector<32x32xi32>
    %47 = arith.andi %45, %46 : vector<32x32xi32>
    %48 = arith.ori %47, %42 : vector<32x32xi32>
    %49 = tpu.bitcast %48 : vector<32x32xi32> -> vector<32x32xf32>
    %50 = tpu.iota {dimensions = array<i32: 1>} : vector<32x4xi32>
    %cst_28 = arith.constant 0.000000e+00 : f32
    %51 = vector.broadcast %cst_28 : f32 to vector<32x16xf32>
    %cst_29 = arith.constant -1.000000e+30 : f32
    %52 = vector.broadcast %cst_29 : f32 to vector<32x16xf32>
    %c0_i32 = arith.constant 0 : i32
    %53 = vector.broadcast %c0_i32 : i32 to vector<32x4xi32>
    %cst_30 = arith.constant 3.000000e+38 : f32
    %c0_i32_31 = arith.constant 0 : i32
    %cst_32 = arith.constant dense<0x7F800000> : vector<32xf32>
    %54 = vector.multi_reduction <minimumf>, %49, %cst_32 [1] : vector<32x32xf32> to vector<32xf32>
    %55 = vector.shape_cast %54 : vector<32xf32> to vector<32x1xf32>
    %56 = tpu.bitcast %55 : vector<32x1xf32> -> vector<32x1xi32>
    %c31_i32 = arith.constant 31 : i32
    %57 = vector.broadcast %c31_i32 : i32 to vector<32x1xi32>
    %58 = arith.andi %56, %57 : vector<32x1xi32>
    %59 = vector.broadcast %58 : vector<32x1xi32> to vector<32x32xi32>
    %60 = arith.cmpi eq, %42, %59 : vector<32x32xi32>
    %61 = vector.broadcast %cst_30 : f32 to vector<32x32xf32>
    %62 = arith.select %60, %61, %49 : vector<32x32xi1>, vector<32x32xf32>
    %cst_33 = arith.constant 0.000000e+00 : f32
    %63 = vector.broadcast %cst_33 : f32 to vector<32x32xf32>
    %64 = arith.select %60, %41, %63 : vector<32x32xi1>, vector<32x32xf32>
    %cst_34 = arith.constant dense<0.000000e+00> : vector<32x16xf32>
    %65 = tpu.matmul %64, %18, %cst_34 {dimension_numbers = #tpu.dot_dimension_numbers<[1], [0], [0], [1], [0, 0, 1, 1], [], []>} : vector<32x32xf32>, vector<32x16xf32>, vector<32x16xf32> -> vector<32x16xf32>
    %66 = arith.addf %51, %65 : vector<32x16xf32>
    %67 = arith.maximumf %52, %65 : vector<32x16xf32>
    %68 = vector.broadcast %c0_i32_31 : i32 to vector<32x4xi32>
    %69 = arith.cmpi eq, %50, %68 : vector<32x4xi32>
    %c0_i32_35 = arith.constant 0 : i32
    %70 = vector.shape_cast %58 : vector<32x1xi32> to vector<32x1xi32>
    %71 = vector.broadcast %70 : vector<32x1xi32> to vector<32x4xi32>
    %72 = vector.broadcast %c0_i32_35 : i32 to vector<32x4xi32>
    %73 = arith.select %69, %71, %72 : vector<32x4xi1>, vector<32x4xi32>
    %74 = arith.addi %53, %73 : vector<32x4xi32>
    %c1_i32 = arith.constant 1 : i32
    %cst_36 = arith.constant dense<0x7F800000> : vector<32xf32>
    %75 = vector.multi_reduction <minimumf>, %62, %cst_36 [1] : vector<32x32xf32> to vector<32xf32>
    %76 = vector.shape_cast %75 : vector<32xf32> to vector<32x1xf32>
    %77 = tpu.bitcast %76 : vector<32x1xf32> -> vector<32x1xi32>
    %c31_i32_37 = arith.constant 31 : i32
    %78 = vector.broadcast %c31_i32_37 : i32 to vector<32x1xi32>
    %79 = arith.andi %77, %78 : vector<32x1xi32>
    %80 = vector.broadcast %79 : vector<32x1xi32> to vector<32x32xi32>
    %81 = arith.cmpi eq, %42, %80 : vector<32x32xi32>
    %82 = vector.broadcast %cst_30 : f32 to vector<32x32xf32>
    %83 = arith.select %81, %82, %62 : vector<32x32xi1>, vector<32x32xf32>
    %cst_38 = arith.constant 0.000000e+00 : f32
    %84 = vector.broadcast %cst_38 : f32 to vector<32x32xf32>
    %85 = arith.select %81, %41, %84 : vector<32x32xi1>, vector<32x32xf32>
    %cst_39 = arith.constant dense<0.000000e+00> : vector<32x16xf32>
    %86 = tpu.matmul %85, %18, %cst_39 {dimension_numbers = #tpu.dot_dimension_numbers<[1], [0], [0], [1], [0, 0, 1, 1], [], []>} : vector<32x32xf32>, vector<32x16xf32>, vector<32x16xf32> -> vector<32x16xf32>
    %87 = arith.addf %66, %86 : vector<32x16xf32>
    %88 = arith.maximumf %67, %86 : vector<32x16xf32>
    %89 = vector.broadcast %c1_i32 : i32 to vector<32x4xi32>
    %90 = arith.cmpi eq, %50, %89 : vector<32x4xi32>
    %c0_i32_40 = arith.constant 0 : i32
    %91 = vector.shape_cast %79 : vector<32x1xi32> to vector<32x1xi32>
    %92 = vector.broadcast %91 : vector<32x1xi32> to vector<32x4xi32>
    %93 = vector.broadcast %c0_i32_40 : i32 to vector<32x4xi32>
    %94 = arith.select %90, %92, %93 : vector<32x4xi1>, vector<32x4xi32>
    %95 = arith.addi %74, %94 : vector<32x4xi32>
    %c2_i32 = arith.constant 2 : i32
    %cst_41 = arith.constant dense<0x7F800000> : vector<32xf32>
    %96 = vector.multi_reduction <minimumf>, %83, %cst_41 [1] : vector<32x32xf32> to vector<32xf32>
    %97 = vector.shape_cast %96 : vector<32xf32> to vector<32x1xf32>
    %98 = tpu.bitcast %97 : vector<32x1xf32> -> vector<32x1xi32>
    %c31_i32_42 = arith.constant 31 : i32
    %99 = vector.broadcast %c31_i32_42 : i32 to vector<32x1xi32>
    %100 = arith.andi %98, %99 : vector<32x1xi32>
    %101 = vector.broadcast %100 : vector<32x1xi32> to vector<32x32xi32>
    %102 = arith.cmpi eq, %42, %101 : vector<32x32xi32>
    %103 = vector.broadcast %cst_30 : f32 to vector<32x32xf32>
    %104 = arith.select %102, %103, %83 : vector<32x32xi1>, vector<32x32xf32>
    %cst_43 = arith.constant 0.000000e+00 : f32
    %105 = vector.broadcast %cst_43 : f32 to vector<32x32xf32>
    %106 = arith.select %102, %41, %105 : vector<32x32xi1>, vector<32x32xf32>
    %cst_44 = arith.constant dense<0.000000e+00> : vector<32x16xf32>
    %107 = tpu.matmul %106, %18, %cst_44 {dimension_numbers = #tpu.dot_dimension_numbers<[1], [0], [0], [1], [0, 0, 1, 1], [], []>} : vector<32x32xf32>, vector<32x16xf32>, vector<32x16xf32> -> vector<32x16xf32>
    %108 = arith.addf %87, %107 : vector<32x16xf32>
    %109 = arith.maximumf %88, %107 : vector<32x16xf32>
    %110 = vector.broadcast %c2_i32 : i32 to vector<32x4xi32>
    %111 = arith.cmpi eq, %50, %110 : vector<32x4xi32>
    %c0_i32_45 = arith.constant 0 : i32
    %112 = vector.shape_cast %100 : vector<32x1xi32> to vector<32x1xi32>
    %113 = vector.broadcast %112 : vector<32x1xi32> to vector<32x4xi32>
    %114 = vector.broadcast %c0_i32_45 : i32 to vector<32x4xi32>
    %115 = arith.select %111, %113, %114 : vector<32x4xi1>, vector<32x4xi32>
    %116 = arith.addi %95, %115 : vector<32x4xi32>
    %c3_i32 = arith.constant 3 : i32
    %cst_46 = arith.constant dense<0x7F800000> : vector<32xf32>
    %117 = vector.multi_reduction <minimumf>, %104, %cst_46 [1] : vector<32x32xf32> to vector<32xf32>
    %118 = vector.shape_cast %117 : vector<32xf32> to vector<32x1xf32>
    %119 = tpu.bitcast %118 : vector<32x1xf32> -> vector<32x1xi32>
    %c31_i32_47 = arith.constant 31 : i32
    %120 = vector.broadcast %c31_i32_47 : i32 to vector<32x1xi32>
    %121 = arith.andi %119, %120 : vector<32x1xi32>
    %122 = vector.broadcast %121 : vector<32x1xi32> to vector<32x32xi32>
    %123 = arith.cmpi eq, %42, %122 : vector<32x32xi32>
    %124 = vector.broadcast %cst_30 : f32 to vector<32x32xf32>
    %125 = arith.select %123, %124, %104 : vector<32x32xi1>, vector<32x32xf32>
    %cst_48 = arith.constant 0.000000e+00 : f32
    %126 = vector.broadcast %cst_48 : f32 to vector<32x32xf32>
    %127 = arith.select %123, %41, %126 : vector<32x32xi1>, vector<32x32xf32>
    %cst_49 = arith.constant dense<0.000000e+00> : vector<32x16xf32>
    %128 = tpu.matmul %127, %18, %cst_49 {dimension_numbers = #tpu.dot_dimension_numbers<[1], [0], [0], [1], [0, 0, 1, 1], [], []>} : vector<32x32xf32>, vector<32x16xf32>, vector<32x16xf32> -> vector<32x16xf32>
    %129 = arith.addf %108, %128 : vector<32x16xf32>
    %130 = arith.maximumf %109, %128 : vector<32x16xf32>
    %131 = vector.broadcast %c3_i32 : i32 to vector<32x4xi32>
    %132 = arith.cmpi eq, %50, %131 : vector<32x4xi32>
    %c0_i32_50 = arith.constant 0 : i32
    %133 = vector.shape_cast %121 : vector<32x1xi32> to vector<32x1xi32>
    %134 = vector.broadcast %133 : vector<32x1xi32> to vector<32x4xi32>
    %135 = vector.broadcast %c0_i32_50 : i32 to vector<32x4xi32>
    %136 = arith.select %132, %134, %135 : vector<32x4xi1>, vector<32x4xi32>
    %137 = arith.addi %116, %136 : vector<32x4xi32>
    %c4_i32 = arith.constant 4 : i32
    %cst_51 = arith.constant 2.500000e-01 : f32
    %138 = vector.broadcast %cst_51 : f32 to vector<32x16xf32>
    %139 = arith.mulf %129, %138 : vector<32x16xf32>
    %c0_52 = arith.constant 0 : index
    %c0_53 = arith.constant 0 : index
    %140 = vector.load %arg12[%c0_52, %c0_53] : memref<16x32xf32, #tpu.memory_space<vmem>>, vector<16x32xf32>
    %cst_54 = arith.constant dense<0.000000e+00> : vector<32x32xf32>
    %141 = tpu.matmul %139, %140, %cst_54 {dimension_numbers = #tpu.dot_dimension_numbers<[1], [0], [0], [1], [0, 0, 1, 1], [], []>} : vector<32x16xf32>, vector<16x32xf32>, vector<32x32xf32> -> vector<32x32xf32>
    %c0_55 = arith.constant 0 : index
    %c0_56 = arith.constant 0 : index
    %142 = vector.load %arg13[%c0_55, %c0_56] : memref<16x32xf32, #tpu.memory_space<vmem>>, vector<16x32xf32>
    %cst_57 = arith.constant dense<0.000000e+00> : vector<32x32xf32>
    %143 = tpu.matmul %130, %142, %cst_57 {dimension_numbers = #tpu.dot_dimension_numbers<[1], [0], [0], [1], [0, 0, 1, 1], [], []>} : vector<32x16xf32>, vector<16x32xf32>, vector<32x32xf32> -> vector<32x32xf32>
    %144 = arith.addf %141, %143 : vector<32x32xf32>
    %c0_58 = arith.constant 0 : index
    %c0_59 = arith.constant 0 : index
    %145 = vector.load %arg14[%c0_58, %c0_59] : memref<1x32xf32, #tpu.memory_space<vmem>>, vector<1x32xf32>
    %146 = vector.broadcast %145 : vector<1x32xf32> to vector<32x32xf32>
    %147 = arith.addf %144, %146 : vector<32x32xf32>
    %c0_60 = arith.constant 0 : index
    %c0_61 = arith.constant 0 : index
    %148 = vector.load %arg15[%c0_60, %c0_61] : memref<32x8xf32, #tpu.memory_space<vmem>>, vector<32x8xf32>
    %cst_62 = arith.constant dense<0.000000e+00> : vector<32x8xf32>
    %149 = tpu.matmul %147, %148, %cst_62 {dimension_numbers = #tpu.dot_dimension_numbers<[1], [0], [0], [1], [0, 0, 1, 1], [], []>} : vector<32x32xf32>, vector<32x8xf32>, vector<32x8xf32> -> vector<32x8xf32>
    %c0_63 = arith.constant 0 : index
    %c0_64 = arith.constant 0 : index
    %150 = vector.load %arg16[%c0_63, %c0_64] : memref<3x8xf32, #tpu.memory_space<vmem>>, vector<3x8xf32>
    %cst_65 = arith.constant dense<0.000000e+00> : vector<32x8xf32>
    %151 = tpu.matmul %8, %150, %cst_65 {dimension_numbers = #tpu.dot_dimension_numbers<[1], [0], [0], [1], [0, 0, 1, 1], [], []>} : vector<32x3xf32>, vector<3x8xf32>, vector<32x8xf32> -> vector<32x8xf32>
    %152 = arith.addf %149, %151 : vector<32x8xf32>
    %c0_66 = arith.constant 0 : index
    %c0_67 = arith.constant 0 : index
    %153 = vector.load %arg17[%c0_66, %c0_67] : memref<1x8xf32, #tpu.memory_space<vmem>>, vector<1x8xf32>
    %154 = vector.broadcast %153 : vector<1x8xf32> to vector<32x8xf32>
    %155 = arith.addf %152, %154 : vector<32x8xf32>
    %cst_68 = arith.constant 0.000000e+00 : f32
    %156 = vector.broadcast %cst_68 : f32 to vector<32x8xf32>
    %157 = arith.cmpf ogt, %155, %156 : vector<32x8xf32>
    %cst_69 = arith.constant 0.000000e+00 : f32
    %158 = vector.broadcast %cst_69 : f32 to vector<32x8xf32>
    %159 = arith.minimumf %155, %158 : vector<32x8xf32>
    %160 = math.exp %159 : vector<32x8xf32>
    %cst_70 = arith.constant 1.000000e+00 : f32
    %161 = vector.broadcast %cst_70 : f32 to vector<32x8xf32>
    %162 = arith.subf %160, %161 : vector<32x8xf32>
    %163 = arith.select %157, %155, %162 : vector<32x8xi1>, vector<32x8xf32>
    %c0_71 = arith.constant 0 : index
    %c0_72 = arith.constant 0 : index
    %164 = vector.load %arg18[%c0_71, %c0_72] : memref<8x8xf32, #tpu.memory_space<vmem>>, vector<8x8xf32>
    %cst_73 = arith.constant dense<0.000000e+00> : vector<32x8xf32>
    %165 = tpu.matmul %163, %164, %cst_73 {dimension_numbers = #tpu.dot_dimension_numbers<[1], [0], [0], [1], [0, 0, 1, 1], [], []>} : vector<32x8xf32>, vector<8x8xf32>, vector<32x8xf32> -> vector<32x8xf32>
    %c0_74 = arith.constant 0 : index
    %c0_75 = arith.constant 0 : index
    %166 = vector.load %arg19[%c0_74, %c0_75] : memref<1x8xf32, #tpu.memory_space<vmem>>, vector<1x8xf32>
    %167 = vector.broadcast %166 : vector<1x8xf32> to vector<32x8xf32>
    %168 = arith.addf %165, %167 : vector<32x8xf32>
    %cst_76 = arith.constant 0.000000e+00 : f32
    %169 = vector.broadcast %cst_76 : f32 to vector<32x8xf32>
    %170 = arith.cmpf ogt, %168, %169 : vector<32x8xf32>
    %cst_77 = arith.constant 0.000000e+00 : f32
    %171 = vector.broadcast %cst_77 : f32 to vector<32x8xf32>
    %172 = arith.minimumf %168, %171 : vector<32x8xf32>
    %173 = math.exp %172 : vector<32x8xf32>
    %cst_78 = arith.constant 1.000000e+00 : f32
    %174 = vector.broadcast %cst_78 : f32 to vector<32x8xf32>
    %175 = arith.subf %173, %174 : vector<32x8xf32>
    %176 = arith.select %170, %168, %175 : vector<32x8xi1>, vector<32x8xf32>
    %177 = tpu.iota {dimensions = array<i32: 1>} : vector<1x1xi32>
    %178 = arith.sitofp %177 : vector<1x1xi32> to vector<1x1xf32>
    %179 = vector.broadcast %178 : vector<1x1xf32> to vector<32x1xf32>
    %180 = arith.cmpf oeq, %1, %179 : vector<32x1xf32>
    %cst_79 = arith.constant 1.000000e+00 : f32
    %cst_80 = arith.constant 0.000000e+00 : f32
    %181 = vector.broadcast %cst_79 : f32 to vector<32x1xf32>
    %182 = vector.broadcast %cst_80 : f32 to vector<32x1xf32>
    %183 = arith.select %180, %181, %182 : vector<32x1xi1>, vector<32x1xf32>
    %cst_81 = arith.constant dense<0.000000e+00> : vector<1x8xf32>
    %184 = tpu.matmul %183, %176, %cst_81 {dimension_numbers = #tpu.dot_dimension_numbers<[0], [0], [1], [1], [0, 1, 1, 1], [], []>} : vector<32x1xf32>, vector<32x8xf32>, vector<1x8xf32> -> vector<1x8xf32>
    %cst_82 = arith.constant dense<0.000000e+00> : vector<32x8xf32>
    %185 = tpu.matmul %183, %184, %cst_82 {dimension_numbers = #tpu.dot_dimension_numbers<[1], [0], [0], [1], [0, 0, 1, 1], [], []>} : vector<32x1xf32>, vector<1x8xf32>, vector<32x8xf32> -> vector<32x8xf32>
    %cst_83 = arith.constant dense<0.000000e+00> : vector<1xf32>
    %186 = vector.multi_reduction <add>, %183, %cst_83 [0] : vector<32x1xf32> to vector<1xf32>
    %187 = vector.shape_cast %186 : vector<1xf32> to vector<1x1xf32>
    %188 = vector.broadcast %187 : vector<1x1xf32> to vector<32x1xf32>
    %189 = arith.mulf %183, %188 : vector<32x1xf32>
    %cst_84 = arith.constant dense<0.000000e+00> : vector<32xf32>
    %190 = vector.multi_reduction <add>, %189, %cst_84 [1] : vector<32x1xf32> to vector<32xf32>
    %191 = vector.shape_cast %190 : vector<32xf32> to vector<32x1xf32>
    %cst_85 = arith.constant 1.000000e+00 : f32
    %192 = vector.broadcast %cst_85 : f32 to vector<32x1xf32>
    %193 = arith.divf %192, %191 : vector<32x1xf32>
    %194 = vector.broadcast %193 : vector<32x1xf32> to vector<32x8xf32>
    %195 = arith.mulf %185, %194 : vector<32x8xf32>
    %cst_86 = arith.constant 0.000000e+00 : f32
    %196 = vector.broadcast %cst_86 : f32 to vector<32x8xf32>
    %cst_87 = arith.constant 0.000000e+00 : f32
    %197 = vector.broadcast %cst_87 : f32 to vector<32x8xf32>
    %c0_i32_88 = arith.constant 0 : i32
    %198 = arith.sitofp %c0_i32_88 : i32 to f32
    %199 = vector.broadcast %198 : f32 to vector<32x1xf32>
    %200 = arith.cmpf oeq, %1, %199 : vector<32x1xf32>
    %cst_89 = arith.constant 1.000000e+00 : f32
    %cst_90 = arith.constant 0.000000e+00 : f32
    %201 = vector.broadcast %cst_89 : f32 to vector<32x1xf32>
    %202 = vector.broadcast %cst_90 : f32 to vector<32x1xf32>
    %203 = arith.select %200, %201, %202 : vector<32x1xi1>, vector<32x1xf32>
    %cst_91 = arith.constant 1.000000e+30 : f32
    %204 = vector.shape_cast %200 : vector<32x1xi1> to vector<32x1xi1>
    %205 = vector.broadcast %204 : vector<32x1xi1> to vector<32x8xi1>
    %206 = vector.broadcast %cst_91 : f32 to vector<32x8xf32>
    %207 = arith.select %205, %176, %206 : vector<32x8xi1>, vector<32x8xf32>
    %cst_92 = arith.constant dense<0x7F800000> : vector<8xf32>
    %208 = vector.multi_reduction <minimumf>, %207, %cst_92 [0] : vector<32x8xf32> to vector<8xf32>
    %209 = vector.shape_cast %208 : vector<8xf32> to vector<1x8xf32>
    %cst_93 = arith.constant -1.000000e+30 : f32
    %210 = vector.shape_cast %200 : vector<32x1xi1> to vector<32x1xi1>
    %211 = vector.broadcast %210 : vector<32x1xi1> to vector<32x8xi1>
    %212 = vector.broadcast %cst_93 : f32 to vector<32x8xf32>
    %213 = arith.select %211, %176, %212 : vector<32x8xi1>, vector<32x8xf32>
    %cst_94 = arith.constant dense<0xFF800000> : vector<8xf32>
    %214 = vector.multi_reduction <maximumf>, %213, %cst_94 [0] : vector<32x8xf32> to vector<8xf32>
    %215 = vector.shape_cast %214 : vector<8xf32> to vector<1x8xf32>
    %216 = vector.broadcast %203 : vector<32x1xf32> to vector<32x8xf32>
    %217 = vector.broadcast %209 : vector<1x8xf32> to vector<32x8xf32>
    %218 = arith.mulf %216, %217 : vector<32x8xf32>
    %219 = arith.addf %196, %218 : vector<32x8xf32>
    %220 = vector.broadcast %203 : vector<32x1xf32> to vector<32x8xf32>
    %221 = vector.broadcast %215 : vector<1x8xf32> to vector<32x8xf32>
    %222 = arith.mulf %220, %221 : vector<32x8xf32>
    %223 = arith.addf %197, %222 : vector<32x8xf32>
    %c1_i32_95 = arith.constant 1 : i32
    %c0_96 = arith.constant 0 : index
    %c0_97 = arith.constant 0 : index
    %224 = vector.load %arg20[%c0_96, %c0_97] : memref<8x8xf32, #tpu.memory_space<vmem>>, vector<8x8xf32>
    %cst_98 = arith.constant dense<0.000000e+00> : vector<32x8xf32>
    %225 = tpu.matmul %195, %224, %cst_98 {dimension_numbers = #tpu.dot_dimension_numbers<[1], [0], [0], [1], [0, 0, 1, 1], [], []>} : vector<32x8xf32>, vector<8x8xf32>, vector<32x8xf32> -> vector<32x8xf32>
    %c0_99 = arith.constant 0 : index
    %c0_100 = arith.constant 0 : index
    %226 = vector.load %arg21[%c0_99, %c0_100] : memref<8x8xf32, #tpu.memory_space<vmem>>, vector<8x8xf32>
    %cst_101 = arith.constant dense<0.000000e+00> : vector<32x8xf32>
    %227 = tpu.matmul %219, %226, %cst_101 {dimension_numbers = #tpu.dot_dimension_numbers<[1], [0], [0], [1], [0, 0, 1, 1], [], []>} : vector<32x8xf32>, vector<8x8xf32>, vector<32x8xf32> -> vector<32x8xf32>
    %228 = arith.addf %225, %227 : vector<32x8xf32>
    %c0_102 = arith.constant 0 : index
    %c0_103 = arith.constant 0 : index
    %229 = vector.load %arg22[%c0_102, %c0_103] : memref<8x8xf32, #tpu.memory_space<vmem>>, vector<8x8xf32>
    %cst_104 = arith.constant dense<0.000000e+00> : vector<32x8xf32>
    %230 = tpu.matmul %223, %229, %cst_104 {dimension_numbers = #tpu.dot_dimension_numbers<[1], [0], [0], [1], [0, 0, 1, 1], [], []>} : vector<32x8xf32>, vector<8x8xf32>, vector<32x8xf32> -> vector<32x8xf32>
    %231 = arith.addf %228, %230 : vector<32x8xf32>
    %c0_105 = arith.constant 0 : index
    %c0_106 = arith.constant 0 : index
    %232 = vector.load %arg23[%c0_105, %c0_106] : memref<8x8xf32, #tpu.memory_space<vmem>>, vector<8x8xf32>
    %cst_107 = arith.constant dense<0.000000e+00> : vector<32x8xf32>
    %233 = tpu.matmul %176, %232, %cst_107 {dimension_numbers = #tpu.dot_dimension_numbers<[1], [0], [0], [1], [0, 0, 1, 1], [], []>} : vector<32x8xf32>, vector<8x8xf32>, vector<32x8xf32> -> vector<32x8xf32>
    %234 = arith.addf %231, %233 : vector<32x8xf32>
    %c0_108 = arith.constant 0 : index
    %c0_109 = arith.constant 0 : index
    %235 = vector.load %arg24[%c0_108, %c0_109] : memref<1x8xf32, #tpu.memory_space<vmem>>, vector<1x8xf32>
    %236 = vector.broadcast %235 : vector<1x8xf32> to vector<32x8xf32>
    %237 = arith.addf %234, %236 : vector<32x8xf32>
    %cst_110 = arith.constant 0.000000e+00 : f32
    %238 = vector.broadcast %cst_110 : f32 to vector<32x8xf32>
    %239 = arith.cmpf ogt, %237, %238 : vector<32x8xf32>
    %cst_111 = arith.constant 0.000000e+00 : f32
    %240 = vector.broadcast %cst_111 : f32 to vector<32x8xf32>
    %241 = arith.minimumf %237, %240 : vector<32x8xf32>
    %242 = math.exp %241 : vector<32x8xf32>
    %cst_112 = arith.constant 1.000000e+00 : f32
    %243 = vector.broadcast %cst_112 : f32 to vector<32x8xf32>
    %244 = arith.subf %242, %243 : vector<32x8xf32>
    %245 = arith.select %239, %237, %244 : vector<32x8xi1>, vector<32x8xf32>
    %c0_113 = arith.constant 0 : index
    %c0_114 = arith.constant 0 : index
    %246 = vector.load %arg25[%c0_113, %c0_114] : memref<32x8xf32, #tpu.memory_space<vmem>>, vector<32x8xf32>
    tpu.vector_store %arg25[%c0_113, %c0_114], %245 {strides = array<i32>} : memref<32x8xf32, #tpu.memory_space<vmem>>, vector<32x8xf32>,
    %c32_i32 = arith.constant 32 : i32
    %247 = arith.muli %arg0, %c32_i32 : i32
    %248 = vector.broadcast %247 : i32 to vector<32x4xi32>
    %249 = arith.addi %137, %248 : vector<32x4xi32>
    %c0_115 = arith.constant 0 : index
    %c0_116 = arith.constant 0 : index
    %250 = vector.load %arg26[%c0_115, %c0_116] : memref<32x4xi32, #tpu.memory_space<vmem>>, vector<32x4xi32>
    tpu.vector_store %arg26[%c0_115, %c0_116], %249 {strides = array<i32>} : memref<32x4xi32, #tpu.memory_space<vmem>>, vector<32x4xi32>,
    return
  }
  func.func @transform_0(%arg0: i32) -> (i32, i32) {
    %c0_i32 = arith.constant 0 : i32
    %c0_i32_0 = arith.constant 0 : i32
    return %arg0, %c0_i32 : i32, i32
  }
  func.func @transform_1(%arg0: i32) -> (i32, i32) {
    %c0_i32 = arith.constant 0 : i32
    %c0_i32_0 = arith.constant 0 : i32
    return %arg0, %c0_i32 : i32, i32
  }
  func.func @transform_2(%arg0: i32) -> (i32, i32, i32) {
    %c0_i32 = arith.constant 0 : i32
    %c0_i32_0 = arith.constant 0 : i32
    %c0_i32_1 = arith.constant 0 : i32
    return %arg0, %c0_i32, %c0_i32_0 : i32, i32, i32
  }
  func.func @transform_3(%arg0: i32) -> (i32, i32) {
    %c0_i32 = arith.constant 0 : i32
    %c0_i32_0 = arith.constant 0 : i32
    %c0_i32_1 = arith.constant 0 : i32
    return %c0_i32, %c0_i32_0 : i32, i32
  }
  func.func @transform_4(%arg0: i32) -> (i32, i32) {
    %c0_i32 = arith.constant 0 : i32
    %c0_i32_0 = arith.constant 0 : i32
    %c0_i32_1 = arith.constant 0 : i32
    return %c0_i32, %c0_i32_0 : i32, i32
  }
  func.func @transform_5(%arg0: i32) -> (i32, i32) {
    %c0_i32 = arith.constant 0 : i32
    %c0_i32_0 = arith.constant 0 : i32
    %c0_i32_1 = arith.constant 0 : i32
    return %c0_i32, %c0_i32_0 : i32, i32
  }
  func.func @transform_6(%arg0: i32) -> (i32, i32) {
    %c0_i32 = arith.constant 0 : i32
    %c0_i32_0 = arith.constant 0 : i32
    %c0_i32_1 = arith.constant 0 : i32
    return %c0_i32, %c0_i32_0 : i32, i32
  }
  func.func @transform_7(%arg0: i32) -> (i32, i32) {
    %c0_i32 = arith.constant 0 : i32
    %c0_i32_0 = arith.constant 0 : i32
    %c0_i32_1 = arith.constant 0 : i32
    return %c0_i32, %c0_i32_0 : i32, i32
  }
  func.func @transform_8(%arg0: i32) -> (i32, i32) {
    %c0_i32 = arith.constant 0 : i32
    %c0_i32_0 = arith.constant 0 : i32
    %c0_i32_1 = arith.constant 0 : i32
    return %c0_i32, %c0_i32_0 : i32, i32
  }
  func.func @transform_9(%arg0: i32) -> (i32, i32) {
    %c0_i32 = arith.constant 0 : i32
    %c0_i32_0 = arith.constant 0 : i32
    %c0_i32_1 = arith.constant 0 : i32
    return %c0_i32, %c0_i32_0 : i32, i32
  }
  func.func @transform_10(%arg0: i32) -> (i32, i32) {
    %c0_i32 = arith.constant 0 : i32
    %c0_i32_0 = arith.constant 0 : i32
    %c0_i32_1 = arith.constant 0 : i32
    return %c0_i32, %c0_i32_0 : i32, i32
  }
  func.func @transform_11(%arg0: i32) -> (i32, i32) {
    %c0_i32 = arith.constant 0 : i32
    %c0_i32_0 = arith.constant 0 : i32
    %c0_i32_1 = arith.constant 0 : i32
    return %c0_i32, %c0_i32_0 : i32, i32
  }
  func.func @transform_12(%arg0: i32) -> (i32, i32) {
    %c0_i32 = arith.constant 0 : i32
    %c0_i32_0 = arith.constant 0 : i32
    %c0_i32_1 = arith.constant 0 : i32
    return %c0_i32, %c0_i32_0 : i32, i32
  }
  func.func @transform_13(%arg0: i32) -> (i32, i32) {
    %c0_i32 = arith.constant 0 : i32
    %c0_i32_0 = arith.constant 0 : i32
    %c0_i32_1 = arith.constant 0 : i32
    return %c0_i32, %c0_i32_0 : i32, i32
  }
  func.func @transform_14(%arg0: i32) -> (i32, i32) {
    %c0_i32 = arith.constant 0 : i32
    %c0_i32_0 = arith.constant 0 : i32
    %c0_i32_1 = arith.constant 0 : i32
    return %c0_i32, %c0_i32_0 : i32, i32
  }
  func.func @transform_15(%arg0: i32) -> (i32, i32) {
    %c0_i32 = arith.constant 0 : i32
    %c0_i32_0 = arith.constant 0 : i32
    %c0_i32_1 = arith.constant 0 : i32
    return %c0_i32, %c0_i32_0 : i32, i32
  }
  func.func @transform_16(%arg0: i32) -> (i32, i32) {
    %c0_i32 = arith.constant 0 : i32
    %c0_i32_0 = arith.constant 0 : i32
    %c0_i32_1 = arith.constant 0 : i32
    return %c0_i32, %c0_i32_0 : i32, i32
  }
  func.func @transform_17(%arg0: i32) -> (i32, i32) {
    %c0_i32 = arith.constant 0 : i32
    %c0_i32_0 = arith.constant 0 : i32
    %c0_i32_1 = arith.constant 0 : i32
    return %c0_i32, %c0_i32_0 : i32, i32
  }
  func.func @transform_18(%arg0: i32) -> (i32, i32) {
    %c0_i32 = arith.constant 0 : i32
    %c0_i32_0 = arith.constant 0 : i32
    %c0_i32_1 = arith.constant 0 : i32
    return %c0_i32, %c0_i32_0 : i32, i32
  }
  func.func @transform_19(%arg0: i32) -> (i32, i32) {
    %c0_i32 = arith.constant 0 : i32
    %c0_i32_0 = arith.constant 0 : i32
    %c0_i32_1 = arith.constant 0 : i32
    return %c0_i32, %c0_i32_0 : i32, i32
  }
  func.func @transform_20(%arg0: i32) -> (i32, i32) {
    %c0_i32 = arith.constant 0 : i32
    %c0_i32_0 = arith.constant 0 : i32
    %c0_i32_1 = arith.constant 0 : i32
    return %c0_i32, %c0_i32_0 : i32, i32
  }
  func.func @transform_21(%arg0: i32) -> (i32, i32) {
    %c0_i32 = arith.constant 0 : i32
    %c0_i32_0 = arith.constant 0 : i32
    %c0_i32_1 = arith.constant 0 : i32
    return %c0_i32, %c0_i32_0 : i32, i32
  }
  func.func @transform_22(%arg0: i32) -> (i32, i32) {
    %c0_i32 = arith.constant 0 : i32
    %c0_i32_0 = arith.constant 0 : i32
    %c0_i32_1 = arith.constant 0 : i32
    return %c0_i32, %c0_i32_0 : i32, i32
  }
  func.func @transform_23(%arg0: i32) -> (i32, i32) {
    %c0_i32 = arith.constant 0 : i32
    %c0_i32_0 = arith.constant 0 : i32
    %c0_i32_1 = arith.constant 0 : i32
    return %c0_i32, %c0_i32_0 : i32, i32
  }
  func.func @transform_24(%arg0: i32) -> (i32, i32) {
    %c0_i32 = arith.constant 0 : i32
    %c0_i32_0 = arith.constant 0 : i32
    return %arg0, %c0_i32 : i32, i32
  }
  func.func @transform_25(%arg0: i32) -> (i32, i32) {
    %c0_i32 = arith.constant 0 : i32
    %c0_i32_0 = arith.constant 0 : i32
    return %arg0, %c0_i32 : i32, i32
  }
}

</mosaic_0001>

<llo_original>
// kernel: tpu_custom_call.1
$region0: #{tpu_custom_call.1}
  #allocation0 [shape = 'u32[]', space=smem, size = 0x4, offset = 0x4, fixed_abs, tag = 'smem constant byte address 0x4 - core index']
  #allocation1 [shape = 'u32[144,128]{1,0:T(1,128)}', space=vmem, size = 0x12000, scoped, tag = 'internal scratch']
  #allocation2 [shape = 'f32[32,16]{1,0:T(8,128)}', space=vmem, size = 0x4000, scoped, tag = 'scratch operand']
  %s0 = inlined_call_operand.vmem [shape: f32[64,8], index: 0, kind: input, shape index: {}]
  %s1 = inlined_call_operand.vmem [shape: f32[64,1], index: 1, kind: input, shape index: {}]
  %s2 = inlined_call_operand.vmem [shape: f32[2,1,32], index: 2, kind: input, shape index: {}]
  %s3 = inlined_call_operand.vmem [shape: f32[8,3], index: 3, kind: input, shape index: {}]
  %s4 = inlined_call_operand.vmem [shape: f32[1,3], index: 4, kind: input, shape index: {}]
  %s5 = inlined_call_operand.vmem [shape: f32[3,8], index: 5, kind: input, shape index: {}]
  %s6 = inlined_call_operand.vmem [shape: f32[3,1], index: 6, kind: input, shape index: {}]
  %s7 = inlined_call_operand.vmem [shape: f32[8,16], index: 7, kind: input, shape index: {}]
  %s8 = inlined_call_operand.vmem [shape: f32[1,16], index: 8, kind: input, shape index: {}]
  %s9 = inlined_call_operand.vmem [shape: f32[16,8], index: 9, kind: input, shape index: {}]
  %s10 = inlined_call_operand.vmem [shape: f32[16,1], index: 10, kind: input, shape index: {}]
  %s11 = inlined_call_operand.vmem [shape: f32[16,32], index: 11, kind: input, shape index: {}]
  %s12 = inlined_call_operand.vmem [shape: f32[16,32], index: 12, kind: input, shape index: {}]
  %s13 = inlined_call_operand.vmem [shape: f32[1,32], index: 13, kind: input, shape index: {}]
  %s14 = inlined_call_operand.vmem [shape: f32[32,8], index: 14, kind: input, shape index: {}]
  %s15 = inlined_call_operand.vmem [shape: f32[3,8], index: 15, kind: input, shape index: {}]
  %s16 = inlined_call_operand.vmem [shape: f32[1,8], index: 16, kind: input, shape index: {}]
  %s17 = inlined_call_operand.vmem [shape: f32[8,8], index: 17, kind: input, shape index: {}]
  %s18 = inlined_call_operand.vmem [shape: f32[1,8], index: 18, kind: input, shape index: {}]
  %s19 = inlined_call_operand.vmem [shape: f32[8,8], index: 19, kind: input, shape index: {}]
  %s20 = inlined_call_operand.vmem [shape: f32[8,8], index: 20, kind: input, shape index: {}]
  %s21 = inlined_call_operand.vmem [shape: f32[8,8], index: 21, kind: input, shape index: {}]
  %s22 = inlined_call_operand.vmem [shape: f32[8,8], index: 22, kind: input, shape index: {}]
  %s23 = inlined_call_operand.vmem [shape: f32[1,8], index: 23, kind: input, shape index: {}]
  %s24 = inlined_call_operand.vmem [shape: f32[64,8], index: 24, kind: output, shape index: {0}]
  %s25 = inlined_call_operand.vmem [shape: s32[64,4], index: 25, kind: output, shape index: {1}]
  %26 = xla_tuple %s24, %s25
  %s27 = sld [smem:[#allocation0]]
  $region137: #{tpu_custom_call.1} parent=0
    _
  %s29 = ssub.s32 1, %s27
  %s30 = scalar_select 0, %s29, %s27
  loop: start=0, step=1, limit=4
  $region2: #{tpu_custom_call.1} parent=0 // loop_pre_header
    _
  $region3: #{tpu_custom_call.1} parent=0 // loop_header
    %s32 = sphi 0, %s36
    %p33 = scmp.ge.s32.totalorder %s32, 4
    %s42 = sphi 0, %s44
    %s45 = sphi 0, %s42
    %s46 = sphi 0, %s45
    %s62 = sphi 0, %s46
    %s68 = sphi 0, %s70
    %s71 = sphi 0, %s68
    %s72 = sphi 0, %s71
    %s88 = sphi 0, %s72
    %s94 = sphi 0, %s96
    %s97 = sphi 0, %s94
    %s98 = sphi 0, %s97
    %s114 = sphi 0, %s98
    %s118 = sphi 0, %s118
    %s120 = sphi 0, %s118
    %s121 = sphi 0, %s120
    %s135 = sphi 0, %s121
    %s139 = sphi 0, %s139
    %s141 = sphi 0, %s139
    %s142 = sphi 0, %s141
    %s156 = sphi 0, %s142
    %s160 = sphi 0, %s160
    %s162 = sphi 0, %s160
    %s163 = sphi 0, %s162
    %s177 = sphi 0, %s163
    %s181 = sphi 0, %s181
    %s183 = sphi 0, %s181
    %s184 = sphi 0, %s183
    %s198 = sphi 0, %s184
    %s202 = sphi 0, %s202
    %s204 = sphi 0, %s202
    %s205 = sphi 0, %s204
    %s219 = sphi 0, %s205
    %s223 = sphi 0, %s223
    %s225 = sphi 0, %s223
    %s226 = sphi 0, %s225
    %s240 = sphi 0, %s226
    %s244 = sphi 0, %s244
    %s246 = sphi 0, %s244
    %s247 = sphi 0, %s246
    %s261 = sphi 0, %s247
    %s265 = sphi 0, %s265
    %s267 = sphi 0, %s265
    %s268 = sphi 0, %s267
    %s282 = sphi 0, %s268
    %s286 = sphi 0, %s286
    %s288 = sphi 0, %s286
    %s289 = sphi 0, %s288
    %s303 = sphi 0, %s289
    %s307 = sphi 0, %s307
    %s309 = sphi 0, %s307
    %s310 = sphi 0, %s309
    %s324 = sphi 0, %s310
    %s328 = sphi 0, %s328
    %s330 = sphi 0, %s328
    %s331 = sphi 0, %s330
    %s345 = sphi 0, %s331
    %s349 = sphi 0, %s349
    %s351 = sphi 0, %s349
    %s352 = sphi 0, %s351
    %s366 = sphi 0, %s352
    %s370 = sphi 0, %s370
    %s372 = sphi 0, %s370
    %s373 = sphi 0, %s372
    %s387 = sphi 0, %s373
    %s391 = sphi 0, %s391
    %s393 = sphi 0, %s391
    %s394 = sphi 0, %s393
    %s408 = sphi 0, %s394
    %s412 = sphi 0, %s412
    %s414 = sphi 0, %s412
    %s415 = sphi 0, %s414
    %s429 = sphi 0, %s415
    %s433 = sphi 0, %s433
    %s435 = sphi 0, %s433
    %s436 = sphi 0, %s435
    %s450 = sphi 0, %s436
    %s454 = sphi 0, %s454
    %s456 = sphi 0, %s454
    %s457 = sphi 0, %s456
    %s471 = sphi 0, %s457
    %s475 = sphi 0, %s475
    %s477 = sphi 0, %s475
    %s478 = sphi 0, %s477
    %s492 = sphi 0, %s478
    %s496 = sphi 0, %s496
    %s498 = sphi 0, %s496
    %s499 = sphi 0, %s498
    %s513 = sphi 0, %s499
    %s517 = sphi 0, %s517
    %s519 = sphi 0, %s517
    %s520 = sphi 0, %s519
    %s534 = sphi 0, %s520
    %s538 = sphi 0, %s538
    %s540 = sphi 0, %s538
    %s541 = sphi 0, %s540
    %s555 = sphi 0, %s541
    %s561 = sphi 0, %s563
    %s564 = sphi 0, %s561
    %s565 = sphi 0, %s564
    %s581 = sphi 0, %s565
    %s587 = sphi 0, %s589
    %s590 = sphi 0, %s587
    %s591 = sphi 0, %s590
    %s607 = sphi 0, %s591
  $region4: #{tpu_custom_call.1} parent=0 // loop_header_branch
    %35 = sbr.rel (%p33) target = $region8
  $region5: #{tpu_custom_call.1} parent=0 // loop_body
    %s37 = ssub.s32 %s32, 1
    %s38 = ssub.s32 %s32, 2
    %s39 = sadd.s32 %s32, 1
    %s40 = ssub.s32 %s32, %s39
    %p41 = scmp.eq.s32.totalorder %s40, 0
    %s43 = sadd.s32 %s42, 1
    %s44 = scalar_select %p41, %s42, %s43
    %p47 = pneg %p41
    %p48 = scmp.eq.s32.totalorder %s32, 1
    %p49 = por %p47, %p48
    %p50 = scmp.ne.s32.totalorder %s42, %s45
    %p51 = scmp.eq.s32.totalorder %s32, 0
    %p52 = por %p50, %p51
    %p53 = scmp.ne.s32.totalorder %s42, %s45
    %p54 = scmp.eq.s32.totalorder %s37, 1
    %p55 = por %p53, %p54
    %p56 = scmp.ne.s32.totalorder %s45, %s46
    %p57 = scmp.eq.s32.totalorder %s37, 0
    %p58 = por %p56, %p57
    %p59 = scmp.ne.s32.totalorder %s45, %s46
    %p60 = scmp.eq.s32.totalorder %s38, 1
    %p61 = por %p59, %p60
    %p63 = scmp.ne.s32.totalorder %s46, %s62
    %p64 = scmp.eq.s32.totalorder %s38, 0
    %p65 = por %p63, %p64
    %s66 = ssub.s32 %s32, %s39
    %p67 = scmp.eq.s32.totalorder %s66, 0
    %s69 = sadd.s32 %s68, 1
    %s70 = scalar_select %p67, %s68, %s69
    %p73 = pneg %p67
    %p74 = scmp.eq.s32.totalorder %s32, 1
    %p75 = por %p73, %p74
    %p76 = scmp.ne.s32.totalorder %s68, %s71
    %p77 = scmp.eq.s32.totalorder %s32, 0
    %p78 = por %p76, %p77
    %p79 = scmp.ne.s32.totalorder %s68, %s71
    %p80 = scmp.eq.s32.totalorder %s37, 1
    %p81 = por %p79, %p80
    %p82 = scmp.ne.s32.totalorder %s71, %s72
    %p83 = scmp.eq.s32.totalorder %s37, 0
    %p84 = por %p82, %p83
    %p85 = scmp.ne.s32.totalorder %s71, %s72
    %p86 = scmp.eq.s32.totalorder %s38, 1
    %p87 = por %p85, %p86
    %p89 = scmp.ne.s32.totalorder %s72, %s88
    %p90 = scmp.eq.s32.totalorder %s38, 0
    %p91 = por %p89, %p90
    %s92 = ssub.s32 %s32, %s39
    %p93 = scmp.eq.s32.totalorder %s92, 0
    %s95 = sadd.s32 %s94, 1
    %s96 = scalar_select %p93, %s94, %s95
    %p99 = pneg %p93
    %p100 = scmp.eq.s32.totalorder %s32, 1
    %p101 = por %p99, %p100
    %p102 = scmp.ne.s32.totalorder %s94, %s97
    %p103 = scmp.eq.s32.totalorder %s32, 0
    %p104 = por %p102, %p103
    %p105 = scmp.ne.s32.totalorder %s94, %s97
    %p106 = scmp.eq.s32.totalorder %s37, 1
    %p107 = por %p105, %p106
    %p108 = scmp.ne.s32.totalorder %s97, %s98
    %p109 = scmp.eq.s32.totalorder %s37, 0
    %p110 = por %p108, %p109
    %p111 = scmp.ne.s32.totalorder %s97, %s98
    %p112 = scmp.eq.s32.totalorder %s38, 1
    %p113 = por %p111, %p112
    %p115 = scmp.ne.s32.totalorder %s98, %s114
    %p116 = scmp.eq.s32.totalorder %s38, 0
    %p117 = por %p115, %p116
    %s119 = sadd.s32 %s118, 1
    %p122 = scmp.eq.s32.totalorder %s32, 1
    %p123 = scmp.ne.s32.totalorder %s118, %s120
    %p124 = scmp.eq.s32.totalorder %s32, 0
    %p125 = por %p123, %p124
    %p126 = scmp.ne.s32.totalorder %s118, %s120
    %p127 = scmp.eq.s32.totalorder %s37, 1
    %p128 = por %p126, %p127
    %p129 = scmp.ne.s32.totalorder %s120, %s121
    %p130 = scmp.eq.s32.totalorder %s37, 0
    %p131 = por %p129, %p130
    %p132 = scmp.ne.s32.totalorder %s120, %s121
    %p133 = scmp.eq.s32.totalorder %s38, 1
    %p134 = por %p132, %p133
    %p136 = scmp.ne.s32.totalorder %s121, %s135
    %p137 = scmp.eq.s32.totalorder %s38, 0
    %p138 = por %p136, %p137
    %s140 = sadd.s32 %s139, 1
    %p143 = scmp.eq.s32.totalorder %s32, 1
    %p144 = scmp.ne.s32.totalorder %s139, %s141
    %p145 = scmp.eq.s32.totalorder %s32, 0
    %p146 = por %p144, %p145
    %p147 = scmp.ne.s32.totalorder %s139, %s141
    %p148 = scmp.eq.s32.totalorder %s37, 1
    %p149 = por %p147, %p148
    %p150 = scmp.ne.s32.totalorder %s141, %s142
    %p151 = scmp.eq.s32.totalorder %s37, 0
    %p152 = por %p150, %p151
    %p153 = scmp.ne.s32.totalorder %s141, %s142
    %p154 = scmp.eq.s32.totalorder %s38, 1
    %p155 = por %p153, %p154
    %p157 = scmp.ne.s32.totalorder %s142, %s156
    %p158 = scmp.eq.s32.totalorder %s38, 0
    %p159 = por %p157, %p158
    %s161 = sadd.s32 %s160, 1
    %p164 = scmp.eq.s32.totalorder %s32, 1
    %p165 = scmp.ne.s32.totalorder %s160, %s162
    %p166 = scmp.eq.s32.totalorder %s32, 0
    %p167 = por %p165, %p166
    %p168 = scmp.ne.s32.totalorder %s160, %s162
    %p169 = scmp.eq.s32.totalorder %s37, 1
    %p170 = por %p168, %p169
    %p171 = scmp.ne.s32.totalorder %s162, %s163
    %p172 = scmp.eq.s32.totalorder %s37, 0
    %p173 = por %p171, %p172
    %p174 = scmp.ne.s32.totalorder %s162, %s163
    %p175 = scmp.eq.s32.totalorder %s38, 1
    %p176 = por %p174, %p175
    %p178 = scmp.ne.s32.totalorder %s163, %s177
    %p179 = scmp.eq.s32.totalorder %s38, 0
    %p180 = por %p178, %p179
    %s182 = sadd.s32 %s181, 1
    %p185 = scmp.eq.s32.totalorder %s32, 1
    %p186 = scmp.ne.s32.totalorder %s181, %s183
    %p187 = scmp.eq.s32.totalorder %s32, 0
    %p188 = por %p186, %p187
    %p189 = scmp.ne.s32.totalorder %s181, %s183
    %p190 = scmp.eq.s32.totalorder %s37, 1
    %p191 = por %p189, %p190
    %p192 = scmp.ne.s32.totalorder %s183, %s184
    %p193 = scmp.eq.s32.totalorder %s37, 0
    %p194 = por %p192, %p193
    %p195 = scmp.ne.s32.totalorder %s183, %s184
    %p196 = scmp.eq.s32.totalorder %s38, 1
    %p197 = por %p195, %p196
    %p199 = scmp.ne.s32.totalorder %s184, %s198
    %p200 = scmp.eq.s32.totalorder %s38, 0
    %p201 = por %p199, %p200
    %s203 = sadd.s32 %s202, 1
    %p206 = scmp.eq.s32.totalorder %s32, 1
    %p207 = scmp.ne.s32.totalorder %s202, %s204
    %p208 = scmp.eq.s32.totalorder %s32, 0
    %p209 = por %p207, %p208
    %p210 = scmp.ne.s32.totalorder %s202, %s204
    %p211 = scmp.eq.s32.totalorder %s37, 1
    %p212 = por %p210, %p211
    %p213 = scmp.ne.s32.totalorder %s204, %s205
    %p214 = scmp.eq.s32.totalorder %s37, 0
    %p215 = por %p213, %p214
    %p216 = scmp.ne.s32.totalorder %s204, %s205
    %p217 = scmp.eq.s32.totalorder %s38, 1
    %p218 = por %p216, %p217
    %p220 = scmp.ne.s32.totalorder %s205, %s219
    %p221 = scmp.eq.s32.totalorder %s38, 0
    %p222 = por %p220, %p221
    %s224 = sadd.s32 %s223, 1
    %p227 = scmp.eq.s32.totalorder %s32, 1
    %p228 = scmp.ne.s32.totalorder %s223, %s225
    %p229 = scmp.eq.s32.totalorder %s32, 0
    %p230 = por %p228, %p229
    %p231 = scmp.ne.s32.totalorder %s223, %s225
    %p232 = scmp.eq.s32.totalorder %s37, 1
    %p233 = por %p231, %p232
    %p234 = scmp.ne.s32.totalorder %s225, %s226
    %p235 = scmp.eq.s32.totalorder %s37, 0
    %p236 = por %p234, %p235
    %p237 = scmp.ne.s32.totalorder %s225, %s226
    %p238 = scmp.eq.s32.totalorder %s38, 1
    %p239 = por %p237, %p238
    %p241 = scmp.ne.s32.totalorder %s226, %s240
    %p242 = scmp.eq.s32.totalorder %s38, 0
    %p243 = por %p241, %p242
    %s245 = sadd.s32 %s244, 1
    %p248 = scmp.eq.s32.totalorder %s32, 1
    %p249 = scmp.ne.s32.totalorder %s244, %s246
    %p250 = scmp.eq.s32.totalorder %s32, 0
    %p251 = por %p249, %p250
    %p252 = scmp.ne.s32.totalorder %s244, %s246
    %p253 = scmp.eq.s32.totalorder %s37, 1
    %p254 = por %p252, %p253
    %p255 = scmp.ne.s32.totalorder %s246, %s247
    %p256 = scmp.eq.s32.totalorder %s37, 0
    %p257 = por %p255, %p256
    %p258 = scmp.ne.s32.totalorder %s246, %s247
    %p259 = scmp.eq.s32.totalorder %s38, 1
    %p260 = por %p258, %p259
    %p262 = scmp.ne.s32.totalorder %s247, %s261
    %p263 = scmp.eq.s32.totalorder %s38, 0
    %p264 = por %p262, %p263
    %s266 = sadd.s32 %s265, 1
    %p269 = scmp.eq.s32.totalorder %s32, 1
    %p270 = scmp.ne.s32.totalorder %s265, %s267
    %p271 = scmp.eq.s32.totalorder %s32, 0
    %p272 = por %p270, %p271
    %p273 = scmp.ne.s32.totalorder %s265, %s267
    %p274 = scmp.eq.s32.totalorder %s37, 1
    %p275 = por %p273, %p274
    %p276 = scmp.ne.s32.totalorder %s267, %s268
    %p277 = scmp.eq.s32.totalorder %s37, 0
    %p278 = por %p276, %p277
    %p279 = scmp.ne.s32.totalorder %s267, %s268
    %p280 = scmp.eq.s32.totalorder %s38, 1
    %p281 = por %p279, %p280
    %p283 = scmp.ne.s32.totalorder %s268, %s282
    %p284 = scmp.eq.s32.totalorder %s38, 0
    %p285 = por %p283, %p284
    %s287 = sadd.s32 %s286, 1
    %p290 = scmp.eq.s32.totalorder %s32, 1
    %p291 = scmp.ne.s32.totalorder %s286, %s288
    %p292 = scmp.eq.s32.totalorder %s32, 0
    %p293 = por %p291, %p292
    %p294 = scmp.ne.s32.totalorder %s286, %s288
    %p295 = scmp.eq.s32.totalorder %s37, 1
    %p296 = por %p294, %p295
    %p297 = scmp.ne.s32.totalorder %s288, %s289
    %p298 = scmp.eq.s32.totalorder %s37, 0
    %p299 = por %p297, %p298
    %p300 = scmp.ne.s32.totalorder %s288, %s289
    %p301 = scmp.eq.s32.totalorder %s38, 1
    %p302 = por %p300, %p301
    %p304 = scmp.ne.s32.totalorder %s289, %s303
    %p305 = scmp.eq.s32.totalorder %s38, 0
    %p306 = por %p304, %p305
    %s308 = sadd.s32 %s307, 1
    %p311 = scmp.eq.s32.totalorder %s32, 1
    %p312 = scmp.ne.s32.totalorder %s307, %s309
    %p313 = scmp.eq.s32.totalorder %s32, 0
    %p314 = por %p312, %p313
    %p315 = scmp.ne.s32.totalorder %s307, %s309
    %p316 = scmp.eq.s32.totalorder %s37, 1
    %p317 = por %p315, %p316
    %p318 = scmp.ne.s32.totalorder %s309, %s310
    %p319 = scmp.eq.s32.totalorder %s37, 0
    %p320 = por %p318, %p319
    %p321 = scmp.ne.s32.totalorder %s309, %s310
    %p322 = scmp.eq.s32.totalorder %s38, 1
    %p323 = por %p321, %p322
    %p325 = scmp.ne.s32.totalorder %s310, %s324
    %p326 = scmp.eq.s32.totalorder %s38, 0
    %p327 = por %p325, %p326
    %s329 = sadd.s32 %s328, 1
    %p332 = scmp.eq.s32.totalorder %s32, 1
    %p333 = scmp.ne.s32.totalorder %s328, %s330
    %p334 = scmp.eq.s32.totalorder %s32, 0
    %p335 = por %p333, %p334
    %p336 = scmp.ne.s32.totalorder %s328, %s330
    %p337 = scmp.eq.s32.totalorder %s37, 1
    %p338 = por %p336, %p337
    %p339 = scmp.ne.s32.totalorder %s330, %s331
    %p340 = scmp.eq.s32.totalorder %s37, 0
    %p341 = por %p339, %p340
    %p342 = scmp.ne.s32.totalorder %s330, %s331
    %p343 = scmp.eq.s32.totalorder %s38, 1
    %p344 = por %p342, %p343
    %p346 = scmp.ne.s32.totalorder %s331, %s345
    %p347 = scmp.eq.s32.totalorder %s38, 0
    %p348 = por %p346, %p347
    %s350 = sadd.s32 %s349, 1
    %p353 = scmp.eq.s32.totalorder %s32, 1
    %p354 = scmp.ne.s32.totalorder %s349, %s351
    %p355 = scmp.eq.s32.totalorder %s32, 0
    %p356 = por %p354, %p355
    %p357 = scmp.ne.s32.totalorder %s349, %s351
    %p358 = scmp.eq.s32.totalorder %s37, 1
    %p359 = por %p357, %p358
    %p360 = scmp.ne.s32.totalorder %s351, %s352
    %p361 = scmp.eq.s32.totalorder %s37, 0
    %p362 = por %p360, %p361
    %p363 = scmp.ne.s32.totalorder %s351, %s352
    %p364 = scmp.eq.s32.totalorder %s38, 1
    %p365 = por %p363, %p364
    %p367 = scmp.ne.s32.totalorder %s352, %s366
    %p368 = scmp.eq.s32.totalorder %s38, 0
    %p369 = por %p367, %p368
    %s371 = sadd.s32 %s370, 1
    %p374 = scmp.eq.s32.totalorder %s32, 1
    %p375 = scmp.ne.s32.totalorder %s370, %s372
    %p376 = scmp.eq.s32.totalorder %s32, 0
    %p377 = por %p375, %p376
    %p378 = scmp.ne.s32.totalorder %s370, %s372
    %p379 = scmp.eq.s32.totalorder %s37, 1
    %p380 = por %p378, %p379
    %p381 = scmp.ne.s32.totalorder %s372, %s373
    %p382 = scmp.eq.s32.totalorder %s37, 0
    %p383 = por %p381, %p382
    %p384 = scmp.ne.s32.totalorder %s372, %s373
    %p385 = scmp.eq.s32.totalorder %s38, 1
    %p386 = por %p384, %p385
    %p388 = scmp.ne.s32.totalorder %s373, %s387
    %p389 = scmp.eq.s32.totalorder %s38, 0
    %p390 = por %p388, %p389
    %s392 = sadd.s32 %s391, 1
    %p395 = scmp.eq.s32.totalorder %s32, 1
    %p396 = scmp.ne.s32.totalorder %s391, %s393
    %p397 = scmp.eq.s32.totalorder %s32, 0
    %p398 = por %p396, %p397
    %p399 = scmp.ne.s32.totalorder %s391, %s393
    %p400 = scmp.eq.s32.totalorder %s37, 1
    %p401 = por %p399, %p400
    %p402 = scmp.ne.s32.totalorder %s393, %s394
    %p403 = scmp.eq.s32.totalorder %s37, 0
    %p404 = por %p402, %p403
    %p405 = scmp.ne.s32.totalorder %s393, %s394
    %p406 = scmp.eq.s32.totalorder %s38, 1
    %p407 = por %p405, %p406
    %p409 = scmp.ne.s32.totalorder %s394, %s408
    %p410 = scmp.eq.s32.totalorder %s38, 0
    %p411 = por %p409, %p410
    %s413 = sadd.s32 %s412, 1
    %p416 = scmp.eq.s32.totalorder %s32, 1
    %p417 = scmp.ne.s32.totalorder %s412, %s414
    %p418 = scmp.eq.s32.totalorder %s32, 0
    %p419 = por %p417, %p418
    %p420 = scmp.ne.s32.totalorder %s412, %s414
    %p421 = scmp.eq.s32.totalorder %s37, 1
    %p422 = por %p420, %p421
    %p423 = scmp.ne.s32.totalorder %s414, %s415
    %p424 = scmp.eq.s32.totalorder %s37, 0
    %p425 = por %p423, %p424
    %p426 = scmp.ne.s32.totalorder %s414, %s415
    %p427 = scmp.eq.s32.totalorder %s38, 1
    %p428 = por %p426, %p427
    %p430 = scmp.ne.s32.totalorder %s415, %s429
    %p431 = scmp.eq.s32.totalorder %s38, 0
    %p432 = por %p430, %p431
    %s434 = sadd.s32 %s433, 1
    %p437 = scmp.eq.s32.totalorder %s32, 1
    %p438 = scmp.ne.s32.totalorder %s433, %s435
    %p439 = scmp.eq.s32.totalorder %s32, 0
    %p440 = por %p438, %p439
    %p441 = scmp.ne.s32.totalorder %s433, %s435
    %p442 = scmp.eq.s32.totalorder %s37, 1
    %p443 = por %p441, %p442
    %p444 = scmp.ne.s32.totalorder %s435, %s436
    %p445 = scmp.eq.s32.totalorder %s37, 0
    %p446 = por %p444, %p445
    %p447 = scmp.ne.s32.totalorder %s435, %s436
    %p448 = scmp.eq.s32.totalorder %s38, 1
    %p449 = por %p447, %p448
    %p451 = scmp.ne.s32.totalorder %s436, %s450
    %p452 = scmp.eq.s32.totalorder %s38, 0
    %p453 = por %p451, %p452
    %s455 = sadd.s32 %s454, 1
    %p458 = scmp.eq.s32.totalorder %s32, 1
    %p459 = scmp.ne.s32.totalorder %s454, %s456
    %p460 = scmp.eq.s32.totalorder %s32, 0
    %p461 = por %p459, %p460
    %p462 = scmp.ne.s32.totalorder %s454, %s456
    %p463 = scmp.eq.s32.totalorder %s37, 1
    %p464 = por %p462, %p463
    %p465 = scmp.ne.s32.totalorder %s456, %s457
    %p466 = scmp.eq.s32.totalorder %s37, 0
    %p467 = por %p465, %p466
    %p468 = scmp.ne.s32.totalorder %s456, %s457
    %p469 = scmp.eq.s32.totalorder %s38, 1
    %p470 = por %p468, %p469
    %p472 = scmp.ne.s32.totalorder %s457, %s471
    %p473 = scmp.eq.s32.totalorder %s38, 0
    %p474 = por %p472, %p473
    %s476 = sadd.s32 %s475, 1
    %p479 = scmp.eq.s32.totalorder %s32, 1
    %p480 = scmp.ne.s32.totalorder %s475, %s477
    %p481 = scmp.eq.s32.totalorder %s32, 0
    %p482 = por %p480, %p481
    %p483 = scmp.ne.s32.totalorder %s475, %s477
    %p484 = scmp.eq.s32.totalorder %s37, 1
    %p485 = por %p483, %p484
    %p486 = scmp.ne.s32.totalorder %s477, %s478
    %p487 = scmp.eq.s32.totalorder %s37, 0
    %p488 = por %p486, %p487
    %p489 = scmp.ne.s32.totalorder %s477, %s478
    %p490 = scmp.eq.s32.totalorder %s38, 1
    %p491 = por %p489, %p490
    %p493 = scmp.ne.s32.totalorder %s478, %s492
    %p494 = scmp.eq.s32.totalorder %s38, 0
    %p495 = por %p493, %p494
    %s497 = sadd.s32 %s496, 1
    %p500 = scmp.eq.s32.totalorder %s32, 1
    %p501 = scmp.ne.s32.totalorder %s496, %s498
    %p502 = scmp.eq.s32.totalorder %s32, 0
    %p503 = por %p501, %p502
    %p504 = scmp.ne.s32.totalorder %s496, %s498
    %p505 = scmp.eq.s32.totalorder %s37, 1
    %p506 = por %p504, %p505
    %p507 = scmp.ne.s32.totalorder %s498, %s499
    %p508 = scmp.eq.s32.totalorder %s37, 0
    %p509 = por %p507, %p508
    %p510 = scmp.ne.s32.totalorder %s498, %s499
    %p511 = scmp.eq.s32.totalorder %s38, 1
    %p512 = por %p510, %p511
    %p514 = scmp.ne.s32.totalorder %s499, %s513
    %p515 = scmp.eq.s32.totalorder %s38, 0
    %p516 = por %p514, %p515
    %s518 = sadd.s32 %s517, 1
    %p521 = scmp.eq.s32.totalorder %s32, 1
    %p522 = scmp.ne.s32.totalorder %s517, %s519
    %p523 = scmp.eq.s32.totalorder %s32, 0
    %p524 = por %p522, %p523
    %p525 = scmp.ne.s32.totalorder %s517, %s519
    %p526 = scmp.eq.s32.totalorder %s37, 1
    %p527 = por %p525, %p526
    %p528 = scmp.ne.s32.totalorder %s519, %s520
    %p529 = scmp.eq.s32.totalorder %s37, 0
    %p530 = por %p528, %p529
    %p531 = scmp.ne.s32.totalorder %s519, %s520
    %p532 = scmp.eq.s32.totalorder %s38, 1
    %p533 = por %p531, %p532
    %p535 = scmp.ne.s32.totalorder %s520, %s534
    %p536 = scmp.eq.s32.totalorder %s38, 0
    %p537 = por %p535, %p536
    %s539 = sadd.s32 %s538, 1
    %p542 = scmp.eq.s32.totalorder %s32, 1
    %p543 = scmp.ne.s32.totalorder %s538, %s540
    %p544 = scmp.eq.s32.totalorder %s32, 0
    %p545 = por %p543, %p544
    %p546 = scmp.ne.s32.totalorder %s538, %s540
    %p547 = scmp.eq.s32.totalorder %s37, 1
    %p548 = por %p546, %p547
    %p549 = scmp.ne.s32.totalorder %s540, %s541
    %p550 = scmp.eq.s32.totalorder %s37, 0
    %p551 = por %p549, %p550
    %p552 = scmp.ne.s32.totalorder %s540, %s541
    %p553 = scmp.eq.s32.totalorder %s38, 1
    %p554 = por %p552, %p553
    %p556 = scmp.ne.s32.totalorder %s541, %s555
    %p557 = scmp.eq.s32.totalorder %s38, 0
    %p558 = por %p556, %p557
    %s559 = ssub.s32 %s32, %s39
    %p560 = scmp.eq.s32.totalorder %s559, 0
    %s562 = sadd.s32 %s561, 1
    %s563 = scalar_select %p560, %s561, %s562
    %p566 = pneg %p560
    %p567 = scmp.eq.s32.totalorder %s32, 1
    %p568 = por %p566, %p567
    %p569 = scmp.ne.s32.totalorder %s561, %s564
    %p570 = scmp.eq.s32.totalorder %s32, 0
    %p571 = por %p569, %p570
    %p572 = scmp.ne.s32.totalorder %s561, %s564
    %p573 = scmp.eq.s32.totalorder %s37, 1
    %p574 = por %p572, %p573
    %p575 = scmp.ne.s32.totalorder %s564, %s565
    %p576 = scmp.eq.s32.totalorder %s37, 0
    %p577 = por %p575, %p576
    %p578 = scmp.ne.s32.totalorder %s564, %s565
    %p579 = scmp.eq.s32.totalorder %s38, 1
    %p580 = por %p578, %p579
    %p582 = scmp.ne.s32.totalorder %s565, %s581
    %p583 = scmp.eq.s32.totalorder %s38, 0
    %p584 = por %p582, %p583
    %s585 = ssub.s32 %s32, %s39
    %p586 = scmp.eq.s32.totalorder %s585, 0
    %s588 = sadd.s32 %s587, 1
    %s589 = scalar_select %p586, %s587, %s588
    %p592 = pneg %p586
    %p593 = scmp.eq.s32.totalorder %s32, 1
    %p594 = por %p592, %p593
    %p595 = scmp.ne.s32.totalorder %s587, %s590
    %p596 = scmp.eq.s32.totalorder %s32, 0
    %p597 = por %p595, %p596
    %p598 = scmp.ne.s32.totalorder %s587, %s590
    %p599 = scmp.eq.s32.totalorder %s37, 1
    %p600 = por %p598, %p599
    %p601 = scmp.ne.s32.totalorder %s590, %s591
    %p602 = scmp.eq.s32.totalorder %s37, 0
    %p603 = por %p601, %p602
    %p604 = scmp.ne.s32.totalorder %s590, %s591
    %p605 = scmp.eq.s32.totalorder %s38, 1
    %p606 = por %p604, %p605
    %p608 = scmp.ne.s32.totalorder %s591, %s607
    %p609 = scmp.eq.s32.totalorder %s38, 0
    %p610 = por %p608, %p609
    %p611 = scmp.le.s32.totalorder 1, %s32
    %p612 = scmp.lt.s32.totalorder %s32, 3
    %p613 = pnand %p611, %p612
    %p614 = pneg %p613
    // Predicated region
    $region9: #{tpu_custom_call.1} parent=5 // pred_check
      _
    $region10: #{tpu_custom_call.1} parent=5 // pred_check_branch
      %616 = sbr.rel (%p613) target = $region12
    $region11: #{tpu_custom_call.1} parent=5 // pred_region
      %s617 = ssub.s32 %s32, 1
      // Predicated region
      $region13: #{tpu_custom_call.1} parent=11 // pred_check
        %p618 = pneg %p131
      $region14: #{tpu_custom_call.1} parent=11 // pred_check_branch
        %620 = sbr.rel (%p618) target = $region16
      $region15: #{tpu_custom_call.1} parent=11 // pred_region
        _
      $region16: #{tpu_custom_call.1} parent=11 // pred_fallthru
        _
      // Predicated region
      $region17: #{tpu_custom_call.1} parent=11 // pred_check
        %p621 = pneg %p152
      $region18: #{tpu_custom_call.1} parent=11 // pred_check_branch
        %623 = sbr.rel (%p621) target = $region20
      $region19: #{tpu_custom_call.1} parent=11 // pred_region
        _
      $region20: #{tpu_custom_call.1} parent=11 // pred_fallthru
        _
      // Predicated region
      $region21: #{tpu_custom_call.1} parent=11 // pred_check
        %p624 = pneg %p173
      $region22: #{tpu_custom_call.1} parent=11 // pred_check_branch
        %626 = sbr.rel (%p624) target = $region24
      $region23: #{tpu_custom_call.1} parent=11 // pred_region
        _
      $region24: #{tpu_custom_call.1} parent=11 // pred_fallthru
        _
      // Predicated region
      $region25: #{tpu_custom_call.1} parent=11 // pred_check
        %p627 = pneg %p194
      $region26: #{tpu_custom_call.1} parent=11 // pred_check_branch
        %629 = sbr.rel (%p627) target = $region28
      $region27: #{tpu_custom_call.1} parent=11 // pred_region
        _
      $region28: #{tpu_custom_call.1} parent=11 // pred_fallthru
        _
      // Predicated region
      $region29: #{tpu_custom_call.1} parent=11 // pred_check
        %p630 = pneg %p215
      $region30: #{tpu_custom_call.1} parent=11 // pred_check_branch
        %632 = sbr.rel (%p630) target = $region32
      $region31: #{tpu_custom_call.1} parent=11 // pred_region
        _
      $region32: #{tpu_custom_call.1} parent=11 // pred_fallthru
        _
      // Predicated region
      $region33: #{tpu_custom_call.1} parent=11 // pred_check
        %p633 = pneg %p236
      $region34: #{tpu_custom_call.1} parent=11 // pred_check_branch
        %635 = sbr.rel (%p633) target = $region36
      $region35: #{tpu_custom_call.1} parent=11 // pred_region
        _
      $region36: #{tpu_custom_call.1} parent=11 // pred_fallthru
        _
      // Predicated region
      $region37: #{tpu_custom_call.1} parent=11 // pred_check
        %p636 = pneg %p257
      $region38: #{tpu_custom_call.1} parent=11 // pred_check_branch
        %638 = sbr.rel (%p636) target = $region40
      $region39: #{tpu_custom_call.1} parent=11 // pred_region
        _
      $region40: #{tpu_custom_call.1} parent=11 // pred_fallthru
        _
      // Predicated region
      $region41: #{tpu_custom_call.1} parent=11 // pred_check
        %p639 = pneg %p278
      $region42: #{tpu_custom_call.1} parent=11 // pred_check_branch
        %641 = sbr.rel (%p639) target = $region44
      $region43: #{tpu_custom_call.1} parent=11 // pred_region
        _
      $region44: #{tpu_custom_call.1} parent=11 // pred_fallthru
        _
      // Predicated region
      $region45: #{tpu_custom_call.1} parent=11 // pred_check
        %p642 = pneg %p299
      $region46: #{tpu_custom_call.1} parent=11 // pred_check_branch
        %644 = sbr.rel (%p642) target = $region48
      $region47: #{tpu_custom_call.1} parent=11 // pred_region
        _
      $region48: #{tpu_custom_call.1} parent=11 // pred_fallthru
        _
      // Predicated region
      $region49: #{tpu_custom_call.1} parent=11 // pred_check
        %p645 = pneg %p320
      $region50: #{tpu_custom_call.1} parent=11 // pred_check_branch
        %647 = sbr.rel (%p645) target = $region52
      $region51: #{tpu_custom_call.1} parent=11 // pred_region
        _
      $region52: #{tpu_custom_call.1} parent=11 // pred_fallthru
        _
      // Predicated region
      $region53: #{tpu_custom_call.1} parent=11 // pred_check
        %p648 = pneg %p341
      $region54: #{tpu_custom_call.1} parent=11 // pred_check_branch
        %650 = sbr.rel (%p648) target = $region56
      $region55: #{tpu_custom_call.1} parent=11 // pred_region
        _
      $region56: #{tpu_custom_call.1} parent=11 // pred_fallthru
        _
      // Predicated region
      $region57: #{tpu_custom_call.1} parent=11 // pred_check
        %p651 = pneg %p362
      $region58: #{tpu_custom_call.1} parent=11 // pred_check_branch
        %653 = sbr.rel (%p651) target = $region60
      $region59: #{tpu_custom_call.1} parent=11 // pred_region
        _
      $region60: #{tpu_custom_call.1} parent=11 // pred_fallthru
        _
      // Predicated region
      $region61: #{tpu_custom_call.1} parent=11 // pred_check
        %p654 = pneg %p383
      $region62: #{tpu_custom_call.1} parent=11 // pred_check_branch
        %656 = sbr.rel (%p654) target = $region64
      $region63: #{tpu_custom_call.1} parent=11 // pred_region
        _
      $region64: #{tpu_custom_call.1} parent=11 // pred_fallthru
        _
      // Predicated region
      $region65: #{tpu_custom_call.1} parent=11 // pred_check
        %p657 = pneg %p404
      $region66: #{tpu_custom_call.1} parent=11 // pred_check_branch
        %659 = sbr.rel (%p657) target = $region68
      $region67: #{tpu_custom_call.1} parent=11 // pred_region
        _
      $region68: #{tpu_custom_call.1} parent=11 // pred_fallthru
        _
      // Predicated region
      $region69: #{tpu_custom_call.1} parent=11 // pred_check
        %p660 = pneg %p425
      $region70: #{tpu_custom_call.1} parent=11 // pred_check_branch
        %662 = sbr.rel (%p660) target = $region72
      $region71: #{tpu_custom_call.1} parent=11 // pred_region
        _
      $region72: #{tpu_custom_call.1} parent=11 // pred_fallthru
        _
      // Predicated region
      $region73: #{tpu_custom_call.1} parent=11 // pred_check
        %p663 = pneg %p446
      $region74: #{tpu_custom_call.1} parent=11 // pred_check_branch
        %665 = sbr.rel (%p663) target = $region76
      $region75: #{tpu_custom_call.1} parent=11 // pred_region
        _
      $region76: #{tpu_custom_call.1} parent=11 // pred_fallthru
        _
      // Predicated region
      $region77: #{tpu_custom_call.1} parent=11 // pred_check
        %p666 = pneg %p467
      $region78: #{tpu_custom_call.1} parent=11 // pred_check_branch
        %668 = sbr.rel (%p666) target = $region80
      $region79: #{tpu_custom_call.1} parent=11 // pred_region
        _
      $region80: #{tpu_custom_call.1} parent=11 // pred_fallthru
        _
      // Predicated region
      $region81: #{tpu_custom_call.1} parent=11 // pred_check
        %p669 = pneg %p488
      $region82: #{tpu_custom_call.1} parent=11 // pred_check_branch
        %671 = sbr.rel (%p669) target = $region84
      $region83: #{tpu_custom_call.1} parent=11 // pred_region
        _
      $region84: #{tpu_custom_call.1} parent=11 // pred_fallthru
        _
      // Predicated region
      $region85: #{tpu_custom_call.1} parent=11 // pred_check
        %p672 = pneg %p509
      $region86: #{tpu_custom_call.1} parent=11 // pred_check_branch
        %674 = sbr.rel (%p672) target = $region88
      $region87: #{tpu_custom_call.1} parent=11 // pred_region
        _
      $region88: #{tpu_custom_call.1} parent=11 // pred_fallthru
        _
      // Predicated region
      $region89: #{tpu_custom_call.1} parent=11 // pred_check
        %p675 = pneg %p530
      $region90: #{tpu_custom_call.1} parent=11 // pred_check_branch
        %677 = sbr.rel (%p675) target = $region92
      $region91: #{tpu_custom_call.1} parent=11 // pred_region
        _
      $region92: #{tpu_custom_call.1} parent=11 // pred_fallthru
        _
      // Predicated region
      $region93: #{tpu_custom_call.1} parent=11 // pred_check
        %p678 = pneg %p551
      $region94: #{tpu_custom_call.1} parent=11 // pred_check_branch
        %680 = sbr.rel (%p678) target = $region96
      $region95: #{tpu_custom_call.1} parent=11 // pred_region
        _
      $region96: #{tpu_custom_call.1} parent=11 // pred_fallthru
        _
    $region12: #{tpu_custom_call.1} parent=5 // pred_fallthru
      _
    %p681 = scmp.lt.s32.totalorder %s32, 2
    // Predicated region
    $region97: #{tpu_custom_call.1} parent=5 // pred_check
      %p682 = pneg %p681
    $region98: #{tpu_custom_call.1} parent=5 // pred_check_branch
      %684 = sbr.rel (%p682) target = $region100
    $region99: #{tpu_custom_call.1} parent=5 // pred_region
      // Predicated region
      $region101: #{tpu_custom_call.1} parent=99 // pred_check
        %p685 = pneg %p52
      $region102: #{tpu_custom_call.1} parent=99 // pred_check_branch
        %687 = sbr.rel (%p685) target = $region104
      $region103: #{tpu_custom_call.1} parent=99 // pred_region
        %s688 = smul.u32 4, %s32
        %p689 = scmp.lt.s32.totalorder %s688, 7
        %s690 = scalar_select %p689, %s688, 7
        %s691 = smul.addr %s690, 8
        %s692 = scalar_lea.vmem %s0, %s691
        %s693 = smul.u32 4, %s32
      $region104: #{tpu_custom_call.1} parent=99 // pred_fallthru
        _
      // Predicated region
      $region105: #{tpu_custom_call.1} parent=99 // pred_check
        %p694 = pneg %p78
      $region106: #{tpu_custom_call.1} parent=99 // pred_check_branch
        %696 = sbr.rel (%p694) target = $region108
      $region107: #{tpu_custom_call.1} parent=99 // pred_region
        %s697 = smul.u32 4, %s32
        %p698 = scmp.lt.s32.totalorder %s697, 7
        %s699 = scalar_select %p698, %s697, 7
        %s700 = smul.addr %s699, 8
        %s701 = scalar_lea.vmem %s1, %s700
        %s702 = smul.u32 4, %s32
      $region108: #{tpu_custom_call.1} parent=99 // pred_fallthru
        _
      // Predicated region
      $region109: #{tpu_custom_call.1} parent=99 // pred_check
        %p703 = pneg %p104
      $region110: #{tpu_custom_call.1} parent=99 // pred_check_branch
        %705 = sbr.rel (%p703) target = $region112
      $region111: #{tpu_custom_call.1} parent=99 // pred_region
        %p706 = scmp.lt.s32.totalorder %s32, 1
        %s707 = scalar_select %p706, %s32, 1
        %s708 = scalar_lea.vmem %s2, %s707
      $region112: #{tpu_custom_call.1} parent=99 // pred_fallthru
        _
    $region100: #{tpu_custom_call.1} parent=5 // pred_fallthru
      _
    %p709 = scmp.le.s32.totalorder 1, %s32
    %p710 = scmp.lt.s32.totalorder %s32, 3
    %p711 = pnand %p709, %p710
    %p712 = pneg %p711
    // Predicated region
    $region113: #{tpu_custom_call.1} parent=5 // pred_check
      _
    $region114: #{tpu_custom_call.1} parent=5 // pred_check_branch
      %714 = sbr.rel (%p711) target = $region116
    $region115: #{tpu_custom_call.1} parent=5 // pred_region
      %s715 = ssub.s32 %s32, 1
      %s716 = smul.u32 4, %s37
      %p717 = scmp.lt.s32.totalorder %s716, 7
      %s718 = scalar_select %p717, %s716, 7
      %s719 = smul.addr %s718, 8
      %s720 = scalar_lea.vmem %s0, %s719
      %p721 = pneg %p58
      %p722 = pneg %p55
      %s723 = smul.u32 4, %s37
      %p724 = scmp.lt.s32.totalorder %s723, 7
      %s725 = scalar_select %p724, %s723, 7
      %s726 = smul.addr %s725, 8
      %s727 = scalar_lea.vmem %s1, %s726
      %p728 = pneg %p84
      %p729 = pneg %p81
      %p730 = scmp.lt.s32.totalorder %s37, 1
      %s731 = scalar_select %p730, %s37, 1
      %s732 = scalar_lea.vmem %s2, %s731
      %p733 = pneg %p110
      %p734 = pneg %p107
      %p735 = pneg %p131
      %p736 = pneg %p128
      %p737 = pneg %p152
      %p738 = pneg %p149
      %p739 = pneg %p173
      %p740 = pneg %p170
      %p741 = pneg %p194
      %p742 = pneg %p191
      %p743 = pneg %p215
      %p744 = pneg %p212
      %p745 = pneg %p236
      %p746 = pneg %p233
      %p747 = pneg %p257
      %p748 = pneg %p254
      %p749 = pneg %p278
      %p750 = pneg %p275
      %p751 = pneg %p299
      %p752 = pneg %p296
      %p753 = pneg %p320
      %p754 = pneg %p317
      %p755 = pneg %p341
      %p756 = pneg %p338
      %p757 = pneg %p362
      %p758 = pneg %p359
      %p759 = pneg %p383
      %p760 = pneg %p380
      %p761 = pneg %p404
      %p762 = pneg %p401
      %p763 = pneg %p425
      %p764 = pneg %p422
      %p765 = pneg %p446
      %p766 = pneg %p443
      %p767 = pneg %p467
      %p768 = pneg %p464
      %p769 = pneg %p488
      %p770 = pneg %p485
      %p771 = pneg %p509
      %p772 = pneg %p506
      %p773 = pneg %p530
      %p774 = pneg %p527
      %p775 = pneg %p551
      %p776 = pneg %p548
      %p777 = pneg %p577
      %p778 = pneg %p574
      %s779 = smul.u32 4, %s37
      %p780 = scmp.lt.s32.totalorder %s779, 7
      %s781 = scalar_select %p780, %s779, 7
      %s782 = smul.addr %s781, 8
      %s783 = scalar_lea.vmem %s24, %s782
      %p784 = pneg %p603
      %p785 = pneg %p600
      %s786 = smul.u32 4, %s37
      %p787 = scmp.lt.s32.totalorder %s786, 7
      %s788 = scalar_select %p787, %s786, 7
      %s789 = smul.addr %s788, 8
      %s790 = scalar_lea.vmem %s25, %s789
      %s791 = smul.u32 4, %s37
      %p792 = scmp.lt.s32.totalorder %s791, 7
      %s793 = scalar_select %p792, %s791, 7
      %s794 = smul.addr %s793, 8
      %s795 = scalar_lea.vmem %s0, %s794
      %s796 = smul.u32 4, %s37
      %s797 = smul.u32 4, %s37
      %p798 = scmp.lt.s32.totalorder %s797, 7
      %s799 = scalar_select %p798, %s797, 7
      %s800 = smul.addr %s799, 8
      %s801 = scalar_lea.vmem %s1, %s800
      %s802 = smul.u32 4, %s37
      %p803 = scmp.lt.s32.totalorder %s37, 1
      %s804 = scalar_select %p803, %s37, 1
      %s805 = scalar_lea.vmem %s2, %s804
      %s806 = smul.u32 4, %s37
      %p807 = scmp.lt.s32.totalorder %s806, 7
      %s808 = scalar_select %p807, %s806, 7
      %s809 = smul.addr %s808, 8
      %s810 = scalar_lea.vmem %s24, %s809
      %s811 = smul.u32 4, %s37
      %s812 = smul.u32 4, %s37
      %p813 = scmp.lt.s32.totalorder %s812, 7
      %s814 = scalar_select %p813, %s812, 7
      %s815 = smul.addr %s814, 8
      %s816 = scalar_lea.vmem %s25, %s815
      %s817 = smul.u32 4, %s37
      %v818 = vld [vmem:[%s795] sm:$0xff]
      %v819 = vld [vmem:[%s795 + $0x8] sm:$0xff]
      %v820 = vld [vmem:[%s795 + $0x10] sm:$0xff]
      %v821 = vld [vmem:[%s795 + $0x18] sm:$0xff]
      %v822 = vld [vmem:[%s801] sm:$0xff]
      %v823 = vld [vmem:[%s801 + $0x8] sm:$0xff]
      %v824 = vld [vmem:[%s801 + $0x10] sm:$0xff]
      %v825 = vld [vmem:[%s801 + $0x18] sm:$0xff]
      %v826 = vld [vmem:[%s805] sm:$0x1]
      %v827 = vld [vmem:[%s3] sm:$0xff]
      %v828 = vld [vmem:[%s4] sm:$0x1]
      %v830 = vlaneseq
      %v831 = vshrl.u32 %v830, 7
      %v832 = vsub.s32 0, %v831
      %v833 = vrot.slane %v828, %v832
      %vm835 = vcmask 64512
      %v837 = vsel %vm835, %v818, 0
      %v840 = vsel %vm835, %v819, 0
      %v843 = vsel %vm835, %v820, 0
      %v846 = vsel %vm835, %v821, 0
      %848 = vmatprep.subr.mxu0 0.0
      %849 = vmatpush1.msra.mxu0 %v827
      %850 = vmatprep.subr.mxu0 0.0
      %851 = vmatpush1.msra.mxu0 0.0
      %852 = vmatprep.subr.mxu0 0.0
      %853 = vmatpush1.msra.mxu0 0.0
      %854 = vmatprep.subr.mxu0 0.0
      %855 = vmatpush1.msra.mxu0 0.0
      %856 = vmatprep.subr.mxu0 0.0
      %857 = vmatpush1.msra.mxu0 0.0
      %858 = vmatprep.subr.mxu0 0.0
      %859 = vmatpush1.msra.mxu0 0.0
      %860 = vmatprep.subr.mxu0 0.0
      %861 = vmatpush1.msra.mxu0 0.0
      %862 = vmatprep.subr.mxu0 0.0
      %863 = vmatpush1.msra.mxu0 0.0
      %864 = vmatprep.subr.mxu0 0.0
      %865 = vmatpush1.msra.mxu0 0.0
      %866 = vmatprep.subr.mxu0 0.0
      %867 = vmatpush1.msra.mxu0 0.0
      %868 = vmatprep.subr.mxu0 0.0
      %869 = vmatpush1.msra.mxu0 0.0
      %870 = vmatprep.subr.mxu0 0.0
      %871 = vmatpush1.msra.mxu0 0.0
      %872 = vmatprep.subr.mxu0 0.0
      %873 = vmatpush1.msra.mxu0 0.0
      %874 = vmatprep.subr.mxu0 0.0
      %875 = vmatpush1.msra.mxu0 0.0
      %876 = vmatprep.subr.mxu0 0.0
      %877 = vmatpush1.msra.mxu0 0.0
      %878 = vmatprep.subr.mxu0 0.0
      %879 = vmatpush1.msra.mxu0 0.0
      %880 = vmatprep.subr.mxu0 0.0
      %881 = vmatpush1.msra.mxu0 0.0
      %882 = vmatprep.subr.mxu0 0.0
      %883 = vmatpush1.msra.mxu0 0.0
      %884 = vmatprep.subr.mxu0 0.0
      %885 = vmatpush1.msra.mxu0 0.0
      %886 = vmatprep.subr.mxu0 0.0
      %887 = vmatpush1.msra.mxu0 0.0
      %888 = vmatprep.subr.mxu0 0.0
      %889 = vmatpush1.msra.mxu0 0.0
      %890 = vmatprep.subr.mxu0 0.0
      %891 = vmatpush1.msra.mxu0 0.0
      %892 = vmatprep.subr.mxu0 0.0
      %893 = vmatpush1.msra.mxu0 0.0
      %894 = vmatprep.subr.mxu0 0.0
      %895 = vmatpush1.msra.mxu0 0.0
      %896 = vmatprep.subr.mxu0 0.0
      %897 = vmatpush1.msra.mxu0 0.0
      %898 = vmatprep.subr.mxu0 0.0
      %899 = vmatpush1.msra.mxu0 0.0
      %900 = vmatprep.subr.mxu0 0.0
      %901 = vmatpush1.msra.mxu0 0.0
      %902 = vmatprep.subr.mxu0 0.0
      %903 = vmatpush1.msra.mxu0 0.0
      %904 = vmatprep.subr.mxu0 0.0
      %905 = vmatpush1.msra.mxu0 0.0
      %906 = vmatprep.subr.mxu0 0.0
      %907 = vmatpush1.msra.mxu0 0.0
      %908 = vmatprep.subr.mxu0 0.0
      %909 = vmatpush1.msra.mxu0 0.0
      %910 = vmatprep.subr.mxu0 0.0
      %911 = vmatpush1.msra.mxu0 0.0
      %912 = vmatprep.mubr.f32.mxu0 0.0
      %913 = vmatmul.mubr.f32.gmra.mrb[0].mxu0 %v837
      %v914 = vpop.f32.mrb[0].mxu0
      %v915 = vadd.f32 %v833, %v914
      %v916 = vpop.f32.mrb[0].mxu0
      %917 = vmatprep.mubr.f32.mxu0 0.0
      %918 = vmatmul.mubr.f32.gmra.mrb[0].mxu0 %v840
      %v919 = vpop.f32.mrb[0].mxu0
      %v920 = vadd.f32 %v833, %v919
      %v921 = vpop.f32.mrb[0].mxu0
      %922 = vmatprep.mubr.f32.mxu0 0.0
      %923 = vmatmul.mubr.f32.gmra.mrb[0].mxu0 %v843
      %v924 = vpop.f32.mrb[0].mxu0
      %v925 = vadd.f32 %v833, %v924
      %v926 = vpop.f32.mrb[0].mxu0
      %927 = vmatprep.mubr.f32.mxu0 0.0
      %928 = vmatmul.mubr.f32.gmra.mrb[0].mxu0 %v846
      %v929 = vpop.f32.mrb[0].mxu0
      %v930 = vadd.f32 %v833, %v929
      %v931 = vpop.f32.mrb[0].mxu0
      %932 = vdwg.mxu0
      %v933 = vld [vmem:[%s5] sm:$0x7]
      %v934 = vld [vmem:[%s6] sm:$0x7]
      %936 = vset.pattern.permute.xlu0 0
      %937 = vperm.xlu0 %936, %v934
      %v938 = vpop.permute.xlu0 %937
      %v941 = vsel %vm835, %v933, 0
      %943 = vmatprep.subr.mxu0 0.0
      %944 = vmatpush1.xpose.msra.mxu0 %v837
      %945 = vmatprep.subr.mxu0 0.0
      %946 = vmatpush1.xpose.msra.mxu0 %v840
      %947 = vmatprep.subr.mxu0 0.0
      %948 = vmatpush1.xpose.msra.mxu0 %v843
      %949 = vmatprep.subr.mxu0 0.0
      %950 = vmatpush1.xpose.msra.mxu0 %v846
      %951 = vmatprep.subr.mxu0 0.0
      %952 = vmatpush1.xpose.msra.mxu0 0.0
      %953 = vmatprep.subr.mxu0 0.0
      %954 = vmatpush1.xpose.msra.mxu0 0.0
      %955 = vmatprep.subr.mxu0 0.0
      %956 = vmatpush1.xpose.msra.mxu0 0.0
      %957 = vmatprep.subr.mxu0 0.0
      %958 = vmatpush1.xpose.msra.mxu0 0.0
      %959 = vmatprep.subr.mxu0 0.0
      %960 = vmatpush1.xpose.msra.mxu0 0.0
      %961 = vmatprep.subr.mxu0 0.0
      %962 = vmatpush1.xpose.msra.mxu0 0.0
      %963 = vmatprep.subr.mxu0 0.0
      %964 = vmatpush1.xpose.msra.mxu0 0.0
      %965 = vmatprep.subr.mxu0 0.0
      %966 = vmatpush1.xpose.msra.mxu0 0.0
      %967 = vmatprep.subr.mxu0 0.0
      %968 = vmatpush1.xpose.msra.mxu0 0.0
      %969 = vmatprep.subr.mxu0 0.0
      %970 = vmatpush1.xpose.msra.mxu0 0.0
      %971 = vmatprep.subr.mxu0 0.0
      %972 = vmatpush1.xpose.msra.mxu0 0.0
      %973 = vmatprep.subr.mxu0 0.0
      %974 = vmatpush1.xpose.msra.mxu0 0.0
      %975 = vmatprep.subr.mxu0 0.0
      %976 = vmatpush1.xpose.msra.mxu0 0.0
      %977 = vmatprep.subr.mxu0 0.0
      %978 = vmatpush1.xpose.msra.mxu0 0.0
      %979 = vmatprep.subr.mxu0 0.0
      %980 = vmatpush1.xpose.msra.mxu0 0.0
      %981 = vmatprep.subr.mxu0 0.0
      %982 = vmatpush1.xpose.msra.mxu0 0.0
      %983 = vmatprep.subr.mxu0 0.0
      %984 = vmatpush1.xpose.msra.mxu0 0.0
      %985 = vmatprep.subr.mxu0 0.0
      %986 = vmatpush1.xpose.msra.mxu0 0.0
      %987 = vmatprep.subr.mxu0 0.0
      %988 = vmatpush1.xpose.msra.mxu0 0.0
      %989 = vmatprep.subr.mxu0 0.0
      %990 = vmatpush1.xpose.msra.mxu0 0.0
      %991 = vmatprep.subr.mxu0 0.0
      %992 = vmatpush1.xpose.msra.mxu0 0.0
      %993 = vmatprep.subr.mxu0 0.0
      %994 = vmatpush1.xpose.msra.mxu0 0.0
      %995 = vmatprep.subr.mxu0 0.0
      %996 = vmatpush1.xpose.msra.mxu0 0.0
      %997 = vmatprep.subr.mxu0 0.0
      %998 = vmatpush1.xpose.msra.mxu0 0.0
      %999 = vmatprep.subr.mxu0 0.0
      %1000 = vmatpush1.xpose.msra.mxu0 0.0
      %1001 = vmatprep.subr.mxu0 0.0
      %1002 = vmatpush1.xpose.msra.mxu0 0.0
      %1003 = vmatprep.subr.mxu0 0.0
      %1004 = vmatpush1.xpose.msra.mxu0 0.0
      %1005 = vmatprep.subr.mxu0 0.0
      %1006 = vmatpush1.xpose.msra.mxu0 0.0
      %1007 = vmatprep.mubr.f32.mxu0 0.0
      %1008 = vmatmul.mubr.f32.gmra.mrb[0].mxu0 %v941
      %v1009 = vpop.f32.mrb[0].mxu0
      %v1010 = vadd.f32 %v938, %v1009
      %v1011 = vpop.f32.mrb[0].mxu0
      %1012 = vdwg.mxu0
      %v1013 = vld [vmem:[%s7] sm:$0xff]
      %v1014 = vld [vmem:[%s8] sm:$0x1]
      %v1016 = vlaneseq
      %v1017 = vshrl.u32 %v1016, 7
      %v1018 = vsub.s32 0, %v1017
      %v1019 = vrot.slane %v1014, %v1018
      %1021 = vmatprep.subr.mxu0 0.0
      %1022 = vmatpush1.msra.mxu0 %v1013
      %1023 = vmatprep.subr.mxu0 0.0
      %1024 = vmatpush1.msra.mxu0 0.0
      %1025 = vmatprep.subr.mxu0 0.0
      %1026 = vmatpush1.msra.mxu0 0.0
      %1027 = vmatprep.subr.mxu0 0.0
      %1028 = vmatpush1.msra.mxu0 0.0
      %1029 = vmatprep.subr.mxu0 0.0
      %1030 = vmatpush1.msra.mxu0 0.0
      %1031 = vmatprep.subr.mxu0 0.0
      %1032 = vmatpush1.msra.mxu0 0.0
      %1033 = vmatprep.subr.mxu0 0.0
      %1034 = vmatpush1.msra.mxu0 0.0
      %1035 = vmatprep.subr.mxu0 0.0
      %1036 = vmatpush1.msra.mxu0 0.0
      %1037 = vmatprep.subr.mxu0 0.0
      %1038 = vmatpush1.msra.mxu0 0.0
      %1039 = vmatprep.subr.mxu0 0.0
      %1040 = vmatpush1.msra.mxu0 0.0
      %1041 = vmatprep.subr.mxu0 0.0
      %1042 = vmatpush1.msra.mxu0 0.0
      %1043 = vmatprep.subr.mxu0 0.0
      %1044 = vmatpush1.msra.mxu0 0.0
      %1045 = vmatprep.subr.mxu0 0.0
      %1046 = vmatpush1.msra.mxu0 0.0
      %1047 = vmatprep.subr.mxu0 0.0
      %1048 = vmatpush1.msra.mxu0 0.0
      %1049 = vmatprep.subr.mxu0 0.0
      %1050 = vmatpush1.msra.mxu0 0.0
      %1051 = vmatprep.subr.mxu0 0.0
      %1052 = vmatpush1.msra.mxu0 0.0
      %1053 = vmatprep.subr.mxu0 0.0
      %1054 = vmatpush1.msra.mxu0 0.0
      %1055 = vmatprep.subr.mxu0 0.0
      %1056 = vmatpush1.msra.mxu0 0.0
      %1057 = vmatprep.subr.mxu0 0.0
      %1058 = vmatpush1.msra.mxu0 0.0
      %1059 = vmatprep.subr.mxu0 0.0
      %1060 = vmatpush1.msra.mxu0 0.0
      %1061 = vmatprep.subr.mxu0 0.0
      %1062 = vmatpush1.msra.mxu0 0.0
      %1063 = vmatprep.subr.mxu0 0.0
      %1064 = vmatpush1.msra.mxu0 0.0
      %1065 = vmatprep.subr.mxu0 0.0
      %1066 = vmatpush1.msra.mxu0 0.0
      %1067 = vmatprep.subr.mxu0 0.0
      %1068 = vmatpush1.msra.mxu0 0.0
      %1069 = vmatprep.subr.mxu0 0.0
      %1070 = vmatpush1.msra.mxu0 0.0
      %1071 = vmatprep.subr.mxu0 0.0
      %1072 = vmatpush1.msra.mxu0 0.0
      %1073 = vmatprep.subr.mxu0 0.0
      %1074 = vmatpush1.msra.mxu0 0.0
      %1075 = vmatprep.subr.mxu0 0.0
      %1076 = vmatpush1.msra.mxu0 0.0
      %1077 = vmatprep.subr.mxu0 0.0
      %1078 = vmatpush1.msra.mxu0 0.0
      %1079 = vmatprep.subr.mxu0 0.0
      %1080 = vmatpush1.msra.mxu0 0.0
      %1081 = vmatprep.subr.mxu0 0.0
      %1082 = vmatpush1.msra.mxu0 0.0
      %1083 = vmatprep.subr.mxu0 0.0
      %1084 = vmatpush1.msra.mxu0 0.0
      %1085 = vmatprep.mubr.f32.mxu0 0.0
      %1086 = vmatmul.mubr.f32.gmra.mrb[0].mxu0 %v837
      %v1087 = vpop.f32.mrb[0].mxu0
      %v1088 = vadd.f32 %v1019, %v1087
      %v1089 = vpop.f32.mrb[0].mxu0
      %1090 = vmatprep.mubr.f32.mxu0 0.0
      %1091 = vmatmul.mubr.f32.gmra.mrb[0].mxu0 %v840
      %v1092 = vpop.f32.mrb[0].mxu0
      %v1093 = vadd.f32 %v1019, %v1092
      %v1094 = vpop.f32.mrb[0].mxu0
      %1095 = vmatprep.mubr.f32.mxu0 0.0
      %1096 = vmatmul.mubr.f32.gmra.mrb[0].mxu0 %v843
      %v1097 = vpop.f32.mrb[0].mxu0
      %v1098 = vadd.f32 %v1019, %v1097
      %v1099 = vpop.f32.mrb[0].mxu0
      %1100 = vmatprep.mubr.f32.mxu0 0.0
      %1101 = vmatmul.mubr.f32.gmra.mrb[0].mxu0 %v846
      %v1102 = vpop.f32.mrb[0].mxu0
      %v1103 = vadd.f32 %v1019, %v1102
      %v1104 = vpop.f32.mrb[0].mxu0
      %1105 = vdwg.mxu0
      %v1106 = vmul.f32 %v915, %v915
      %v1107 = vmul.f32 %v920, %v920
      %v1108 = vmul.f32 %v925, %v925
      %v1109 = vmul.f32 %v930, %v930
      %vm1110 = vcmask 23552
      %v1111 = vsel %vm1110, %v1106, 0.0
      %1112 = vadd.xlane.f32.xlu0 %v1111
      %v1113 = vpop.xlane.xlu0 %1112
      %v1114 = vsel %vm1110, %v1107, 0.0
      %1115 = vadd.xlane.f32.xlu0 %v1114
      %v1116 = vpop.xlane.xlu0 %1115
      %v1117 = vsel %vm1110, %v1108, 0.0
      %1118 = vadd.xlane.f32.xlu0 %v1117
      %v1119 = vpop.xlane.xlu0 %1118
      %v1120 = vsel %vm1110, %v1109, 0.0
      %1121 = vadd.xlane.f32.xlu0 %v1120
      %v1122 = vpop.xlane.xlu0 %1121
      %v1123 = vmul.f32 %v1010, %v1010
      %vm1124 = vcmask 256000
      %v1125 = vsel %vm1124, %v1123, 0.0
      %v1126 = vrot.slane %v1125, 4
      %v1127 = vadd.f32 %v1125, %v1126
      %v1128 = vrot.slane %v1127, 2
      %v1129 = vadd.f32 %v1127, %v1128
      %v1130 = vrot.slane %v1129, 1
      %v1131 = vadd.f32 %v1129, %v1130
      %v1133 = vsel %vm1110, %v915, 0
      %v1136 = vsel %vm1110, %v920, 0
      %v1139 = vsel %vm1110, %v925, 0
      %v1142 = vsel %vm1110, %v930, 0
      %vm1144 = vcmask 1042432
      %v1146 = vsel %vm1144, %v1010, 0
      %1148 = vmatprep.subr.mxu0 0.0
      %1149 = vmatpush1.msra.mxu0 %v1146
      %1150 = vmatprep.subr.mxu0 0.0
      %1151 = vmatpush1.msra.mxu0 0.0
      %1152 = vmatprep.subr.mxu0 0.0
      %1153 = vmatpush1.msra.mxu0 0.0
      %1154 = vmatprep.subr.mxu0 0.0
      %1155 = vmatpush1.msra.mxu0 0.0
      %1156 = vmatprep.subr.mxu0 0.0
      %1157 = vmatpush1.msra.mxu0 0.0
      %1158 = vmatprep.subr.mxu0 0.0
      %1159 = vmatpush1.msra.mxu0 0.0
      %1160 = vmatprep.subr.mxu0 0.0
      %1161 = vmatpush1.msra.mxu0 0.0
      %1162 = vmatprep.subr.mxu0 0.0
      %1163 = vmatpush1.msra.mxu0 0.0
      %1164 = vmatprep.subr.mxu0 0.0
      %1165 = vmatpush1.msra.mxu0 0.0
      %1166 = vmatprep.subr.mxu0 0.0
      %1167 = vmatpush1.msra.mxu0 0.0
      %1168 = vmatprep.subr.mxu0 0.0
      %1169 = vmatpush1.msra.mxu0 0.0
      %1170 = vmatprep.subr.mxu0 0.0
      %1171 = vmatpush1.msra.mxu0 0.0
      %1172 = vmatprep.subr.mxu0 0.0
      %1173 = vmatpush1.msra.mxu0 0.0
      %1174 = vmatprep.subr.mxu0 0.0
      %1175 = vmatpush1.msra.mxu0 0.0
      %1176 = vmatprep.subr.mxu0 0.0
      %1177 = vmatpush1.msra.mxu0 0.0
      %1178 = vmatprep.subr.mxu0 0.0
      %1179 = vmatpush1.msra.mxu0 0.0
      %1180 = vmatprep.subr.mxu0 0.0
      %1181 = vmatpush1.msra.mxu0 0.0
      %1182 = vmatprep.subr.mxu0 0.0
      %1183 = vmatpush1.msra.mxu0 0.0
      %1184 = vmatprep.subr.mxu0 0.0
      %1185 = vmatpush1.msra.mxu0 0.0
      %1186 = vmatprep.subr.mxu0 0.0
      %1187 = vmatpush1.msra.mxu0 0.0
      %1188 = vmatprep.subr.mxu0 0.0
      %1189 = vmatpush1.msra.mxu0 0.0
      %1190 = vmatprep.subr.mxu0 0.0
      %1191 = vmatpush1.msra.mxu0 0.0
      %1192 = vmatprep.subr.mxu0 0.0
      %1193 = vmatpush1.msra.mxu0 0.0
      %1194 = vmatprep.subr.mxu0 0.0
      %1195 = vmatpush1.msra.mxu0 0.0
      %1196 = vmatprep.subr.mxu0 0.0
      %1197 = vmatpush1.msra.mxu0 0.0
      %1198 = vmatprep.subr.mxu0 0.0
      %1199 = vmatpush1.msra.mxu0 0.0
      %1200 = vmatprep.subr.mxu0 0.0
      %1201 = vmatpush1.msra.mxu0 0.0
      %1202 = vmatprep.subr.mxu0 0.0
      %1203 = vmatpush1.msra.mxu0 0.0
      %1204 = vmatprep.subr.mxu0 0.0
      %1205 = vmatpush1.msra.mxu0 0.0
      %1206 = vmatprep.subr.mxu0 0.0
      %1207 = vmatpush1.msra.mxu0 0.0
      %1208 = vmatprep.subr.mxu0 0.0
      %1209 = vmatpush1.msra.mxu0 0.0
      %1210 = vmatprep.subr.mxu0 0.0
      %1211 = vmatpush1.msra.mxu0 0.0
      %1212 = vmatprep.mubr.f32.mxu0 0.0
      %1213 = vmatmul.mubr.f32.gmra.mrb[0].mxu0 %v1133
      %v1214 = vpop.f32.mrb[0].mxu0
      %v1215 = vadd.f32 0.0, %v1214
      %v1216 = vpop.f32.mrb[0].mxu0
      %1217 = vmatprep.mubr.f32.mxu0 0.0
      %1218 = vmatmul.mubr.f32.gmra.mrb[0].mxu0 %v1136
      %v1219 = vpop.f32.mrb[0].mxu0
      %v1220 = vadd.f32 0.0, %v1219
      %v1221 = vpop.f32.mrb[0].mxu0
      %1222 = vmatprep.mubr.f32.mxu0 0.0
      %1223 = vmatmul.mubr.f32.gmra.mrb[0].mxu0 %v1139
      %v1224 = vpop.f32.mrb[0].mxu0
      %v1225 = vadd.f32 0.0, %v1224
      %v1226 = vpop.f32.mrb[0].mxu0
      %1227 = vmatprep.mubr.f32.mxu0 0.0
      %1228 = vmatmul.mubr.f32.gmra.mrb[0].mxu0 %v1142
      %v1229 = vpop.f32.mrb[0].mxu0
      %v1230 = vadd.f32 0.0, %v1229
      %v1231 = vpop.f32.mrb[0].mxu0
      %1232 = vdwg.mxu0
      %v1233 = vadd.f32 %v1113, %v1131
      %v1234 = vadd.f32 %v1116, %v1131
      %v1235 = vadd.f32 %v1119, %v1131
      %v1236 = vadd.f32 %v1122, %v1131
      %v1237 = vmul.f32 %v1215, 2.0
      %v1238 = vmul.f32 %v1220, 2.0
      %v1239 = vmul.f32 %v1225, 2.0
      %v1240 = vmul.f32 %v1230, 2.0
      %v1241 = vsub.f32 %v1233, %v1237
      %v1242 = vsub.f32 %v1234, %v1238
      %v1243 = vsub.f32 %v1235, %v1239
      %v1244 = vsub.f32 %v1236, %v1240
      %v1245 = vmax.f32 %v1241, 0.0
      %v1246 = vmax.f32 %v1242, 0.0
      %v1247 = vmax.f32 %v1243, 0.0
      %v1248 = vmax.f32 %v1244, 0.0
      %1250 = vset.pattern.permute.xlu0 0
      %1251 = vperm.xlu0 %1250, %v822
      %v1252 = vpop.permute.xlu0 %1251
      %1255 = vset.pattern.permute.xlu0 0
      %1256 = vperm.xlu0 %1255, %v823
      %v1257 = vpop.permute.xlu0 %1256
      %1260 = vset.pattern.permute.xlu0 0
      %1261 = vperm.xlu0 %1260, %v824
      %v1262 = vpop.permute.xlu0 %1261
      %1265 = vset.pattern.permute.xlu0 0
      %1266 = vperm.xlu0 %1265, %v825
      %v1267 = vpop.permute.xlu0 %1266
      %v1270 = vlaneseq
      %v1271 = vshrl.u32 %v1270, 7
      %v1272 = vsub.s32 0, %v1271
      %v1273 = vrot.slane %v826, %v1272
      %vm1275 = vcmp.eq.f32.partialorder %v1252, %v1273
      %vm1276 = vcmp.eq.f32.partialorder %v1257, %v1273
      %vm1277 = vcmp.eq.f32.partialorder %v1262, %v1273
      %vm1278 = vcmp.eq.f32.partialorder %v1267, %v1273
      %v1279 = vsel %vm1275, %v1245, 1e+30
      %v1280 = vsel %vm1276, %v1246, 1e+30
      %v1281 = vsel %vm1277, %v1247, 1e+30
      %v1282 = vsel %vm1278, %v1248, 1e+30
      %v1283 = vmul.f32 %v1279, -10.0
      %v1284 = vmul.f32 %v1280, -10.0
      %v1285 = vmul.f32 %v1281, -10.0
      %v1286 = vmul.f32 %v1282, -10.0
      %v1287 = vmul.f32 %v1283, 1.442695
      %v1288 = vpow.pop %v1287
      %v1289 = vmul.f32 %v1284, 1.442695
      %v1290 = vpow.pop %v1289
      %v1291 = vmul.f32 %v1285, 1.442695
      %v1292 = vpow.pop %v1291
      %v1293 = vmul.f32 %v1286, 1.442695
      %v1294 = vpow.pop %v1293
      %v1295 = vlaneseq
      %v1296 = vand.u32 %v1295, 127
      %v1297 = vadd.f32 %v1279, 1.0
      %v1298 = vadd.f32 %v1280, 1.0
      %v1299 = vadd.f32 %v1281, 1.0
      %v1300 = vadd.f32 %v1282, 1.0
      %v1305 = vand.u32 %v1297, 4294967264
      %v1306 = vand.u32 %v1298, 4294967264
      %v1307 = vand.u32 %v1299, 4294967264
      %v1308 = vand.u32 %v1300, 4294967264
      %v1309 = vor.u32 %v1305, %v1296
      %v1310 = vor.u32 %v1306, %v1296
      %v1311 = vor.u32 %v1307, %v1296
      %v1312 = vor.u32 %v1308, %v1296
      %vm1317 = vcmask 261120
      %v1318 = vsel %vm1317, %v1309, inf
      %1319 = vmin.xlane.f32.xlu0 %v1318
      %v1320 = vpop.xlane.xlu0 %1319
      %v1321 = vsel %vm1317, %v1310, inf
      %1322 = vmin.xlane.f32.xlu0 %v1321
      %v1323 = vpop.xlane.xlu0 %1322
      %v1324 = vsel %vm1317, %v1311, inf
      %1325 = vmin.xlane.f32.xlu0 %v1324
      %v1326 = vpop.xlane.xlu0 %1325
      %v1327 = vsel %vm1317, %v1312, inf
      %1328 = vmin.xlane.f32.xlu0 %v1327
      %v1329 = vpop.xlane.xlu0 %1328
      %v1334 = vand.u32 %v1320, 31
      %v1335 = vand.u32 %v1323, 31
      %v1336 = vand.u32 %v1326, 31
      %v1337 = vand.u32 %v1329, 31
      %vm1338 = vcmp.eq.s32.totalorder %v1296, %v1334
      %vm1339 = vcmp.eq.s32.totalorder %v1296, %v1335
      %vm1340 = vcmp.eq.s32.totalorder %v1296, %v1336
      %vm1341 = vcmp.eq.s32.totalorder %v1296, %v1337
      %v1342 = vsel %vm1338, 3e+38, %v1309
      %v1343 = vsel %vm1339, 3e+38, %v1310
      %v1344 = vsel %vm1340, 3e+38, %v1311
      %v1345 = vsel %vm1341, 3e+38, %v1312
      %v1346 = vsel %vm1338, %v1288, 0.0
      %v1347 = vsel %vm1339, %v1290, 0.0
      %v1348 = vsel %vm1340, %v1292, 0.0
      %v1349 = vsel %vm1341, %v1294, 0.0
      %v1351 = vsel %vm1317, %v1346, 0
      %v1354 = vsel %vm1317, %v1347, 0
      %v1357 = vsel %vm1317, %v1348, 0
      %v1360 = vsel %vm1317, %v1349, 0
      %1362 = vmatprep.subr.mxu0 0.0
      %1363 = vmatpush1.msra.mxu0 %v1088
      %1364 = vmatprep.subr.mxu0 0.0
      %1365 = vmatpush1.msra.mxu0 %v1093
      %1366 = vmatprep.subr.mxu0 0.0
      %1367 = vmatpush1.msra.mxu0 %v1098
      %1368 = vmatprep.subr.mxu0 0.0
      %1369 = vmatpush1.msra.mxu0 %v1103
      %1370 = vmatprep.subr.mxu0 0.0
      %1371 = vmatpush1.msra.mxu0 0.0
      %1372 = vmatprep.subr.mxu0 0.0
      %1373 = vmatpush1.msra.mxu0 0.0
      %1374 = vmatprep.subr.mxu0 0.0
      %1375 = vmatpush1.msra.mxu0 0.0
      %1376 = vmatprep.subr.mxu0 0.0
      %1377 = vmatpush1.msra.mxu0 0.0
      %1378 = vmatprep.subr.mxu0 0.0
      %1379 = vmatpush1.msra.mxu0 0.0
      %1380 = vmatprep.subr.mxu0 0.0
      %1381 = vmatpush1.msra.mxu0 0.0
      %1382 = vmatprep.subr.mxu0 0.0
      %1383 = vmatpush1.msra.mxu0 0.0
      %1384 = vmatprep.subr.mxu0 0.0
      %1385 = vmatpush1.msra.mxu0 0.0
      %1386 = vmatprep.subr.mxu0 0.0
      %1387 = vmatpush1.msra.mxu0 0.0
      %1388 = vmatprep.subr.mxu0 0.0
      %1389 = vmatpush1.msra.mxu0 0.0
      %1390 = vmatprep.subr.mxu0 0.0
      %1391 = vmatpush1.msra.mxu0 0.0
      %1392 = vmatprep.subr.mxu0 0.0
      %1393 = vmatpush1.msra.mxu0 0.0
      %1394 = vmatprep.subr.mxu0 0.0
      %1395 = vmatpush1.msra.mxu0 0.0
      %1396 = vmatprep.subr.mxu0 0.0
      %1397 = vmatpush1.msra.mxu0 0.0
      %1398 = vmatprep.subr.mxu0 0.0
      %1399 = vmatpush1.msra.mxu0 0.0
      %1400 = vmatprep.subr.mxu0 0.0
      %1401 = vmatpush1.msra.mxu0 0.0
      %1402 = vmatprep.subr.mxu0 0.0
      %1403 = vmatpush1.msra.mxu0 0.0
      %1404 = vmatprep.subr.mxu0 0.0
      %1405 = vmatpush1.msra.mxu0 0.0
      %1406 = vmatprep.subr.mxu0 0.0
      %1407 = vmatpush1.msra.mxu0 0.0
      %1408 = vmatprep.subr.mxu0 0.0
      %1409 = vmatpush1.msra.mxu0 0.0
      %1410 = vmatprep.subr.mxu0 0.0
      %1411 = vmatpush1.msra.mxu0 0.0
      %1412 = vmatprep.subr.mxu0 0.0
      %1413 = vmatpush1.msra.mxu0 0.0
      %1414 = vmatprep.subr.mxu0 0.0
      %1415 = vmatpush1.msra.mxu0 0.0
      %1416 = vmatprep.subr.mxu0 0.0
      %1417 = vmatpush1.msra.mxu0 0.0
      %1418 = vmatprep.subr.mxu0 0.0
      %1419 = vmatpush1.msra.mxu0 0.0
      %1420 = vmatprep.subr.mxu0 0.0
      %1421 = vmatpush1.msra.mxu0 0.0
      %1422 = vmatprep.subr.mxu0 0.0
      %1423 = vmatpush1.msra.mxu0 0.0
      %1424 = vmatprep.subr.mxu0 0.0
      %1425 = vmatpush1.msra.mxu0 0.0
      %1426 = vmatprep.mubr.f32.mxu0 0.0
      %1427 = vmatmul.mubr.f32.gmra.mrb[0].mxu0 %v1351
      %v1428 = vpop.f32.mrb[0].mxu0
      %v1429 = vadd.f32 0.0, %v1428
      %v1430 = vpop.f32.mrb[0].mxu0
      %1431 = vmatprep.mubr.f32.mxu0 0.0
      %1432 = vmatmul.mubr.f32.gmra.mrb[0].mxu0 %v1354
      %v1433 = vpop.f32.mrb[0].mxu0
      %v1434 = vadd.f32 0.0, %v1433
      %v1435 = vpop.f32.mrb[0].mxu0
      %1436 = vmatprep.mubr.f32.mxu0 0.0
      %1437 = vmatmul.mubr.f32.gmra.mrb[0].mxu0 %v1357
      %v1438 = vpop.f32.mrb[0].mxu0
      %v1439 = vadd.f32 0.0, %v1438
      %v1440 = vpop.f32.mrb[0].mxu0
      %1441 = vmatprep.mubr.f32.mxu0 0.0
      %1442 = vmatmul.mubr.f32.gmra.mrb[0].mxu0 %v1360
      %v1443 = vpop.f32.mrb[0].mxu0
      %v1444 = vadd.f32 0.0, %v1443
      %v1445 = vpop.f32.mrb[0].mxu0
      %1446 = vdwg.mxu0
      %v1447 = vadd.f32 %v1429, 0.0
      %v1448 = vadd.f32 %v1434, 0.0
      %v1449 = vadd.f32 %v1439, 0.0
      %v1450 = vadd.f32 %v1444, 0.0
      %v1451 = vmax.f32 %v1429, -1e+30
      %v1452 = vmax.f32 %v1434, -1e+30
      %v1453 = vmax.f32 %v1439, -1e+30
      %v1454 = vmax.f32 %v1444, -1e+30
      %vm1455 = vcmp.eq.s32.totalorder %v1296, 0
      %v1456 = vsel %vm1455, %v1334, 0
      %v1457 = vsel %vm1455, %v1335, 0
      %v1458 = vsel %vm1455, %v1336, 0
      %v1459 = vsel %vm1455, %v1337, 0
      %v1460 = vsel %vm1317, %v1342, inf
      %1461 = vmin.xlane.f32.xlu0 %v1460
      %v1462 = vpop.xlane.xlu0 %1461
      %v1463 = vsel %vm1317, %v1343, inf
      %1464 = vmin.xlane.f32.xlu0 %v1463
      %v1465 = vpop.xlane.xlu0 %1464
      %v1466 = vsel %vm1317, %v1344, inf
      %1467 = vmin.xlane.f32.xlu0 %v1466
      %v1468 = vpop.xlane.xlu0 %1467
      %v1469 = vsel %vm1317, %v1345, inf
      %1470 = vmin.xlane.f32.xlu0 %v1469
      %v1471 = vpop.xlane.xlu0 %1470
      %v1476 = vand.u32 %v1462, 31
      %v1477 = vand.u32 %v1465, 31
      %v1478 = vand.u32 %v1468, 31
      %v1479 = vand.u32 %v1471, 31
      %vm1480 = vcmp.eq.s32.totalorder %v1296, %v1476
      %vm1481 = vcmp.eq.s32.totalorder %v1296, %v1477
      %vm1482 = vcmp.eq.s32.totalorder %v1296, %v1478
      %vm1483 = vcmp.eq.s32.totalorder %v1296, %v1479
      %v1484 = vsel %vm1480, 3e+38, %v1342
      %v1485 = vsel %vm1481, 3e+38, %v1343
      %v1486 = vsel %vm1482, 3e+38, %v1344
      %v1487 = vsel %vm1483, 3e+38, %v1345
      %v1488 = vsel %vm1480, %v1288, 0.0
      %v1489 = vsel %vm1481, %v1290, 0.0
      %v1490 = vsel %vm1482, %v1292, 0.0
      %v1491 = vsel %vm1483, %v1294, 0.0
      %v1493 = vsel %vm1317, %v1488, 0
      %v1496 = vsel %vm1317, %v1489, 0
      %v1499 = vsel %vm1317, %v1490, 0
      %v1502 = vsel %vm1317, %v1491, 0
      %1504 = vmatprep.subr.mxu0 0.0
      %1505 = vmatpush1.msra.mxu0 %v1088
      %1506 = vmatprep.subr.mxu0 0.0
      %1507 = vmatpush1.msra.mxu0 %v1093
      %1508 = vmatprep.subr.mxu0 0.0
      %1509 = vmatpush1.msra.mxu0 %v1098
      %1510 = vmatprep.subr.mxu0 0.0
      %1511 = vmatpush1.msra.mxu0 %v1103
      %1512 = vmatprep.subr.mxu0 0.0
      %1513 = vmatpush1.msra.mxu0 0.0
      %1514 = vmatprep.subr.mxu0 0.0
      %1515 = vmatpush1.msra.mxu0 0.0
      %1516 = vmatprep.subr.mxu0 0.0
      %1517 = vmatpush1.msra.mxu0 0.0
      %1518 = vmatprep.subr.mxu0 0.0
      %1519 = vmatpush1.msra.mxu0 0.0
      %1520 = vmatprep.subr.mxu0 0.0
      %1521 = vmatpush1.msra.mxu0 0.0
      %1522 = vmatprep.subr.mxu0 0.0
      %1523 = vmatpush1.msra.mxu0 0.0
      %1524 = vmatprep.subr.mxu0 0.0
      %1525 = vmatpush1.msra.mxu0 0.0
      %1526 = vmatprep.subr.mxu0 0.0
      %1527 = vmatpush1.msra.mxu0 0.0
      %1528 = vmatprep.subr.mxu0 0.0
      %1529 = vmatpush1.msra.mxu0 0.0
      %1530 = vmatprep.subr.mxu0 0.0
      %1531 = vmatpush1.msra.mxu0 0.0
      %1532 = vmatprep.subr.mxu0 0.0
      %1533 = vmatpush1.msra.mxu0 0.0
      %1534 = vmatprep.subr.mxu0 0.0
      %1535 = vmatpush1.msra.mxu0 0.0
      %1536 = vmatprep.subr.mxu0 0.0
      %1537 = vmatpush1.msra.mxu0 0.0
      %1538 = vmatprep.subr.mxu0 0.0
      %1539 = vmatpush1.msra.mxu0 0.0
      %1540 = vmatprep.subr.mxu0 0.0
      %1541 = vmatpush1.msra.mxu0 0.0
      %1542 = vmatprep.subr.mxu0 0.0
      %1543 = vmatpush1.msra.mxu0 0.0
      %1544 = vmatprep.subr.mxu0 0.0
      %1545 = vmatpush1.msra.mxu0 0.0
      %1546 = vmatprep.subr.mxu0 0.0
      %1547 = vmatpush1.msra.mxu0 0.0
      %1548 = vmatprep.subr.mxu0 0.0
      %1549 = vmatpush1.msra.mxu0 0.0
      %1550 = vmatprep.subr.mxu0 0.0
      %1551 = vmatpush1.msra.mxu0 0.0
      %1552 = vmatprep.subr.mxu0 0.0
      %1553 = vmatpush1.msra.mxu0 0.0
      %1554 = vmatprep.subr.mxu0 0.0
      %1555 = vmatpush1.msra.mxu0 0.0
      %1556 = vmatprep.subr.mxu0 0.0
      %1557 = vmatpush1.msra.mxu0 0.0
      %1558 = vmatprep.subr.mxu0 0.0
      %1559 = vmatpush1.msra.mxu0 0.0
      %1560 = vmatprep.subr.mxu0 0.0
      %1561 = vmatpush1.msra.mxu0 0.0
      %1562 = vmatprep.subr.mxu0 0.0
      %1563 = vmatpush1.msra.mxu0 0.0
      %1564 = vmatprep.subr.mxu0 0.0
      %1565 = vmatpush1.msra.mxu0 0.0
      %1566 = vmatprep.subr.mxu0 0.0
      %1567 = vmatpush1.msra.mxu0 0.0
      %1568 = vmatprep.mubr.f32.mxu0 0.0
      %1569 = vmatmul.mubr.f32.gmra.mrb[0].mxu0 %v1493
      %v1570 = vpop.f32.mrb[0].mxu0
      %v1571 = vadd.f32 0.0, %v1570
      %v1572 = vpop.f32.mrb[0].mxu0
      %1573 = vmatprep.mubr.f32.mxu0 0.0
      %1574 = vmatmul.mubr.f32.gmra.mrb[0].mxu0 %v1496
      %v1575 = vpop.f32.mrb[0].mxu0
      %v1576 = vadd.f32 0.0, %v1575
      %v1577 = vpop.f32.mrb[0].mxu0
      %1578 = vmatprep.mubr.f32.mxu0 0.0
      %1579 = vmatmul.mubr.f32.gmra.mrb[0].mxu0 %v1499
      %v1580 = vpop.f32.mrb[0].mxu0
      %v1581 = vadd.f32 0.0, %v1580
      %v1582 = vpop.f32.mrb[0].mxu0
      %1583 = vmatprep.mubr.f32.mxu0 0.0
      %1584 = vmatmul.mubr.f32.gmra.mrb[0].mxu0 %v1502
      %v1585 = vpop.f32.mrb[0].mxu0
      %v1586 = vadd.f32 0.0, %v1585
      %v1587 = vpop.f32.mrb[0].mxu0
      %1588 = vdwg.mxu0
      %v1589 = vadd.f32 %v1447, %v1571
      %v1590 = vadd.f32 %v1448, %v1576
      %v1591 = vadd.f32 %v1449, %v1581
      %v1592 = vadd.f32 %v1450, %v1586
      %v1593 = vmax.f32 %v1451, %v1571
      %v1594 = vmax.f32 %v1452, %v1576
      %v1595 = vmax.f32 %v1453, %v1581
      %v1596 = vmax.f32 %v1454, %v1586
      %vm1597 = vcmp.eq.s32.totalorder %v1296, 1
      %v1598 = vsel %vm1597, %v1476, 0
      %v1599 = vsel %vm1597, %v1477, 0
      %v1600 = vsel %vm1597, %v1478, 0
      %v1601 = vsel %vm1597, %v1479, 0
      %v1602 = vadd.s32 %v1456, %v1598
      %v1603 = vadd.s32 %v1457, %v1599
      %v1604 = vadd.s32 %v1458, %v1600
      %v1605 = vadd.s32 %v1459, %v1601
      %v1606 = vsel %vm1317, %v1484, inf
      %1607 = vmin.xlane.f32.xlu0 %v1606
      %v1608 = vpop.xlane.xlu0 %1607
      %v1609 = vsel %vm1317, %v1485, inf
      %1610 = vmin.xlane.f32.xlu0 %v1609
      %v1611 = vpop.xlane.xlu0 %1610
      %v1612 = vsel %vm1317, %v1486, inf
      %1613 = vmin.xlane.f32.xlu0 %v1612
      %v1614 = vpop.xlane.xlu0 %1613
      %v1615 = vsel %vm1317, %v1487, inf
      %1616 = vmin.xlane.f32.xlu0 %v1615
      %v1617 = vpop.xlane.xlu0 %1616
      %v1622 = vand.u32 %v1608, 31
      %v1623 = vand.u32 %v1611, 31
      %v1624 = vand.u32 %v1614, 31
      %v1625 = vand.u32 %v1617, 31
      %vm1626 = vcmp.eq.s32.totalorder %v1296, %v1622
      %vm1627 = vcmp.eq.s32.totalorder %v1296, %v1623
      %vm1628 = vcmp.eq.s32.totalorder %v1296, %v1624
      %vm1629 = vcmp.eq.s32.totalorder %v1296, %v1625
      %v1630 = vsel %vm1626, 3e+38, %v1484
      %v1631 = vsel %vm1627, 3e+38, %v1485
      %v1632 = vsel %vm1628, 3e+38, %v1486
      %v1633 = vsel %vm1629, 3e+38, %v1487
      %v1634 = vsel %vm1626, %v1288, 0.0
      %v1635 = vsel %vm1627, %v1290, 0.0
      %v1636 = vsel %vm1628, %v1292, 0.0
      %v1637 = vsel %vm1629, %v1294, 0.0
      %v1639 = vsel %vm1317, %v1634, 0
      %v1642 = vsel %vm1317, %v1635, 0
      %v1645 = vsel %vm1317, %v1636, 0
      %v1648 = vsel %vm1317, %v1637, 0
      %1650 = vmatprep.subr.mxu0 0.0
      %1651 = vmatpush1.msra.mxu0 %v1088
      %1652 = vmatprep.subr.mxu0 0.0
      %1653 = vmatpush1.msra.mxu0 %v1093
      %1654 = vmatprep.subr.mxu0 0.0
      %1655 = vmatpush1.msra.mxu0 %v1098
      %1656 = vmatprep.subr.mxu0 0.0
      %1657 = vmatpush1.msra.mxu0 %v1103
      %1658 = vmatprep.subr.mxu0 0.0
      %1659 = vmatpush1.msra.mxu0 0.0
      %1660 = vmatprep.subr.mxu0 0.0
      %1661 = vmatpush1.msra.mxu0 0.0
      %1662 = vmatprep.subr.mxu0 0.0
      %1663 = vmatpush1.msra.mxu0 0.0
      %1664 = vmatprep.subr.mxu0 0.0
      %1665 = vmatpush1.msra.mxu0 0.0
      %1666 = vmatprep.subr.mxu0 0.0
      %1667 = vmatpush1.msra.mxu0 0.0
      %1668 = vmatprep.subr.mxu0 0.0
      %1669 = vmatpush1.msra.mxu0 0.0
      %1670 = vmatprep.subr.mxu0 0.0
      %1671 = vmatpush1.msra.mxu0 0.0
      %1672 = vmatprep.subr.mxu0 0.0
      %1673 = vmatpush1.msra.mxu0 0.0
      %1674 = vmatprep.subr.mxu0 0.0
      %1675 = vmatpush1.msra.mxu0 0.0
      %1676 = vmatprep.subr.mxu0 0.0
      %1677 = vmatpush1.msra.mxu0 0.0
      %1678 = vmatprep.subr.mxu0 0.0
      %1679 = vmatpush1.msra.mxu0 0.0
      %1680 = vmatprep.subr.mxu0 0.0
      %1681 = vmatpush1.msra.mxu0 0.0
      %1682 = vmatprep.subr.mxu0 0.0
      %1683 = vmatpush1.msra.mxu0 0.0
      %1684 = vmatprep.subr.mxu0 0.0
      %1685 = vmatpush1.msra.mxu0 0.0
      %1686 = vmatprep.subr.mxu0 0.0
      %1687 = vmatpush1.msra.mxu0 0.0
      %1688 = vmatprep.subr.mxu0 0.0
      %1689 = vmatpush1.msra.mxu0 0.0
      %1690 = vmatprep.subr.mxu0 0.0
      %1691 = vmatpush1.msra.mxu0 0.0
      %1692 = vmatprep.subr.mxu0 0.0
      %1693 = vmatpush1.msra.mxu0 0.0
      %1694 = vmatprep.subr.mxu0 0.0
      %1695 = vmatpush1.msra.mxu0 0.0
      %1696 = vmatprep.subr.mxu0 0.0
      %1697 = vmatpush1.msra.mxu0 0.0
      %1698 = vmatprep.subr.mxu0 0.0
      %1699 = vmatpush1.msra.mxu0 0.0
      %1700 = vmatprep.subr.mxu0 0.0
      %1701 = vmatpush1.msra.mxu0 0.0
      %1702 = vmatprep.subr.mxu0 0.0
      %1703 = vmatpush1.msra.mxu0 0.0
      %1704 = vmatprep.subr.mxu0 0.0
      %1705 = vmatpush1.msra.mxu0 0.0
      %1706 = vmatprep.subr.mxu0 0.0
      %1707 = vmatpush1.msra.mxu0 0.0
      %1708 = vmatprep.subr.mxu0 0.0
      %1709 = vmatpush1.msra.mxu0 0.0
      %1710 = vmatprep.subr.mxu0 0.0
      %1711 = vmatpush1.msra.mxu0 0.0
      %1712 = vmatprep.subr.mxu0 0.0
      %1713 = vmatpush1.msra.mxu0 0.0
      %1714 = vmatprep.mubr.f32.mxu0 0.0
      %1715 = vmatmul.mubr.f32.gmra.mrb[0].mxu0 %v1639
      %v1716 = vpop.f32.mrb[0].mxu0
      %v1717 = vadd.f32 0.0, %v1716
      %v1718 = vpop.f32.mrb[0].mxu0
      %1719 = vmatprep.mubr.f32.mxu0 0.0
      %1720 = vmatmul.mubr.f32.gmra.mrb[0].mxu0 %v1642
      %v1721 = vpop.f32.mrb[0].mxu0
      %v1722 = vadd.f32 0.0, %v1721
      %v1723 = vpop.f32.mrb[0].mxu0
      %1724 = vmatprep.mubr.f32.mxu0 0.0
      %1725 = vmatmul.mubr.f32.gmra.mrb[0].mxu0 %v1645
      %v1726 = vpop.f32.mrb[0].mxu0
      %v1727 = vadd.f32 0.0, %v1726
      %v1728 = vpop.f32.mrb[0].mxu0
      %1729 = vmatprep.mubr.f32.mxu0 0.0
      %1730 = vmatmul.mubr.f32.gmra.mrb[0].mxu0 %v1648
      %v1731 = vpop.f32.mrb[0].mxu0
      %v1732 = vadd.f32 0.0, %v1731
      %v1733 = vpop.f32.mrb[0].mxu0
      %1734 = vdwg.mxu0
      %v1735 = vadd.f32 %v1589, %v1717
      %v1736 = vadd.f32 %v1590, %v1722
      %v1737 = vadd.f32 %v1591, %v1727
      %v1738 = vadd.f32 %v1592, %v1732
      %v1739 = vmax.f32 %v1593, %v1717
      %v1740 = vmax.f32 %v1594, %v1722
      %v1741 = vmax.f32 %v1595, %v1727
      %v1742 = vmax.f32 %v1596, %v1732
      %vm1743 = vcmp.eq.s32.totalorder %v1296, 2
      %v1744 = vsel %vm1743, %v1622, 0
      %v1745 = vsel %vm1743, %v1623, 0
      %v1746 = vsel %vm1743, %v1624, 0
      %v1747 = vsel %vm1743, %v1625, 0
      %v1748 = vadd.s32 %v1602, %v1744
      %v1749 = vadd.s32 %v1603, %v1745
      %v1750 = vadd.s32 %v1604, %v1746
      %v1751 = vadd.s32 %v1605, %v1747
      %v1752 = vsel %vm1317, %v1630, inf
      %1753 = vmin.xlane.f32.xlu0 %v1752
      %v1754 = vpop.xlane.xlu0 %1753
      %v1755 = vsel %vm1317, %v1631, inf
      %1756 = vmin.xlane.f32.xlu0 %v1755
      %v1757 = vpop.xlane.xlu0 %1756
      %v1758 = vsel %vm1317, %v1632, inf
      %1759 = vmin.xlane.f32.xlu0 %v1758
      %v1760 = vpop.xlane.xlu0 %1759
      %v1761 = vsel %vm1317, %v1633, inf
      %1762 = vmin.xlane.f32.xlu0 %v1761
      %v1763 = vpop.xlane.xlu0 %1762
      %v1768 = vand.u32 %v1754, 31
      %v1769 = vand.u32 %v1757, 31
      %v1770 = vand.u32 %v1760, 31
      %v1771 = vand.u32 %v1763, 31
      %vm1772 = vcmp.eq.s32.totalorder %v1296, %v1768
      %vm1773 = vcmp.eq.s32.totalorder %v1296, %v1769
      %vm1774 = vcmp.eq.s32.totalorder %v1296, %v1770
      %vm1775 = vcmp.eq.s32.totalorder %v1296, %v1771
      %v1776 = vsel %vm1772, %v1288, 0.0
      %v1777 = vsel %vm1773, %v1290, 0.0
      %v1778 = vsel %vm1774, %v1292, 0.0
      %v1779 = vsel %vm1775, %v1294, 0.0
      %v1781 = vsel %vm1317, %v1776, 0
      %v1784 = vsel %vm1317, %v1777, 0
      %v1787 = vsel %vm1317, %v1778, 0
      %v1790 = vsel %vm1317, %v1779, 0
      %1792 = vmatprep.subr.mxu0 0.0
      %1793 = vmatpush1.msra.mxu0 %v1088
      %1794 = vmatprep.subr.mxu0 0.0
      %1795 = vmatpush1.msra.mxu0 %v1093
      %1796 = vmatprep.subr.mxu0 0.0
      %1797 = vmatpush1.msra.mxu0 %v1098
      %1798 = vmatprep.subr.mxu0 0.0
      %1799 = vmatpush1.msra.mxu0 %v1103
      %1800 = vmatprep.subr.mxu0 0.0
      %1801 = vmatpush1.msra.mxu0 0.0
      %1802 = vmatprep.subr.mxu0 0.0
      %1803 = vmatpush1.msra.mxu0 0.0
      %1804 = vmatprep.subr.mxu0 0.0
      %1805 = vmatpush1.msra.mxu0 0.0
      %1806 = vmatprep.subr.mxu0 0.0
      %1807 = vmatpush1.msra.mxu0 0.0
      %1808 = vmatprep.subr.mxu0 0.0
      %1809 = vmatpush1.msra.mxu0 0.0
      %1810 = vmatprep.subr.mxu0 0.0
      %1811 = vmatpush1.msra.mxu0 0.0
      %1812 = vmatprep.subr.mxu0 0.0
      %1813 = vmatpush1.msra.mxu0 0.0
      %1814 = vmatprep.subr.mxu0 0.0
      %1815 = vmatpush1.msra.mxu0 0.0
      %1816 = vmatprep.subr.mxu0 0.0
      %1817 = vmatpush1.msra.mxu0 0.0
      %1818 = vmatprep.subr.mxu0 0.0
      %1819 = vmatpush1.msra.mxu0 0.0
      %1820 = vmatprep.subr.mxu0 0.0
      %1821 = vmatpush1.msra.mxu0 0.0
      %1822 = vmatprep.subr.mxu0 0.0
      %1823 = vmatpush1.msra.mxu0 0.0
      %1824 = vmatprep.subr.mxu0 0.0
      %1825 = vmatpush1.msra.mxu0 0.0
      %1826 = vmatprep.subr.mxu0 0.0
      %1827 = vmatpush1.msra.mxu0 0.0
      %1828 = vmatprep.subr.mxu0 0.0
      %1829 = vmatpush1.msra.mxu0 0.0
      %1830 = vmatprep.subr.mxu0 0.0
      %1831 = vmatpush1.msra.mxu0 0.0
      %1832 = vmatprep.subr.mxu0 0.0
      %1833 = vmatpush1.msra.mxu0 0.0
      %1834 = vmatprep.subr.mxu0 0.0
      %1835 = vmatpush1.msra.mxu0 0.0
      %1836 = vmatprep.subr.mxu0 0.0
      %1837 = vmatpush1.msra.mxu0 0.0
      %1838 = vmatprep.subr.mxu0 0.0
      %1839 = vmatpush1.msra.mxu0 0.0
      %1840 = vmatprep.subr.mxu0 0.0
      %1841 = vmatpush1.msra.mxu0 0.0
      %1842 = vmatprep.subr.mxu0 0.0
      %1843 = vmatpush1.msra.mxu0 0.0
      %1844 = vmatprep.subr.mxu0 0.0
      %1845 = vmatpush1.msra.mxu0 0.0
      %1846 = vmatprep.subr.mxu0 0.0
      %1847 = vmatpush1.msra.mxu0 0.0
      %1848 = vmatprep.subr.mxu0 0.0
      %1849 = vmatpush1.msra.mxu0 0.0
      %1850 = vmatprep.subr.mxu0 0.0
      %1851 = vmatpush1.msra.mxu0 0.0
      %1852 = vmatprep.subr.mxu0 0.0
      %1853 = vmatpush1.msra.mxu0 0.0
      %1854 = vmatprep.subr.mxu0 0.0
      %1855 = vmatpush1.msra.mxu0 0.0
      %1856 = vmatprep.mubr.f32.mxu0 0.0
      %1857 = vmatmul.mubr.f32.gmra.mrb[0].mxu0 %v1781
      %v1858 = vpop.f32.mrb[0].mxu0
      %v1859 = vadd.f32 0.0, %v1858
      %v1860 = vpop.f32.mrb[0].mxu0
      %1861 = vmatprep.mubr.f32.mxu0 0.0
      %1862 = vmatmul.mubr.f32.gmra.mrb[0].mxu0 %v1784
      %v1863 = vpop.f32.mrb[0].mxu0
      %v1864 = vadd.f32 0.0, %v1863
      %v1865 = vpop.f32.mrb[0].mxu0
      %1866 = vmatprep.mubr.f32.mxu0 0.0
      %1867 = vmatmul.mubr.f32.gmra.mrb[0].mxu0 %v1787
      %v1868 = vpop.f32.mrb[0].mxu0
      %v1869 = vadd.f32 0.0, %v1868
      %v1870 = vpop.f32.mrb[0].mxu0
      %1871 = vmatprep.mubr.f32.mxu0 0.0
      %1872 = vmatmul.mubr.f32.gmra.mrb[0].mxu0 %v1790
      %v1873 = vpop.f32.mrb[0].mxu0
      %v1874 = vadd.f32 0.0, %v1873
      %v1875 = vpop.f32.mrb[0].mxu0
      %1876 = vdwg.mxu0
      %v1877 = vadd.f32 %v1735, %v1859
      %v1878 = vadd.f32 %v1736, %v1864
      %v1879 = vadd.f32 %v1737, %v1869
      %v1880 = vadd.f32 %v1738, %v1874
      %v1881 = vmax.f32 %v1739, %v1859
      %v1882 = vmax.f32 %v1740, %v1864
      %v1883 = vmax.f32 %v1741, %v1869
      %v1884 = vmax.f32 %v1742, %v1874
      %vm1885 = vcmp.eq.s32.totalorder %v1296, 3
      %v1886 = vsel %vm1885, %v1768, 0
      %v1887 = vsel %vm1885, %v1769, 0
      %v1888 = vsel %vm1885, %v1770, 0
      %v1889 = vsel %vm1885, %v1771, 0
      %v1890 = vadd.s32 %v1748, %v1886
      %v1891 = vadd.s32 %v1749, %v1887
      %v1892 = vadd.s32 %v1750, %v1888
      %v1893 = vadd.s32 %v1751, %v1889
      %v1894 = vmul.f32 %v1877, 0.25
      %v1895 = vmul.f32 %v1878, 0.25
      %v1896 = vmul.f32 %v1879, 0.25
      %v1897 = vmul.f32 %v1880, 0.25
      %v1898 = vld [vmem:[%s11] sm:$0xff]
      %v1899 = vld [vmem:[%s11 + $0x8] sm:$0xff]
      %v1900 = vld [vmem:[%s12] sm:$0xff]
      %v1901 = vld [vmem:[%s12 + $0x8] sm:$0xff]
      %vm1902 = vcmask 130048
      %v1904 = vsel %vm1902, %v1881, 0
      %v1907 = vsel %vm1902, %v1882, 0
      %v1910 = vsel %vm1902, %v1883, 0
      %v1913 = vsel %vm1902, %v1884, 0
      %1915 = vmatprep.subr.mxu0 0.0
      %1916 = vmatpush1.msra.mxu0 %v1900
      %1917 = vmatprep.subr.mxu0 0.0
      %1918 = vmatpush1.msra.mxu0 %v1901
      %1919 = vmatprep.subr.mxu0 0.0
      %1920 = vmatpush1.msra.mxu0 0.0
      %1921 = vmatprep.subr.mxu0 0.0
      %1922 = vmatpush1.msra.mxu0 0.0
      %1923 = vmatprep.subr.mxu0 0.0
      %1924 = vmatpush1.msra.mxu0 0.0
      %1925 = vmatprep.subr.mxu0 0.0
      %1926 = vmatpush1.msra.mxu0 0.0
      %1927 = vmatprep.subr.mxu0 0.0
      %1928 = vmatpush1.msra.mxu0 0.0
      %1929 = vmatprep.subr.mxu0 0.0
      %1930 = vmatpush1.msra.mxu0 0.0
      %1931 = vmatprep.subr.mxu0 0.0
      %1932 = vmatpush1.msra.mxu0 0.0
      %1933 = vmatprep.subr.mxu0 0.0
      %1934 = vmatpush1.msra.mxu0 0.0
      %1935 = vmatprep.subr.mxu0 0.0
      %1936 = vmatpush1.msra.mxu0 0.0
      %1937 = vmatprep.subr.mxu0 0.0
      %1938 = vmatpush1.msra.mxu0 0.0
      %1939 = vmatprep.subr.mxu0 0.0
      %1940 = vmatpush1.msra.mxu0 0.0
      %1941 = vmatprep.subr.mxu0 0.0
      %1942 = vmatpush1.msra.mxu0 0.0
      %1943 = vmatprep.subr.mxu0 0.0
      %1944 = vmatpush1.msra.mxu0 0.0
      %1945 = vmatprep.subr.mxu0 0.0
      %1946 = vmatpush1.msra.mxu0 0.0
      %1947 = vmatprep.subr.mxu0 0.0
      %1948 = vmatpush1.msra.mxu0 0.0
      %1949 = vmatprep.subr.mxu0 0.0
      %1950 = vmatpush1.msra.mxu0 0.0
      %1951 = vmatprep.subr.mxu0 0.0
      %1952 = vmatpush1.msra.mxu0 0.0
      %1953 = vmatprep.subr.mxu0 0.0
      %1954 = vmatpush1.msra.mxu0 0.0
      %1955 = vmatprep.subr.mxu0 0.0
      %1956 = vmatpush1.msra.mxu0 0.0
      %1957 = vmatprep.subr.mxu0 0.0
      %1958 = vmatpush1.msra.mxu0 0.0
      %1959 = vmatprep.subr.mxu0 0.0
      %1960 = vmatpush1.msra.mxu0 0.0
      %1961 = vmatprep.subr.mxu0 0.0
      %1962 = vmatpush1.msra.mxu0 0.0
      %1963 = vmatprep.subr.mxu0 0.0
      %1964 = vmatpush1.msra.mxu0 0.0
      %1965 = vmatprep.subr.mxu0 0.0
      %1966 = vmatpush1.msra.mxu0 0.0
      %1967 = vmatprep.subr.mxu0 0.0
      %1968 = vmatpush1.msra.mxu0 0.0
      %1969 = vmatprep.subr.mxu0 0.0
      %1970 = vmatpush1.msra.mxu0 0.0
      %1971 = vmatprep.subr.mxu0 0.0
      %1972 = vmatpush1.msra.mxu0 0.0
      %1973 = vmatprep.subr.mxu0 0.0
      %1974 = vmatpush1.msra.mxu0 0.0
      %1975 = vmatprep.subr.mxu0 0.0
      %1976 = vmatpush1.msra.mxu0 0.0
      %1977 = vmatprep.subr.mxu0 0.0
      %1978 = vmatpush1.msra.mxu0 0.0
      %1979 = vmatprep.mubr.f32.mxu0 0.0
      %1980 = vmatmul.mubr.f32.gmra.mrb[0].mxu0 %v1904
      %v1981 = vpop.f32.mrb[0].mxu0
      %v1982 = vadd.f32 0.0, %v1981
      %v1983 = vpop.f32.mrb[0].mxu0
      %1984 = vmatprep.mubr.f32.mxu0 0.0
      %1985 = vmatmul.mubr.f32.gmra.mrb[0].mxu0 %v1907
      %v1986 = vpop.f32.mrb[0].mxu0
      %v1987 = vadd.f32 0.0, %v1986
      %v1988 = vpop.f32.mrb[0].mxu0
      %1989 = vmatprep.mubr.f32.mxu0 0.0
      %1990 = vmatmul.mubr.f32.gmra.mrb[0].mxu0 %v1910
      %v1991 = vpop.f32.mrb[0].mxu0
      %v1992 = vadd.f32 0.0, %v1991
      %v1993 = vpop.f32.mrb[0].mxu0
      %1994 = vmatprep.mubr.f32.mxu0 0.0
      %1995 = vmatmul.mubr.f32.gmra.mrb[0].mxu0 %v1913
      %v1996 = vpop.f32.mrb[0].mxu0
      %v1997 = vadd.f32 0.0, %v1996
      %v1998 = vpop.f32.mrb[0].mxu0
      %1999 = vdwg.mxu0
      %v2001 = vsel %vm1902, %v1894, 0
      %v2004 = vsel %vm1902, %v1895, 0
      %v2007 = vsel %vm1902, %v1896, 0
      %v2010 = vsel %vm1902, %v1897, 0
      %2012 = vmatprep.subr.mxu0 0.0
      %2013 = vmatpush1.msra.mxu0 %v1898
      %2014 = vmatprep.subr.mxu0 0.0
      %2015 = vmatpush1.msra.mxu0 %v1899
      %2016 = vmatprep.subr.mxu0 0.0
      %2017 = vmatpush1.msra.mxu0 0.0
      %2018 = vmatprep.subr.mxu0 0.0
      %2019 = vmatpush1.msra.mxu0 0.0
      %2020 = vmatprep.subr.mxu0 0.0
      %2021 = vmatpush1.msra.mxu0 0.0
      %2022 = vmatprep.subr.mxu0 0.0
      %2023 = vmatpush1.msra.mxu0 0.0
      %2024 = vmatprep.subr.mxu0 0.0
      %2025 = vmatpush1.msra.mxu0 0.0
      %2026 = vmatprep.subr.mxu0 0.0
      %2027 = vmatpush1.msra.mxu0 0.0
      %2028 = vmatprep.subr.mxu0 0.0
      %2029 = vmatpush1.msra.mxu0 0.0
      %2030 = vmatprep.subr.mxu0 0.0
      %2031 = vmatpush1.msra.mxu0 0.0
      %2032 = vmatprep.subr.mxu0 0.0
      %2033 = vmatpush1.msra.mxu0 0.0
      %2034 = vmatprep.subr.mxu0 0.0
      %2035 = vmatpush1.msra.mxu0 0.0
      %2036 = vmatprep.subr.mxu0 0.0
      %2037 = vmatpush1.msra.mxu0 0.0
      %2038 = vmatprep.subr.mxu0 0.0
      %2039 = vmatpush1.msra.mxu0 0.0
      %2040 = vmatprep.subr.mxu0 0.0
      %2041 = vmatpush1.msra.mxu0 0.0
      %2042 = vmatprep.subr.mxu0 0.0
      %2043 = vmatpush1.msra.mxu0 0.0
      %2044 = vmatprep.subr.mxu0 0.0
      %2045 = vmatpush1.msra.mxu0 0.0
      %2046 = vmatprep.subr.mxu0 0.0
      %2047 = vmatpush1.msra.mxu0 0.0
      %2048 = vmatprep.subr.mxu0 0.0
      %2049 = vmatpush1.msra.mxu0 0.0
      %2050 = vmatprep.subr.mxu0 0.0
      %2051 = vmatpush1.msra.mxu0 0.0
      %2052 = vmatprep.subr.mxu0 0.0
      %2053 = vmatpush1.msra.mxu0 0.0
      %2054 = vmatprep.subr.mxu0 0.0
      %2055 = vmatpush1.msra.mxu0 0.0
      %2056 = vmatprep.subr.mxu0 0.0
      %2057 = vmatpush1.msra.mxu0 0.0
      %2058 = vmatprep.subr.mxu0 0.0
      %2059 = vmatpush1.msra.mxu0 0.0
      %2060 = vmatprep.subr.mxu0 0.0
      %2061 = vmatpush1.msra.mxu0 0.0
      %2062 = vmatprep.subr.mxu0 0.0
      %2063 = vmatpush1.msra.mxu0 0.0
      %2064 = vmatprep.subr.mxu0 0.0
      %2065 = vmatpush1.msra.mxu0 0.0
      %2066 = vmatprep.subr.mxu0 0.0
      %2067 = vmatpush1.msra.mxu0 0.0
      %2068 = vmatprep.subr.mxu0 0.0
      %2069 = vmatpush1.msra.mxu0 0.0
      %2070 = vmatprep.subr.mxu0 0.0
      %2071 = vmatpush1.msra.mxu0 0.0
      %2072 = vmatprep.subr.mxu0 0.0
      %2073 = vmatpush1.msra.mxu0 0.0
      %2074 = vmatprep.subr.mxu0 0.0
      %2075 = vmatpush1.msra.mxu0 0.0
      %2076 = vmatprep.mubr.f32.mxu0 0.0
      %2077 = vmatmul.mubr.f32.gmra.mrb[0].mxu0 %v2001
      %v2078 = vpop.f32.mrb[0].mxu0
      %v2079 = vadd.f32 %v1982, %v2078
      %v2080 = vpop.f32.mrb[0].mxu0
      %2081 = vmatprep.mubr.f32.mxu0 0.0
      %2082 = vmatmul.mubr.f32.gmra.mrb[0].mxu0 %v2004
      %v2083 = vpop.f32.mrb[0].mxu0
      %v2084 = vadd.f32 %v1987, %v2083
      %v2085 = vpop.f32.mrb[0].mxu0
      %2086 = vmatprep.mubr.f32.mxu0 0.0
      %2087 = vmatmul.mubr.f32.gmra.mrb[0].mxu0 %v2007
      %v2088 = vpop.f32.mrb[0].mxu0
      %v2089 = vadd.f32 %v1992, %v2088
      %v2090 = vpop.f32.mrb[0].mxu0
      %2091 = vmatprep.mubr.f32.mxu0 0.0
      %2092 = vmatmul.mubr.f32.gmra.mrb[0].mxu0 %v2010
      %v2093 = vpop.f32.mrb[0].mxu0
      %v2094 = vadd.f32 %v1997, %v2093
      %v2095 = vpop.f32.mrb[0].mxu0
      %2096 = vdwg.mxu0
      %v2097 = vld [vmem:[%s13] sm:$0x1]
      %v2099 = vlaneseq
      %v2100 = vshrl.u32 %v2099, 7
      %v2101 = vsub.s32 0, %v2100
      %v2102 = vrot.slane %v2097, %v2101
      %v2104 = vadd.f32 %v2079, %v2102
      %v2105 = vadd.f32 %v2084, %v2102
      %v2106 = vadd.f32 %v2089, %v2102
      %v2107 = vadd.f32 %v2094, %v2102
      %v2108 = vld [vmem:[%s14] sm:$0xff]
      %v2109 = vld [vmem:[%s14 + $0x8] sm:$0xff]
      %v2110 = vld [vmem:[%s14 + $0x10] sm:$0xff]
      %v2111 = vld [vmem:[%s14 + $0x18] sm:$0xff]
      %v2112 = vld [vmem:[%s15] sm:$0x7]
      %v2114 = vsel %vm1144, %v2112, 0
      %2116 = vmatprep.subr.mxu0 0.0
      %2117 = vmatpush1.msra.mxu0 %v2114
      %2118 = vmatprep.subr.mxu0 0.0
      %2119 = vmatpush1.msra.mxu0 0.0
      %2120 = vmatprep.subr.mxu0 0.0
      %2121 = vmatpush1.msra.mxu0 0.0
      %2122 = vmatprep.subr.mxu0 0.0
      %2123 = vmatpush1.msra.mxu0 0.0
      %2124 = vmatprep.subr.mxu0 0.0
      %2125 = vmatpush1.msra.mxu0 0.0
      %2126 = vmatprep.subr.mxu0 0.0
      %2127 = vmatpush1.msra.mxu0 0.0
      %2128 = vmatprep.subr.mxu0 0.0
      %2129 = vmatpush1.msra.mxu0 0.0
      %2130 = vmatprep.subr.mxu0 0.0
      %2131 = vmatpush1.msra.mxu0 0.0
      %2132 = vmatprep.subr.mxu0 0.0
      %2133 = vmatpush1.msra.mxu0 0.0
      %2134 = vmatprep.subr.mxu0 0.0
      %2135 = vmatpush1.msra.mxu0 0.0
      %2136 = vmatprep.subr.mxu0 0.0
      %2137 = vmatpush1.msra.mxu0 0.0
      %2138 = vmatprep.subr.mxu0 0.0
      %2139 = vmatpush1.msra.mxu0 0.0
      %2140 = vmatprep.subr.mxu0 0.0
      %2141 = vmatpush1.msra.mxu0 0.0
      %2142 = vmatprep.subr.mxu0 0.0
      %2143 = vmatpush1.msra.mxu0 0.0
      %2144 = vmatprep.subr.mxu0 0.0
      %2145 = vmatpush1.msra.mxu0 0.0
      %2146 = vmatprep.subr.mxu0 0.0
      %2147 = vmatpush1.msra.mxu0 0.0
      %2148 = vmatprep.subr.mxu0 0.0
      %2149 = vmatpush1.msra.mxu0 0.0
      %2150 = vmatprep.subr.mxu0 0.0
      %2151 = vmatpush1.msra.mxu0 0.0
      %2152 = vmatprep.subr.mxu0 0.0
      %2153 = vmatpush1.msra.mxu0 0.0
      %2154 = vmatprep.subr.mxu0 0.0
      %2155 = vmatpush1.msra.mxu0 0.0
      %2156 = vmatprep.subr.mxu0 0.0
      %2157 = vmatpush1.msra.mxu0 0.0
      %2158 = vmatprep.subr.mxu0 0.0
      %2159 = vmatpush1.msra.mxu0 0.0
      %2160 = vmatprep.subr.mxu0 0.0
      %2161 = vmatpush1.msra.mxu0 0.0
      %2162 = vmatprep.subr.mxu0 0.0
      %2163 = vmatpush1.msra.mxu0 0.0
      %2164 = vmatprep.subr.mxu0 0.0
      %2165 = vmatpush1.msra.mxu0 0.0
      %2166 = vmatprep.subr.mxu0 0.0
      %2167 = vmatpush1.msra.mxu0 0.0
      %2168 = vmatprep.subr.mxu0 0.0
      %2169 = vmatpush1.msra.mxu0 0.0
      %2170 = vmatprep.subr.mxu0 0.0
      %2171 = vmatpush1.msra.mxu0 0.0
      %2172 = vmatprep.subr.mxu0 0.0
      %2173 = vmatpush1.msra.mxu0 0.0
      %2174 = vmatprep.subr.mxu0 0.0
      %2175 = vmatpush1.msra.mxu0 0.0
      %2176 = vmatprep.subr.mxu0 0.0
      %2177 = vmatpush1.msra.mxu0 0.0
      %2178 = vmatprep.subr.mxu0 0.0
      %2179 = vmatpush1.msra.mxu0 0.0
      %2180 = vmatprep.mubr.f32.mxu0 0.0
      %2181 = vmatmul.mubr.f32.gmra.mrb[0].mxu0 %v1133
      %v2182 = vpop.f32.mrb[0].mxu0
      %v2183 = vadd.f32 0.0, %v2182
      %v2184 = vpop.f32.mrb[0].mxu0
      %2185 = vmatprep.mubr.f32.mxu0 0.0
      %2186 = vmatmul.mubr.f32.gmra.mrb[0].mxu0 %v1136
      %v2187 = vpop.f32.mrb[0].mxu0
      %v2188 = vadd.f32 0.0, %v2187
      %v2189 = vpop.f32.mrb[0].mxu0
      %2190 = vmatprep.mubr.f32.mxu0 0.0
      %2191 = vmatmul.mubr.f32.gmra.mrb[0].mxu0 %v1139
      %v2192 = vpop.f32.mrb[0].mxu0
      %v2193 = vadd.f32 0.0, %v2192
      %v2194 = vpop.f32.mrb[0].mxu0
      %2195 = vmatprep.mubr.f32.mxu0 0.0
      %2196 = vmatmul.mubr.f32.gmra.mrb[0].mxu0 %v1142
      %v2197 = vpop.f32.mrb[0].mxu0
      %v2198 = vadd.f32 0.0, %v2197
      %v2199 = vpop.f32.mrb[0].mxu0
      %2200 = vdwg.mxu0
      %v2202 = vsel %vm1317, %v2104, 0
      %v2205 = vsel %vm1317, %v2105, 0
      %v2208 = vsel %vm1317, %v2106, 0
      %v2211 = vsel %vm1317, %v2107, 0
      %2213 = vmatprep.subr.mxu0 0.0
      %2214 = vmatpush1.msra.mxu0 %v2108
      %2215 = vmatprep.subr.mxu0 0.0
      %2216 = vmatpush1.msra.mxu0 %v2109
      %2217 = vmatprep.subr.mxu0 0.0
      %2218 = vmatpush1.msra.mxu0 %v2110
      %2219 = vmatprep.subr.mxu0 0.0
      %2220 = vmatpush1.msra.mxu0 %v2111
      %2221 = vmatprep.subr.mxu0 0.0
      %2222 = vmatpush1.msra.mxu0 0.0
      %2223 = vmatprep.subr.mxu0 0.0
      %2224 = vmatpush1.msra.mxu0 0.0
      %2225 = vmatprep.subr.mxu0 0.0
      %2226 = vmatpush1.msra.mxu0 0.0
      %2227 = vmatprep.subr.mxu0 0.0
      %2228 = vmatpush1.msra.mxu0 0.0
      %2229 = vmatprep.subr.mxu0 0.0
      %2230 = vmatpush1.msra.mxu0 0.0
      %2231 = vmatprep.subr.mxu0 0.0
      %2232 = vmatpush1.msra.mxu0 0.0
      %2233 = vmatprep.subr.mxu0 0.0
      %2234 = vmatpush1.msra.mxu0 0.0
      %2235 = vmatprep.subr.mxu0 0.0
      %2236 = vmatpush1.msra.mxu0 0.0
      %2237 = vmatprep.subr.mxu0 0.0
      %2238 = vmatpush1.msra.mxu0 0.0
      %2239 = vmatprep.subr.mxu0 0.0
      %2240 = vmatpush1.msra.mxu0 0.0
      %2241 = vmatprep.subr.mxu0 0.0
      %2242 = vmatpush1.msra.mxu0 0.0
      %2243 = vmatprep.subr.mxu0 0.0
      %2244 = vmatpush1.msra.mxu0 0.0
      %2245 = vmatprep.subr.mxu0 0.0
      %2246 = vmatpush1.msra.mxu0 0.0
      %2247 = vmatprep.subr.mxu0 0.0
      %2248 = vmatpush1.msra.mxu0 0.0
      %2249 = vmatprep.subr.mxu0 0.0
      %2250 = vmatpush1.msra.mxu0 0.0
      %2251 = vmatprep.subr.mxu0 0.0
      %2252 = vmatpush1.msra.mxu0 0.0
      %2253 = vmatprep.subr.mxu0 0.0
      %2254 = vmatpush1.msra.mxu0 0.0
      %2255 = vmatprep.subr.mxu0 0.0
      %2256 = vmatpush1.msra.mxu0 0.0
      %2257 = vmatprep.subr.mxu0 0.0
      %2258 = vmatpush1.msra.mxu0 0.0
      %2259 = vmatprep.subr.mxu0 0.0
      %2260 = vmatpush1.msra.mxu0 0.0
      %2261 = vmatprep.subr.mxu0 0.0
      %2262 = vmatpush1.msra.mxu0 0.0
      %2263 = vmatprep.subr.mxu0 0.0
      %2264 = vmatpush1.msra.mxu0 0.0
      %2265 = vmatprep.subr.mxu0 0.0
      %2266 = vmatpush1.msra.mxu0 0.0
      %2267 = vmatprep.subr.mxu0 0.0
      %2268 = vmatpush1.msra.mxu0 0.0
      %2269 = vmatprep.subr.mxu0 0.0
      %2270 = vmatpush1.msra.mxu0 0.0
      %2271 = vmatprep.subr.mxu0 0.0
      %2272 = vmatpush1.msra.mxu0 0.0
      %2273 = vmatprep.subr.mxu0 0.0
      %2274 = vmatpush1.msra.mxu0 0.0
      %2275 = vmatprep.subr.mxu0 0.0
      %2276 = vmatpush1.msra.mxu0 0.0
      %2277 = vmatprep.mubr.f32.mxu0 0.0
      %2278 = vmatmul.mubr.f32.gmra.mrb[0].mxu0 %v2202
      %v2279 = vpop.f32.mrb[0].mxu0
      %v2280 = vadd.f32 %v2183, %v2279
      %v2281 = vpop.f32.mrb[0].mxu0
      %2282 = vmatprep.mubr.f32.mxu0 0.0
      %2283 = vmatmul.mubr.f32.gmra.mrb[0].mxu0 %v2205
      %v2284 = vpop.f32.mrb[0].mxu0
      %v2285 = vadd.f32 %v2188, %v2284
      %v2286 = vpop.f32.mrb[0].mxu0
      %2287 = vmatprep.mubr.f32.mxu0 0.0
      %2288 = vmatmul.mubr.f32.gmra.mrb[0].mxu0 %v2208
      %v2289 = vpop.f32.mrb[0].mxu0
      %v2290 = vadd.f32 %v2193, %v2289
      %v2291 = vpop.f32.mrb[0].mxu0
      %2292 = vmatprep.mubr.f32.mxu0 0.0
      %2293 = vmatmul.mubr.f32.gmra.mrb[0].mxu0 %v2211
      %v2294 = vpop.f32.mrb[0].mxu0
      %v2295 = vadd.f32 %v2198, %v2294
      %v2296 = vpop.f32.mrb[0].mxu0
      %2297 = vdwg.mxu0
      %v2298 = vld [vmem:[%s16] sm:$0x1]
      %v2300 = vlaneseq
      %v2301 = vshrl.u32 %v2300, 7
      %v2302 = vsub.s32 0, %v2301
      %v2303 = vrot.slane %v2298, %v2302
      %v2305 = vadd.f32 %v2280, %v2303
      %v2306 = vadd.f32 %v2285, %v2303
      %v2307 = vadd.f32 %v2290, %v2303
      %v2308 = vadd.f32 %v2295, %v2303
      %vm2309 = vcmp.gt.f32.partialorder %v2305, 0.0
      %vm2310 = vcmp.gt.f32.partialorder %v2306, 0.0
      %vm2311 = vcmp.gt.f32.partialorder %v2307, 0.0
      %vm2312 = vcmp.gt.f32.partialorder %v2308, 0.0
      %v2313 = vmin.f32 %v2305, 0.0
      %v2314 = vmin.f32 %v2306, 0.0
      %v2315 = vmin.f32 %v2307, 0.0
      %v2316 = vmin.f32 %v2308, 0.0
      %v2317 = vmul.f32 %v2313, 1.442695
      %v2318 = vpow.pop %v2317
      %v2319 = vmul.f32 %v2314, 1.442695
      %v2320 = vpow.pop %v2319
      %v2321 = vmul.f32 %v2315, 1.442695
      %v2322 = vpow.pop %v2321
      %v2323 = vmul.f32 %v2316, 1.442695
      %v2324 = vpow.pop %v2323
      %v2325 = vsub.f32 %v2318, 1.0
      %v2326 = vsub.f32 %v2320, 1.0
      %v2327 = vsub.f32 %v2322, 1.0
      %v2328 = vsub.f32 %v2324, 1.0
      %v2329 = vsel %vm2309, %v2305, %v2325
      %v2330 = vsel %vm2310, %v2306, %v2326
      %v2331 = vsel %vm2311, %v2307, %v2327
      %v2332 = vsel %vm2312, %v2308, %v2328
      %v2333 = vld [vmem:[%s17] sm:$0xff]
      %v2334 = vld [vmem:[%s18] sm:$0x1]
      %v2336 = vlaneseq
      %v2337 = vshrl.u32 %v2336, 7
      %v2338 = vsub.s32 0, %v2337
      %v2339 = vrot.slane %v2334, %v2338
      %v2342 = vsel %vm835, %v2329, 0
      %v2345 = vsel %vm835, %v2330, 0
      %v2348 = vsel %vm835, %v2331, 0
      %v2351 = vsel %vm835, %v2332, 0
      %2353 = vmatprep.subr.mxu0 0.0
      %2354 = vmatpush1.msra.mxu0 %v2333
      %2355 = vmatprep.subr.mxu0 0.0
      %2356 = vmatpush1.msra.mxu0 0.0
      %2357 = vmatprep.subr.mxu0 0.0
      %2358 = vmatpush1.msra.mxu0 0.0
      %2359 = vmatprep.subr.mxu0 0.0
      %2360 = vmatpush1.msra.mxu0 0.0
      %2361 = vmatprep.subr.mxu0 0.0
      %2362 = vmatpush1.msra.mxu0 0.0
      %2363 = vmatprep.subr.mxu0 0.0
      %2364 = vmatpush1.msra.mxu0 0.0
      %2365 = vmatprep.subr.mxu0 0.0
      %2366 = vmatpush1.msra.mxu0 0.0
      %2367 = vmatprep.subr.mxu0 0.0
      %2368 = vmatpush1.msra.mxu0 0.0
      %2369 = vmatprep.subr.mxu0 0.0
      %2370 = vmatpush1.msra.mxu0 0.0
      %2371 = vmatprep.subr.mxu0 0.0
      %2372 = vmatpush1.msra.mxu0 0.0
      %2373 = vmatprep.subr.mxu0 0.0
      %2374 = vmatpush1.msra.mxu0 0.0
      %2375 = vmatprep.subr.mxu0 0.0
      %2376 = vmatpush1.msra.mxu0 0.0
      %2377 = vmatprep.subr.mxu0 0.0
      %2378 = vmatpush1.msra.mxu0 0.0
      %2379 = vmatprep.subr.mxu0 0.0
      %2380 = vmatpush1.msra.mxu0 0.0
      %2381 = vmatprep.subr.mxu0 0.0
      %2382 = vmatpush1.msra.mxu0 0.0
      %2383 = vmatprep.subr.mxu0 0.0
      %2384 = vmatpush1.msra.mxu0 0.0
      %2385 = vmatprep.subr.mxu0 0.0
      %2386 = vmatpush1.msra.mxu0 0.0
      %2387 = vmatprep.subr.mxu0 0.0
      %2388 = vmatpush1.msra.mxu0 0.0
      %2389 = vmatprep.subr.mxu0 0.0
      %2390 = vmatpush1.msra.mxu0 0.0
      %2391 = vmatprep.subr.mxu0 0.0
      %2392 = vmatpush1.msra.mxu0 0.0
      %2393 = vmatprep.subr.mxu0 0.0
      %2394 = vmatpush1.msra.mxu0 0.0
      %2395 = vmatprep.subr.mxu0 0.0
      %2396 = vmatpush1.msra.mxu0 0.0
      %2397 = vmatprep.subr.mxu0 0.0
      %2398 = vmatpush1.msra.mxu0 0.0
      %2399 = vmatprep.subr.mxu0 0.0
      %2400 = vmatpush1.msra.mxu0 0.0
      %2401 = vmatprep.subr.mxu0 0.0
      %2402 = vmatpush1.msra.mxu0 0.0
      %2403 = vmatprep.subr.mxu0 0.0
      %2404 = vmatpush1.msra.mxu0 0.0
      %2405 = vmatprep.subr.mxu0 0.0
      %2406 = vmatpush1.msra.mxu0 0.0
      %2407 = vmatprep.subr.mxu0 0.0
      %2408 = vmatpush1.msra.mxu0 0.0
      %2409 = vmatprep.subr.mxu0 0.0
      %2410 = vmatpush1.msra.mxu0 0.0
      %2411 = vmatprep.subr.mxu0 0.0
      %2412 = vmatpush1.msra.mxu0 0.0
      %2413 = vmatprep.subr.mxu0 0.0
      %2414 = vmatpush1.msra.mxu0 0.0
      %2415 = vmatprep.subr.mxu0 0.0
      %2416 = vmatpush1.msra.mxu0 0.0
      %2417 = vmatprep.mubr.f32.mxu0 0.0
      %2418 = vmatmul.mubr.f32.gmra.mrb[0].mxu0 %v2342
      %v2419 = vpop.f32.mrb[0].mxu0
      %v2420 = vadd.f32 %v2339, %v2419
      %v2421 = vpop.f32.mrb[0].mxu0
      %2422 = vmatprep.mubr.f32.mxu0 0.0
      %2423 = vmatmul.mubr.f32.gmra.mrb[0].mxu0 %v2345
      %v2424 = vpop.f32.mrb[0].mxu0
      %v2425 = vadd.f32 %v2339, %v2424
      %v2426 = vpop.f32.mrb[0].mxu0
      %2427 = vmatprep.mubr.f32.mxu0 0.0
      %2428 = vmatmul.mubr.f32.gmra.mrb[0].mxu0 %v2348
      %v2429 = vpop.f32.mrb[0].mxu0
      %v2430 = vadd.f32 %v2339, %v2429
      %v2431 = vpop.f32.mrb[0].mxu0
      %2432 = vmatprep.mubr.f32.mxu0 0.0
      %2433 = vmatmul.mubr.f32.gmra.mrb[0].mxu0 %v2351
      %v2434 = vpop.f32.mrb[0].mxu0
      %v2435 = vadd.f32 %v2339, %v2434
      %v2436 = vpop.f32.mrb[0].mxu0
      %2437 = vdwg.mxu0
      %vm2438 = vcmp.gt.f32.partialorder %v2420, 0.0
      %vm2439 = vcmp.gt.f32.partialorder %v2425, 0.0
      %vm2440 = vcmp.gt.f32.partialorder %v2430, 0.0
      %vm2441 = vcmp.gt.f32.partialorder %v2435, 0.0
      %v2442 = vmin.f32 %v2420, 0.0
      %v2443 = vmin.f32 %v2425, 0.0
      %v2444 = vmin.f32 %v2430, 0.0
      %v2445 = vmin.f32 %v2435, 0.0
      %v2446 = vmul.f32 %v2442, 1.442695
      %v2447 = vpow.pop %v2446
      %v2448 = vmul.f32 %v2443, 1.442695
      %v2449 = vpow.pop %v2448
      %v2450 = vmul.f32 %v2444, 1.442695
      %v2451 = vpow.pop %v2450
      %v2452 = vmul.f32 %v2445, 1.442695
      %v2453 = vpow.pop %v2452
      %v2454 = vsub.f32 %v2447, 1.0
      %v2455 = vsub.f32 %v2449, 1.0
      %v2456 = vsub.f32 %v2451, 1.0
      %v2457 = vsub.f32 %v2453, 1.0
      %v2458 = vsel %vm2438, %v2420, %v2454
      %v2459 = vsel %vm2439, %v2425, %v2455
      %v2460 = vsel %vm2440, %v2430, %v2456
      %v2461 = vsel %vm2441, %v2435, %v2457
      %v2462 = vcvt.s32.f32 %v1296
      %vm2463 = vcmp.eq.f32.partialorder %v822, %v2462
      %vm2464 = vcmp.eq.f32.partialorder %v823, %v2462
      %vm2465 = vcmp.eq.f32.partialorder %v824, %v2462
      %vm2466 = vcmp.eq.f32.partialorder %v825, %v2462
      %v2467 = vsel %vm2463, 1.0, 0.0
      %v2468 = vsel %vm2464, 1.0, 0.0
      %v2469 = vsel %vm2465, 1.0, 0.0
      %v2470 = vsel %vm2466, 1.0, 0.0
      %2471 = vxpose.xlu0.b32.start [1/16] %v2467, 128
      %2472 = vxpose.xlu0.b32.cont [2/16] %v2468, 128
      %2473 = vxpose.xlu0.b32.cont [3/16] %v2469, 128
      %2474 = vxpose.xlu0.b32.cont [4/16] %v2470, 128
      %2475 = vxpose.xlu0.b32.cont [5/16] 0.0, 128
      %2476 = vxpose.xlu0.b32.cont [6/16] 0.0, 128
      %2477 = vxpose.xlu0.b32.cont [7/16] 0.0, 128
      %2478 = vxpose.xlu0.b32.cont [8/16] 0.0, 128
      %2479 = vxpose.xlu0.b32.cont [9/16] 0.0, 128
      %2480 = vxpose.xlu0.b32.cont [10/16] 0.0, 128
      %2481 = vxpose.xlu0.b32.cont [11/16] 0.0, 128
      %2482 = vxpose.xlu0.b32.cont [12/16] 0.0, 128
      %2483 = vxpose.xlu0.b32.cont [13/16] 0.0, 128
      %2484 = vxpose.xlu0.b32.cont [14/16] 0.0, 128
      %2485 = vxpose.xlu0.b32.cont [15/16] 0.0, 128
      %2486 = vxpose.xlu0.b32.end [16/16] 0.0, 128
      %v2487 = vpop.trf.xlu0
      %v2488 = vpop.trf.xlu0
      %v2489 = vpop.trf.xlu0
      %v2490 = vpop.trf.xlu0
      %v2491 = vpop.trf.xlu0
      %v2492 = vpop.trf.xlu0
      %v2493 = vpop.trf.xlu0
      %v2494 = vpop.trf.xlu0
      %v2495 = vpop.trf.xlu0
      %v2496 = vpop.trf.xlu0
      %v2497 = vpop.trf.xlu0
      %v2498 = vpop.trf.xlu0
      %v2499 = vpop.trf.xlu0
      %v2500 = vpop.trf.xlu0
      %v2501 = vpop.trf.xlu0
      %v2502 = vpop.trf.xlu0
      %v2504 = vsel %vm1317, %v2487, 0
      %2506 = vmatprep.subr.mxu0 0.0
      %2507 = vmatpush1.msra.mxu0 %v2458
      %2508 = vmatprep.subr.mxu0 0.0
      %2509 = vmatpush1.msra.mxu0 %v2459
      %2510 = vmatprep.subr.mxu0 0.0
      %2511 = vmatpush1.msra.mxu0 %v2460
      %2512 = vmatprep.subr.mxu0 0.0
      %2513 = vmatpush1.msra.mxu0 %v2461
      %2514 = vmatprep.subr.mxu0 0.0
      %2515 = vmatpush1.msra.mxu0 0.0
      %2516 = vmatprep.subr.mxu0 0.0
      %2517 = vmatpush1.msra.mxu0 0.0
      %2518 = vmatprep.subr.mxu0 0.0
      %2519 = vmatpush1.msra.mxu0 0.0
      %2520 = vmatprep.subr.mxu0 0.0
      %2521 = vmatpush1.msra.mxu0 0.0
      %2522 = vmatprep.subr.mxu0 0.0
      %2523 = vmatpush1.msra.mxu0 0.0
      %2524 = vmatprep.subr.mxu0 0.0
      %2525 = vmatpush1.msra.mxu0 0.0
      %2526 = vmatprep.subr.mxu0 0.0
      %2527 = vmatpush1.msra.mxu0 0.0
      %2528 = vmatprep.subr.mxu0 0.0
      %2529 = vmatpush1.msra.mxu0 0.0
      %2530 = vmatprep.subr.mxu0 0.0
      %2531 = vmatpush1.msra.mxu0 0.0
      %2532 = vmatprep.subr.mxu0 0.0
      %2533 = vmatpush1.msra.mxu0 0.0
      %2534 = vmatprep.subr.mxu0 0.0
      %2535 = vmatpush1.msra.mxu0 0.0
      %2536 = vmatprep.subr.mxu0 0.0
      %2537 = vmatpush1.msra.mxu0 0.0
      %2538 = vmatprep.subr.mxu0 0.0
      %2539 = vmatpush1.msra.mxu0 0.0
      %2540 = vmatprep.subr.mxu0 0.0
      %2541 = vmatpush1.msra.mxu0 0.0
      %2542 = vmatprep.subr.mxu0 0.0
      %2543 = vmatpush1.msra.mxu0 0.0
      %2544 = vmatprep.subr.mxu0 0.0
      %2545 = vmatpush1.msra.mxu0 0.0
      %2546 = vmatprep.subr.mxu0 0.0
      %2547 = vmatpush1.msra.mxu0 0.0
      %2548 = vmatprep.subr.mxu0 0.0
      %2549 = vmatpush1.msra.mxu0 0.0
      %2550 = vmatprep.subr.mxu0 0.0
      %2551 = vmatpush1.msra.mxu0 0.0
      %2552 = vmatprep.subr.mxu0 0.0
      %2553 = vmatpush1.msra.mxu0 0.0
      %2554 = vmatprep.subr.mxu0 0.0
      %2555 = vmatpush1.msra.mxu0 0.0
      %2556 = vmatprep.subr.mxu0 0.0
      %2557 = vmatpush1.msra.mxu0 0.0
      %2558 = vmatprep.subr.mxu0 0.0
      %2559 = vmatpush1.msra.mxu0 0.0
      %2560 = vmatprep.subr.mxu0 0.0
      %2561 = vmatpush1.msra.mxu0 0.0
      %2562 = vmatprep.subr.mxu0 0.0
      %2563 = vmatpush1.msra.mxu0 0.0
      %2564 = vmatprep.subr.mxu0 0.0
      %2565 = vmatpush1.msra.mxu0 0.0
      %2566 = vmatprep.subr.mxu0 0.0
      %2567 = vmatpush1.msra.mxu0 0.0
      %2568 = vmatprep.subr.mxu0 0.0
      %2569 = vmatpush1.msra.mxu0 0.0
      %2570 = vmatprep.mubr.f32.mxu0 0.0
      %2571 = vmatmul.mubr.f32.gmra.mrb[0].mxu0 %v2504
      %v2572 = vpop.f32.mrb[0].mxu0
      %v2573 = vadd.f32 0.0, %v2572
      %v2574 = vpop.f32.mrb[0].mxu0
      %2575 = vdwg.mxu0
      %vm2576 = vcmask 7168
      %v2578 = vsel %vm2576, %v2467, 0
      %v2581 = vsel %vm2576, %v2468, 0
      %v2584 = vsel %vm2576, %v2469, 0
      %v2587 = vsel %vm2576, %v2470, 0
      %vm2589 = vcmask 1040384
      %v2591 = vsel %vm2589, %v2573, 0
      %2593 = vmatprep.subr.mxu0 0.0
      %2594 = vmatpush1.msra.mxu0 %v2591
      %2595 = vmatprep.subr.mxu0 0.0
      %2596 = vmatpush1.msra.mxu0 0.0
      %2597 = vmatprep.subr.mxu0 0.0
      %2598 = vmatpush1.msra.mxu0 0.0
      %2599 = vmatprep.subr.mxu0 0.0
      %2600 = vmatpush1.msra.mxu0 0.0
      %2601 = vmatprep.subr.mxu0 0.0
      %2602 = vmatpush1.msra.mxu0 0.0
      %2603 = vmatprep.subr.mxu0 0.0
      %2604 = vmatpush1.msra.mxu0 0.0
      %2605 = vmatprep.subr.mxu0 0.0
      %2606 = vmatpush1.msra.mxu0 0.0
      %2607 = vmatprep.subr.mxu0 0.0
      %2608 = vmatpush1.msra.mxu0 0.0
      %2609 = vmatprep.subr.mxu0 0.0
      %2610 = vmatpush1.msra.mxu0 0.0
      %2611 = vmatprep.subr.mxu0 0.0
      %2612 = vmatpush1.msra.mxu0 0.0
      %2613 = vmatprep.subr.mxu0 0.0
      %2614 = vmatpush1.msra.mxu0 0.0
      %2615 = vmatprep.subr.mxu0 0.0
      %2616 = vmatpush1.msra.mxu0 0.0
      %2617 = vmatprep.subr.mxu0 0.0
      %2618 = vmatpush1.msra.mxu0 0.0
      %2619 = vmatprep.subr.mxu0 0.0
      %2620 = vmatpush1.msra.mxu0 0.0
      %2621 = vmatprep.subr.mxu0 0.0
      %2622 = vmatpush1.msra.mxu0 0.0
      %2623 = vmatprep.subr.mxu0 0.0
      %2624 = vmatpush1.msra.mxu0 0.0
      %2625 = vmatprep.subr.mxu0 0.0
      %2626 = vmatpush1.msra.mxu0 0.0
      %2627 = vmatprep.subr.mxu0 0.0
      %2628 = vmatpush1.msra.mxu0 0.0
      %2629 = vmatprep.subr.mxu0 0.0
      %2630 = vmatpush1.msra.mxu0 0.0
      %2631 = vmatprep.subr.mxu0 0.0
      %2632 = vmatpush1.msra.mxu0 0.0
      %2633 = vmatprep.subr.mxu0 0.0
      %2634 = vmatpush1.msra.mxu0 0.0
      %2635 = vmatprep.subr.mxu0 0.0
      %2636 = vmatpush1.msra.mxu0 0.0
      %2637 = vmatprep.subr.mxu0 0.0
      %2638 = vmatpush1.msra.mxu0 0.0
      %2639 = vmatprep.subr.mxu0 0.0
      %2640 = vmatpush1.msra.mxu0 0.0
      %2641 = vmatprep.subr.mxu0 0.0
      %2642 = vmatpush1.msra.mxu0 0.0
      %2643 = vmatprep.subr.mxu0 0.0
      %2644 = vmatpush1.msra.mxu0 0.0
      %2645 = vmatprep.subr.mxu0 0.0
      %2646 = vmatpush1.msra.mxu0 0.0
      %2647 = vmatprep.subr.mxu0 0.0
      %2648 = vmatpush1.msra.mxu0 0.0
      %2649 = vmatprep.subr.mxu0 0.0
      %2650 = vmatpush1.msra.mxu0 0.0
      %2651 = vmatprep.subr.mxu0 0.0
      %2652 = vmatpush1.msra.mxu0 0.0
      %2653 = vmatprep.subr.mxu0 0.0
      %2654 = vmatpush1.msra.mxu0 0.0
      %2655 = vmatprep.subr.mxu0 0.0
      %2656 = vmatpush1.msra.mxu0 0.0
      %2657 = vmatprep.mubr.f32.mxu0 0.0
      %2658 = vmatmul.mubr.f32.gmra.mrb[0].mxu0 %v2578
      %v2659 = vpop.f32.mrb[0].mxu0
      %v2660 = vadd.f32 0.0, %v2659
      %v2661 = vpop.f32.mrb[0].mxu0
      %2662 = vmatprep.mubr.f32.mxu0 0.0
      %2663 = vmatmul.mubr.f32.gmra.mrb[0].mxu0 %v2581
      %v2664 = vpop.f32.mrb[0].mxu0
      %v2665 = vadd.f32 0.0, %v2664
      %v2666 = vpop.f32.mrb[0].mxu0
      %2667 = vmatprep.mubr.f32.mxu0 0.0
      %2668 = vmatmul.mubr.f32.gmra.mrb[0].mxu0 %v2584
      %v2669 = vpop.f32.mrb[0].mxu0
      %v2670 = vadd.f32 0.0, %v2669
      %v2671 = vpop.f32.mrb[0].mxu0
      %2672 = vmatprep.mubr.f32.mxu0 0.0
      %2673 = vmatmul.mubr.f32.gmra.mrb[0].mxu0 %v2587
      %v2674 = vpop.f32.mrb[0].mxu0
      %v2675 = vadd.f32 0.0, %v2674
      %v2676 = vpop.f32.mrb[0].mxu0
      %2677 = vdwg.mxu0
      %v2678 = vsel %vm2576, %v2467, 0.0
      %v2679 = vsel %vm2576, %v2468, 0.0
      %v2680 = vadd.f32 %v2678, %v2679
      %v2681 = vsel %vm2576, %v2469, 0.0
      %v2682 = vadd.f32 %v2680, %v2681
      %v2683 = vsel %vm2576, %v2470, 0.0
      %v2684 = vadd.f32 %v2682, %v2683
      %v2685 = vrot.slane %v2684, 4
      %v2686 = vadd.f32 %v2684, %v2685
      %v2687 = vrot.slane %v2686, 2
      %v2688 = vadd.f32 %v2686, %v2687
      %v2689 = vrot.slane %v2688, 1
      %v2690 = vadd.f32 %v2688, %v2689
      %v2691 = vmul.f32 %v2467, %v2690
      %v2692 = vmul.f32 %v2468, %v2690
      %v2693 = vmul.f32 %v2469, %v2690
      %v2694 = vmul.f32 %v2470, %v2690
      %v2695 = vadd.f32 %v2691, 0.0
      %v2696 = vadd.f32 %v2692, 0.0
      %v2697 = vadd.f32 %v2693, 0.0
      %v2698 = vadd.f32 %v2694, 0.0
      %v2699 = vrcp.pop %v2695
      %v2700 = vmul.f32 1.0, %v2699
      %v2701 = vrcp.pop %v2696
      %v2702 = vmul.f32 1.0, %v2701
      %v2703 = vrcp.pop %v2697
      %v2704 = vmul.f32 1.0, %v2703
      %v2705 = vrcp.pop %v2698
      %v2706 = vmul.f32 1.0, %v2705
      %2708 = vset.pattern.permute.xlu0 0
      %2709 = vperm.xlu0 %2708, %v2700
      %v2710 = vpop.permute.xlu0 %2709
      %2713 = vset.pattern.permute.xlu0 0
      %2714 = vperm.xlu0 %2713, %v2702
      %v2715 = vpop.permute.xlu0 %2714
      %2718 = vset.pattern.permute.xlu0 0
      %2719 = vperm.xlu0 %2718, %v2704
      %v2720 = vpop.permute.xlu0 %2719
      %2723 = vset.pattern.permute.xlu0 0
      %2724 = vperm.xlu0 %2723, %v2706
      %v2725 = vpop.permute.xlu0 %2724
      %v2727 = vmul.f32 %v2660, %v2710
      %v2728 = vmul.f32 %v2665, %v2715
      %v2729 = vmul.f32 %v2670, %v2720
      %v2730 = vmul.f32 %v2675, %v2725
      %vm2731 = vcmp.eq.f32.partialorder %v822, 0.0
      %vm2732 = vcmp.eq.f32.partialorder %v823, 0.0
      %vm2733 = vcmp.eq.f32.partialorder %v824, 0.0
      %vm2734 = vcmp.eq.f32.partialorder %v825, 0.0
      %v2735 = vsel %vm2731, 1.0, 0.0
      %v2736 = vsel %vm2732, 1.0, 0.0
      %v2737 = vsel %vm2733, 1.0, 0.0
      %v2738 = vsel %vm2734, 1.0, 0.0
      %v2739 = vsel %vm2731, 1, 0
      %v2740 = vsel %vm2732, 1, 0
      %v2741 = vsel %vm2733, 1, 0
      %v2742 = vsel %vm2734, 1, 0
      %2743 = vset.pattern.permute.xlu0 0
      %2744 = vperm.xlu0 %2743, %v2739
      %v2745 = vpop.permute.xlu0 %2744
      %2746 = vset.pattern.permute.xlu0 0
      %2747 = vperm.xlu0 %2746, %v2740
      %v2748 = vpop.permute.xlu0 %2747
      %2749 = vset.pattern.permute.xlu0 0
      %2750 = vperm.xlu0 %2749, %v2741
      %v2751 = vpop.permute.xlu0 %2750
      %2752 = vset.pattern.permute.xlu0 0
      %2753 = vperm.xlu0 %2752, %v2742
      %v2754 = vpop.permute.xlu0 %2753
      %vm2755 = vcmp.eq.s32.totalorder %v2745, 1
      %vm2756 = vcmp.eq.s32.totalorder %v2748, 1
      %vm2757 = vcmp.eq.s32.totalorder %v2751, 1
      %vm2758 = vcmp.eq.s32.totalorder %v2754, 1
      %v2759 = vsel %vm2755, %v2458, 1e+30
      %v2760 = vsel %vm2756, %v2459, 1e+30
      %v2761 = vsel %vm2757, %v2460, 1e+30
      %v2762 = vsel %vm2758, %v2461, 1e+30
      %v2763 = vsel %vm835, %v2759, inf
      %v2764 = vsel %vm835, %v2760, inf
      %v2765 = vsel %vm835, %v2761, inf
      %v2766 = vsel %vm835, %v2762, inf
      %v2767 = vmin.f32 %v2763, %v2764
      %v2768 = vmin.f32 %v2765, %v2766
      %v2769 = vmin.f32 %v2767, %v2768
      %v2770 = vrot.slane %v2769, 4
      %v2771 = vmin.f32 %v2769, %v2770
      %v2772 = vrot.slane %v2771, 2
      %v2773 = vmin.f32 %v2771, %v2772
      %v2774 = vrot.slane %v2773, 1
      %v2775 = vmin.f32 %v2773, %v2774
      %v2776 = vsel %vm2755, %v2458, -1e+30
      %v2777 = vsel %vm2756, %v2459, -1e+30
      %v2778 = vsel %vm2757, %v2460, -1e+30
      %v2779 = vsel %vm2758, %v2461, -1e+30
      %v2780 = vsel %vm835, %v2776, -inf
      %v2781 = vsel %vm835, %v2777, -inf
      %v2782 = vsel %vm835, %v2778, -inf
      %v2783 = vsel %vm835, %v2779, -inf
      %v2784 = vmax.f32 %v2780, %v2781
      %v2785 = vmax.f32 %v2782, %v2783
      %v2786 = vmax.f32 %v2784, %v2785
      %v2787 = vrot.slane %v2786, 4
      %v2788 = vmax.f32 %v2786, %v2787
      %v2789 = vrot.slane %v2788, 2
      %v2790 = vmax.f32 %v2788, %v2789
      %v2791 = vrot.slane %v2790, 1
      %v2792 = vmax.f32 %v2790, %v2791
      %2794 = vset.pattern.permute.xlu0 0
      %2795 = vperm.xlu0 %2794, %v2735
      %v2796 = vpop.permute.xlu0 %2795
      %2799 = vset.pattern.permute.xlu0 0
      %2800 = vperm.xlu0 %2799, %v2736
      %v2801 = vpop.permute.xlu0 %2800
      %2804 = vset.pattern.permute.xlu0 0
      %2805 = vperm.xlu0 %2804, %v2737
      %v2806 = vpop.permute.xlu0 %2805
      %2809 = vset.pattern.permute.xlu0 0
      %2810 = vperm.xlu0 %2809, %v2738
      %v2811 = vpop.permute.xlu0 %2810
      %v2813 = vmul.f32 %v2796, %v2775
      %v2814 = vmul.f32 %v2801, %v2775
      %v2815 = vmul.f32 %v2806, %v2775
      %v2816 = vmul.f32 %v2811, %v2775
      %v2817 = vadd.f32 %v2813, 0.0
      %v2818 = vadd.f32 %v2814, 0.0
      %v2819 = vadd.f32 %v2815, 0.0
      %v2820 = vadd.f32 %v2816, 0.0
      %v2821 = vmul.f32 %v2796, %v2792
      %v2822 = vmul.f32 %v2801, %v2792
      %v2823 = vmul.f32 %v2806, %v2792
      %v2824 = vmul.f32 %v2811, %v2792
      %v2825 = vadd.f32 %v2821, 0.0
      %v2826 = vadd.f32 %v2822, 0.0
      %v2827 = vadd.f32 %v2823, 0.0
      %v2828 = vadd.f32 %v2824, 0.0
      %v2829 = vld [vmem:[%s19] sm:$0xff]
      %v2830 = vld [vmem:[%s20] sm:$0xff]
      %v2832 = vsel %vm835, %v2817, 0
      %v2835 = vsel %vm835, %v2818, 0
      %v2838 = vsel %vm835, %v2819, 0
      %v2841 = vsel %vm835, %v2820, 0
      %2843 = vmatprep.subr.mxu0 0.0
      %2844 = vmatpush1.msra.mxu0 %v2830
      %2845 = vmatprep.subr.mxu0 0.0
      %2846 = vmatpush1.msra.mxu0 0.0
      %2847 = vmatprep.subr.mxu0 0.0
      %2848 = vmatpush1.msra.mxu0 0.0
      %2849 = vmatprep.subr.mxu0 0.0
      %2850 = vmatpush1.msra.mxu0 0.0
      %2851 = vmatprep.subr.mxu0 0.0
      %2852 = vmatpush1.msra.mxu0 0.0
      %2853 = vmatprep.subr.mxu0 0.0
      %2854 = vmatpush1.msra.mxu0 0.0
      %2855 = vmatprep.subr.mxu0 0.0
      %2856 = vmatpush1.msra.mxu0 0.0
      %2857 = vmatprep.subr.mxu0 0.0
      %2858 = vmatpush1.msra.mxu0 0.0
      %2859 = vmatprep.subr.mxu0 0.0
      %2860 = vmatpush1.msra.mxu0 0.0
      %2861 = vmatprep.subr.mxu0 0.0
      %2862 = vmatpush1.msra.mxu0 0.0
      %2863 = vmatprep.subr.mxu0 0.0
      %2864 = vmatpush1.msra.mxu0 0.0
      %2865 = vmatprep.subr.mxu0 0.0
      %2866 = vmatpush1.msra.mxu0 0.0
      %2867 = vmatprep.subr.mxu0 0.0
      %2868 = vmatpush1.msra.mxu0 0.0
      %2869 = vmatprep.subr.mxu0 0.0
      %2870 = vmatpush1.msra.mxu0 0.0
      %2871 = vmatprep.subr.mxu0 0.0
      %2872 = vmatpush1.msra.mxu0 0.0
      %2873 = vmatprep.subr.mxu0 0.0
      %2874 = vmatpush1.msra.mxu0 0.0
      %2875 = vmatprep.subr.mxu0 0.0
      %2876 = vmatpush1.msra.mxu0 0.0
      %2877 = vmatprep.subr.mxu0 0.0
      %2878 = vmatpush1.msra.mxu0 0.0
      %2879 = vmatprep.subr.mxu0 0.0
      %2880 = vmatpush1.msra.mxu0 0.0
      %2881 = vmatprep.subr.mxu0 0.0
      %2882 = vmatpush1.msra.mxu0 0.0
      %2883 = vmatprep.subr.mxu0 0.0
      %2884 = vmatpush1.msra.mxu0 0.0
      %2885 = vmatprep.subr.mxu0 0.0
      %2886 = vmatpush1.msra.mxu0 0.0
      %2887 = vmatprep.subr.mxu0 0.0
      %2888 = vmatpush1.msra.mxu0 0.0
      %2889 = vmatprep.subr.mxu0 0.0
      %2890 = vmatpush1.msra.mxu0 0.0
      %2891 = vmatprep.subr.mxu0 0.0
      %2892 = vmatpush1.msra.mxu0 0.0
      %2893 = vmatprep.subr.mxu0 0.0
      %2894 = vmatpush1.msra.mxu0 0.0
      %2895 = vmatprep.subr.mxu0 0.0
      %2896 = vmatpush1.msra.mxu0 0.0
      %2897 = vmatprep.subr.mxu0 0.0
      %2898 = vmatpush1.msra.mxu0 0.0
      %2899 = vmatprep.subr.mxu0 0.0
      %2900 = vmatpush1.msra.mxu0 0.0
      %2901 = vmatprep.subr.mxu0 0.0
      %2902 = vmatpush1.msra.mxu0 0.0
      %2903 = vmatprep.subr.mxu0 0.0
      %2904 = vmatpush1.msra.mxu0 0.0
      %2905 = vmatprep.subr.mxu0 0.0
      %2906 = vmatpush1.msra.mxu0 0.0
      %2907 = vmatprep.mubr.f32.mxu0 0.0
      %2908 = vmatmul.mubr.f32.gmra.mrb[0].mxu0 %v2832
      %v2909 = vpop.f32.mrb[0].mxu0
      %v2910 = vadd.f32 0.0, %v2909
      %v2911 = vpop.f32.mrb[0].mxu0
      %2912 = vmatprep.mubr.f32.mxu0 0.0
      %2913 = vmatmul.mubr.f32.gmra.mrb[0].mxu0 %v2835
      %v2914 = vpop.f32.mrb[0].mxu0
      %v2915 = vadd.f32 0.0, %v2914
      %v2916 = vpop.f32.mrb[0].mxu0
      %2917 = vmatprep.mubr.f32.mxu0 0.0
      %2918 = vmatmul.mubr.f32.gmra.mrb[0].mxu0 %v2838
      %v2919 = vpop.f32.mrb[0].mxu0
      %v2920 = vadd.f32 0.0, %v2919
      %v2921 = vpop.f32.mrb[0].mxu0
      %2922 = vmatprep.mubr.f32.mxu0 0.0
      %2923 = vmatmul.mubr.f32.gmra.mrb[0].mxu0 %v2841
      %v2924 = vpop.f32.mrb[0].mxu0
      %v2925 = vadd.f32 0.0, %v2924
      %v2926 = vpop.f32.mrb[0].mxu0
      %2927 = vdwg.mxu0
      %v2929 = vsel %vm835, %v2727, 0
      %v2932 = vsel %vm835, %v2728, 0
      %v2935 = vsel %vm835, %v2729, 0
      %v2938 = vsel %vm835, %v2730, 0
      %2940 = vmatprep.subr.mxu0 0.0
      %2941 = vmatpush1.msra.mxu0 %v2829
      %2942 = vmatprep.subr.mxu0 0.0
      %2943 = vmatpush1.msra.mxu0 0.0
      %2944 = vmatprep.subr.mxu0 0.0
      %2945 = vmatpush1.msra.mxu0 0.0
      %2946 = vmatprep.subr.mxu0 0.0
      %2947 = vmatpush1.msra.mxu0 0.0
      %2948 = vmatprep.subr.mxu0 0.0
      %2949 = vmatpush1.msra.mxu0 0.0
      %2950 = vmatprep.subr.mxu0 0.0
      %2951 = vmatpush1.msra.mxu0 0.0
      %2952 = vmatprep.subr.mxu0 0.0
      %2953 = vmatpush1.msra.mxu0 0.0
      %2954 = vmatprep.subr.mxu0 0.0
      %2955 = vmatpush1.msra.mxu0 0.0
      %2956 = vmatprep.subr.mxu0 0.0
      %2957 = vmatpush1.msra.mxu0 0.0
      %2958 = vmatprep.subr.mxu0 0.0
      %2959 = vmatpush1.msra.mxu0 0.0
      %2960 = vmatprep.subr.mxu0 0.0
      %2961 = vmatpush1.msra.mxu0 0.0
      %2962 = vmatprep.subr.mxu0 0.0
      %2963 = vmatpush1.msra.mxu0 0.0
      %2964 = vmatprep.subr.mxu0 0.0
      %2965 = vmatpush1.msra.mxu0 0.0
      %2966 = vmatprep.subr.mxu0 0.0
      %2967 = vmatpush1.msra.mxu0 0.0
      %2968 = vmatprep.subr.mxu0 0.0
      %2969 = vmatpush1.msra.mxu0 0.0
      %2970 = vmatprep.subr.mxu0 0.0
      %2971 = vmatpush1.msra.mxu0 0.0
      %2972 = vmatprep.subr.mxu0 0.0
      %2973 = vmatpush1.msra.mxu0 0.0
      %2974 = vmatprep.subr.mxu0 0.0
      %2975 = vmatpush1.msra.mxu0 0.0
      %2976 = vmatprep.subr.mxu0 0.0
      %2977 = vmatpush1.msra.mxu0 0.0
      %2978 = vmatprep.subr.mxu0 0.0
      %2979 = vmatpush1.msra.mxu0 0.0
      %2980 = vmatprep.subr.mxu0 0.0
      %2981 = vmatpush1.msra.mxu0 0.0
      %2982 = vmatprep.subr.mxu0 0.0
      %2983 = vmatpush1.msra.mxu0 0.0
      %2984 = vmatprep.subr.mxu0 0.0
      %2985 = vmatpush1.msra.mxu0 0.0
      %2986 = vmatprep.subr.mxu0 0.0
      %2987 = vmatpush1.msra.mxu0 0.0
      %2988 = vmatprep.subr.mxu0 0.0
      %2989 = vmatpush1.msra.mxu0 0.0
      %2990 = vmatprep.subr.mxu0 0.0
      %2991 = vmatpush1.msra.mxu0 0.0
      %2992 = vmatprep.subr.mxu0 0.0
      %2993 = vmatpush1.msra.mxu0 0.0
      %2994 = vmatprep.subr.mxu0 0.0
      %2995 = vmatpush1.msra.mxu0 0.0
      %2996 = vmatprep.subr.mxu0 0.0
      %2997 = vmatpush1.msra.mxu0 0.0
      %2998 = vmatprep.subr.mxu0 0.0
      %2999 = vmatpush1.msra.mxu0 0.0
      %3000 = vmatprep.subr.mxu0 0.0
      %3001 = vmatpush1.msra.mxu0 0.0
      %3002 = vmatprep.subr.mxu0 0.0
      %3003 = vmatpush1.msra.mxu0 0.0
      %3004 = vmatprep.mubr.f32.mxu0 0.0
      %3005 = vmatmul.mubr.f32.gmra.mrb[0].mxu0 %v2929
      %v3006 = vpop.f32.mrb[0].mxu0
      %v3007 = vadd.f32 %v2910, %v3006
      %v3008 = vpop.f32.mrb[0].mxu0
      %3009 = vmatprep.mubr.f32.mxu0 0.0
      %3010 = vmatmul.mubr.f32.gmra.mrb[0].mxu0 %v2932
      %v3011 = vpop.f32.mrb[0].mxu0
      %v3012 = vadd.f32 %v2915, %v3011
      %v3013 = vpop.f32.mrb[0].mxu0
      %3014 = vmatprep.mubr.f32.mxu0 0.0
      %3015 = vmatmul.mubr.f32.gmra.mrb[0].mxu0 %v2935
      %v3016 = vpop.f32.mrb[0].mxu0
      %v3017 = vadd.f32 %v2920, %v3016
      %v3018 = vpop.f32.mrb[0].mxu0
      %3019 = vmatprep.mubr.f32.mxu0 0.0
      %3020 = vmatmul.mubr.f32.gmra.mrb[0].mxu0 %v2938
      %v3021 = vpop.f32.mrb[0].mxu0
      %v3022 = vadd.f32 %v2925, %v3021
      %v3023 = vpop.f32.mrb[0].mxu0
      %3024 = vdwg.mxu0
      %v3025 = vld [vmem:[%s21] sm:$0xff]
      %v3027 = vsel %vm835, %v2825, 0
      %v3030 = vsel %vm835, %v2826, 0
      %v3033 = vsel %vm835, %v2827, 0
      %v3036 = vsel %vm835, %v2828, 0
      %3038 = vmatprep.subr.mxu0 0.0
      %3039 = vmatpush1.msra.mxu0 %v3025
      %3040 = vmatprep.subr.mxu0 0.0
      %3041 = vmatpush1.msra.mxu0 0.0
      %3042 = vmatprep.subr.mxu0 0.0
      %3043 = vmatpush1.msra.mxu0 0.0
      %3044 = vmatprep.subr.mxu0 0.0
      %3045 = vmatpush1.msra.mxu0 0.0
      %3046 = vmatprep.subr.mxu0 0.0
      %3047 = vmatpush1.msra.mxu0 0.0
      %3048 = vmatprep.subr.mxu0 0.0
      %3049 = vmatpush1.msra.mxu0 0.0
      %3050 = vmatprep.subr.mxu0 0.0
      %3051 = vmatpush1.msra.mxu0 0.0
      %3052 = vmatprep.subr.mxu0 0.0
      %3053 = vmatpush1.msra.mxu0 0.0
      %3054 = vmatprep.subr.mxu0 0.0
      %3055 = vmatpush1.msra.mxu0 0.0
      %3056 = vmatprep.subr.mxu0 0.0
      %3057 = vmatpush1.msra.mxu0 0.0
      %3058 = vmatprep.subr.mxu0 0.0
      %3059 = vmatpush1.msra.mxu0 0.0
      %3060 = vmatprep.subr.mxu0 0.0
      %3061 = vmatpush1.msra.mxu0 0.0
      %3062 = vmatprep.subr.mxu0 0.0
      %3063 = vmatpush1.msra.mxu0 0.0
      %3064 = vmatprep.subr.mxu0 0.0
      %3065 = vmatpush1.msra.mxu0 0.0
      %3066 = vmatprep.subr.mxu0 0.0
      %3067 = vmatpush1.msra.mxu0 0.0
      %3068 = vmatprep.subr.mxu0 0.0
      %3069 = vmatpush1.msra.mxu0 0.0
      %3070 = vmatprep.subr.mxu0 0.0
      %3071 = vmatpush1.msra.mxu0 0.0
      %3072 = vmatprep.subr.mxu0 0.0
      %3073 = vmatpush1.msra.mxu0 0.0
      %3074 = vmatprep.subr.mxu0 0.0
      %3075 = vmatpush1.msra.mxu0 0.0
      %3076 = vmatprep.subr.mxu0 0.0
      %3077 = vmatpush1.msra.mxu0 0.0
      %3078 = vmatprep.subr.mxu0 0.0
      %3079 = vmatpush1.msra.mxu0 0.0
      %3080 = vmatprep.subr.mxu0 0.0
      %3081 = vmatpush1.msra.mxu0 0.0
      %3082 = vmatprep.subr.mxu0 0.0
      %3083 = vmatpush1.msra.mxu0 0.0
      %3084 = vmatprep.subr.mxu0 0.0
      %3085 = vmatpush1.msra.mxu0 0.0
      %3086 = vmatprep.subr.mxu0 0.0
      %3087 = vmatpush1.msra.mxu0 0.0
      %3088 = vmatprep.subr.mxu0 0.0
      %3089 = vmatpush1.msra.mxu0 0.0
      %3090 = vmatprep.subr.mxu0 0.0
      %3091 = vmatpush1.msra.mxu0 0.0
      %3092 = vmatprep.subr.mxu0 0.0
      %3093 = vmatpush1.msra.mxu0 0.0
      %3094 = vmatprep.subr.mxu0 0.0
      %3095 = vmatpush1.msra.mxu0 0.0
      %3096 = vmatprep.subr.mxu0 0.0
      %3097 = vmatpush1.msra.mxu0 0.0
      %3098 = vmatprep.subr.mxu0 0.0
      %3099 = vmatpush1.msra.mxu0 0.0
      %3100 = vmatprep.subr.mxu0 0.0
      %3101 = vmatpush1.msra.mxu0 0.0
      %3102 = vmatprep.mubr.f32.mxu0 0.0
      %3103 = vmatmul.mubr.f32.gmra.mrb[0].mxu0 %v3027
      %v3104 = vpop.f32.mrb[0].mxu0
      %v3105 = vadd.f32 0.0, %v3104
      %v3106 = vpop.f32.mrb[0].mxu0
      %3107 = vmatprep.mubr.f32.mxu0 0.0
      %3108 = vmatmul.mubr.f32.gmra.mrb[0].mxu0 %v3030
      %v3109 = vpop.f32.mrb[0].mxu0
      %v3110 = vadd.f32 0.0, %v3109
      %v3111 = vpop.f32.mrb[0].mxu0
      %3112 = vmatprep.mubr.f32.mxu0 0.0
      %3113 = vmatmul.mubr.f32.gmra.mrb[0].mxu0 %v3033
      %v3114 = vpop.f32.mrb[0].mxu0
      %v3115 = vadd.f32 0.0, %v3114
      %v3116 = vpop.f32.mrb[0].mxu0
      %3117 = vmatprep.mubr.f32.mxu0 0.0
      %3118 = vmatmul.mubr.f32.gmra.mrb[0].mxu0 %v3036
      %v3119 = vpop.f32.mrb[0].mxu0
      %v3120 = vadd.f32 0.0, %v3119
      %v3121 = vpop.f32.mrb[0].mxu0
      %3122 = vdwg.mxu0
      %v3123 = vadd.f32 %v3007, %v3105
      %v3124 = vadd.f32 %v3012, %v3110
      %v3125 = vadd.f32 %v3017, %v3115
      %v3126 = vadd.f32 %v3022, %v3120
      %v3127 = vld [vmem:[%s22] sm:$0xff]
      %v3129 = vsel %vm835, %v2458, 0
      %v3132 = vsel %vm835, %v2459, 0
      %v3135 = vsel %vm835, %v2460, 0
      %v3138 = vsel %vm835, %v2461, 0
      %3140 = vmatprep.subr.mxu0 0.0
      %3141 = vmatpush1.msra.mxu0 %v3127
      %3142 = vmatprep.subr.mxu0 0.0
      %3143 = vmatpush1.msra.mxu0 0.0
      %3144 = vmatprep.subr.mxu0 0.0
      %3145 = vmatpush1.msra.mxu0 0.0
      %3146 = vmatprep.subr.mxu0 0.0
      %3147 = vmatpush1.msra.mxu0 0.0
      %3148 = vmatprep.subr.mxu0 0.0
      %3149 = vmatpush1.msra.mxu0 0.0
      %3150 = vmatprep.subr.mxu0 0.0
      %3151 = vmatpush1.msra.mxu0 0.0
      %3152 = vmatprep.subr.mxu0 0.0
      %3153 = vmatpush1.msra.mxu0 0.0
      %3154 = vmatprep.subr.mxu0 0.0
      %3155 = vmatpush1.msra.mxu0 0.0
      %3156 = vmatprep.subr.mxu0 0.0
      %3157 = vmatpush1.msra.mxu0 0.0
      %3158 = vmatprep.subr.mxu0 0.0
      %3159 = vmatpush1.msra.mxu0 0.0
      %3160 = vmatprep.subr.mxu0 0.0
      %3161 = vmatpush1.msra.mxu0 0.0
      %3162 = vmatprep.subr.mxu0 0.0
      %3163 = vmatpush1.msra.mxu0 0.0
      %3164 = vmatprep.subr.mxu0 0.0
      %3165 = vmatpush1.msra.mxu0 0.0
      %3166 = vmatprep.subr.mxu0 0.0
      %3167 = vmatpush1.msra.mxu0 0.0
      %3168 = vmatprep.subr.mxu0 0.0
      %3169 = vmatpush1.msra.mxu0 0.0
      %3170 = vmatprep.subr.mxu0 0.0
      %3171 = vmatpush1.msra.mxu0 0.0
      %3172 = vmatprep.subr.mxu0 0.0
      %3173 = vmatpush1.msra.mxu0 0.0
      %3174 = vmatprep.subr.mxu0 0.0
      %3175 = vmatpush1.msra.mxu0 0.0
      %3176 = vmatprep.subr.mxu0 0.0
      %3177 = vmatpush1.msra.mxu0 0.0
      %3178 = vmatprep.subr.mxu0 0.0
      %3179 = vmatpush1.msra.mxu0 0.0
      %3180 = vmatprep.subr.mxu0 0.0
      %3181 = vmatpush1.msra.mxu0 0.0
      %3182 = vmatprep.subr.mxu0 0.0
      %3183 = vmatpush1.msra.mxu0 0.0
      %3184 = vmatprep.subr.mxu0 0.0
      %3185 = vmatpush1.msra.mxu0 0.0
      %3186 = vmatprep.subr.mxu0 0.0
      %3187 = vmatpush1.msra.mxu0 0.0
      %3188 = vmatprep.subr.mxu0 0.0
      %3189 = vmatpush1.msra.mxu0 0.0
      %3190 = vmatprep.subr.mxu0 0.0
      %3191 = vmatpush1.msra.mxu0 0.0
      %3192 = vmatprep.subr.mxu0 0.0
      %3193 = vmatpush1.msra.mxu0 0.0
      %3194 = vmatprep.subr.mxu0 0.0
      %3195 = vmatpush1.msra.mxu0 0.0
      %3196 = vmatprep.subr.mxu0 0.0
      %3197 = vmatpush1.msra.mxu0 0.0
      %3198 = vmatprep.subr.mxu0 0.0
      %3199 = vmatpush1.msra.mxu0 0.0
      %3200 = vmatprep.subr.mxu0 0.0
      %3201 = vmatpush1.msra.mxu0 0.0
      %3202 = vmatprep.subr.mxu0 0.0
      %3203 = vmatpush1.msra.mxu0 0.0
      %3204 = vmatprep.mubr.f32.mxu0 0.0
      %3205 = vmatmul.mubr.f32.gmra.mrb[0].mxu0 %v3129
      %v3206 = vpop.f32.mrb[0].mxu0
      %v3207 = vadd.f32 0.0, %v3206
      %v3208 = vpop.f32.mrb[0].mxu0
      %3209 = vmatprep.mubr.f32.mxu0 0.0
      %3210 = vmatmul.mubr.f32.gmra.mrb[0].mxu0 %v3132
      %v3211 = vpop.f32.mrb[0].mxu0
      %v3212 = vadd.f32 0.0, %v3211
      %v3213 = vpop.f32.mrb[0].mxu0
      %3214 = vmatprep.mubr.f32.mxu0 0.0
      %3215 = vmatmul.mubr.f32.gmra.mrb[0].mxu0 %v3135
      %v3216 = vpop.f32.mrb[0].mxu0
      %v3217 = vadd.f32 0.0, %v3216
      %v3218 = vpop.f32.mrb[0].mxu0
      %3219 = vmatprep.mubr.f32.mxu0 0.0
      %3220 = vmatmul.mubr.f32.gmra.mrb[0].mxu0 %v3138
      %v3221 = vpop.f32.mrb[0].mxu0
      %v3222 = vadd.f32 0.0, %v3221
      %v3223 = vpop.f32.mrb[0].mxu0
      %3224 = vdwg.mxu0
      %v3225 = vadd.f32 %v3123, %v3207
      %v3226 = vadd.f32 %v3124, %v3212
      %v3227 = vadd.f32 %v3125, %v3217
      %v3228 = vadd.f32 %v3126, %v3222
      %v3229 = vld [vmem:[%s23] sm:$0x1]
      %v3231 = vlaneseq
      %v3232 = vshrl.u32 %v3231, 7
      %v3233 = vsub.s32 0, %v3232
      %v3234 = vrot.slane %v3229, %v3233
      %v3236 = vadd.f32 %v3225, %v3234
      %v3237 = vadd.f32 %v3226, %v3234
      %v3238 = vadd.f32 %v3227, %v3234
      %v3239 = vadd.f32 %v3228, %v3234
      %vm3240 = vcmp.gt.f32.partialorder %v3236, 0.0
      %vm3241 = vcmp.gt.f32.partialorder %v3237, 0.0
      %vm3242 = vcmp.gt.f32.partialorder %v3238, 0.0
      %vm3243 = vcmp.gt.f32.partialorder %v3239, 0.0
      %v3244 = vmin.f32 %v3236, 0.0
      %v3245 = vmin.f32 %v3237, 0.0
      %v3246 = vmin.f32 %v3238, 0.0
      %v3247 = vmin.f32 %v3239, 0.0
      %v3248 = vmul.f32 %v3244, 1.442695
      %v3249 = vpow.pop %v3248
      %v3250 = vmul.f32 %v3245, 1.442695
      %v3251 = vpow.pop %v3250
      %v3252 = vmul.f32 %v3246, 1.442695
      %v3253 = vpow.pop %v3252
      %v3254 = vmul.f32 %v3247, 1.442695
      %v3255 = vpow.pop %v3254
      %v3256 = vsub.f32 %v3249, 1.0
      %v3257 = vsub.f32 %v3251, 1.0
      %v3258 = vsub.f32 %v3253, 1.0
      %v3259 = vsub.f32 %v3255, 1.0
      %v3260 = vsel %vm3240, %v3236, %v3256
      %v3261 = vsel %vm3241, %v3237, %v3257
      %v3262 = vsel %vm3242, %v3238, %v3258
      %v3263 = vsel %vm3243, %v3239, %v3259
      %3264 = vst.msk [vmem:[%s810] sm:$0xff] %vm835, %v3260
      %3265 = vst.msk [vmem:[%s810 + $0x8] sm:$0xff] %vm835, %v3261
      %3266 = vst.msk [vmem:[%s810 + $0x10] sm:$0xff] %vm835, %v3262
      %3267 = vst.msk [vmem:[%s810 + $0x18] sm:$0xff] %vm835, %v3263
      %s3268 = smul.u32 %s37, 32
      %v3269 = vstv %s3268
      %v3270 = vadd.s32 %v1890, %v3269
      %v3271 = vadd.s32 %v1891, %v3269
      %v3272 = vadd.s32 %v1892, %v3269
      %v3273 = vadd.s32 %v1893, %v3269
      %vm3274 = vcmask 31744
      %3275 = vst.msk [vmem:[%s816] sm:$0xff] %vm3274, %v3270
      %3276 = vst.msk [vmem:[%s816 + $0x8] sm:$0xff] %vm3274, %v3271
      %3277 = vst.msk [vmem:[%s816 + $0x10] sm:$0xff] %vm3274, %v3272
      %3278 = vst.msk [vmem:[%s816 + $0x18] sm:$0xff] %vm3274, %v3273
      %s3279 = smul.u32 4, %s37
      %p3280 = scmp.lt.s32.totalorder %s3279, 7
      %s3281 = scalar_select %p3280, %s3279, 7
      %s3282 = smul.addr %s3281, 8
      %s3283 = scalar_lea.vmem %s24, %s3282
      %s3284 = smul.u32 4, %s37
      %p3285 = scmp.lt.s32.totalorder %s3284, 7
      %s3286 = scalar_select %p3285, %s3284, 7
      %s3287 = smul.addr %s3286, 8
      %s3288 = scalar_lea.vmem %s25, %s3287
      // Predicated region
      $region117: #{tpu_custom_call.1} parent=115 // pred_check
        %p3289 = pneg %p574
      $region118: #{tpu_custom_call.1} parent=115 // pred_check_branch
        %3291 = sbr.rel (%p3289) target = $region120
      $region119: #{tpu_custom_call.1} parent=115 // pred_region
        %s3292 = smul.u32 4, %s37
      $region120: #{tpu_custom_call.1} parent=115 // pred_fallthru
        _
      // Predicated region
      $region121: #{tpu_custom_call.1} parent=115 // pred_check
        %p3293 = pneg %p600
      $region122: #{tpu_custom_call.1} parent=115 // pred_check_branch
        %3295 = sbr.rel (%p3293) target = $region124
      $region123: #{tpu_custom_call.1} parent=115 // pred_region
        %s3296 = smul.u32 4, %s37
      $region124: #{tpu_custom_call.1} parent=115 // pred_fallthru
        _
    $region116: #{tpu_custom_call.1} parent=5 // pred_fallthru
      _
    %p3297 = scmp.le.s32.totalorder 2, %s32
    // Predicated region
    $region125: #{tpu_custom_call.1} parent=5 // pred_check
      %p3298 = pneg %p3297
    $region126: #{tpu_custom_call.1} parent=5 // pred_check_branch
      %3300 = sbr.rel (%p3298) target = $region128
    $region127: #{tpu_custom_call.1} parent=5 // pred_region
      %s3301 = ssub.s32 %s32, 2
      // Predicated region
      $region129: #{tpu_custom_call.1} parent=127 // pred_check
        %p3302 = pneg %p580
      $region130: #{tpu_custom_call.1} parent=127 // pred_check_branch
        %3304 = sbr.rel (%p3302) target = $region132
      $region131: #{tpu_custom_call.1} parent=127 // pred_region
        %s3305 = smul.u32 4, %s38
        %p3306 = scmp.lt.s32.totalorder %s3305, 7
        %s3307 = scalar_select %p3306, %s3305, 7
        %s3308 = smul.addr %s3307, 8
        %s3309 = scalar_lea.vmem %s24, %s3308
      $region132: #{tpu_custom_call.1} parent=127 // pred_fallthru
        _
      // Predicated region
      $region133: #{tpu_custom_call.1} parent=127 // pred_check
        %p3310 = pneg %p606
      $region134: #{tpu_custom_call.1} parent=127 // pred_check_branch
        %3312 = sbr.rel (%p3310) target = $region136
      $region135: #{tpu_custom_call.1} parent=127 // pred_region
        %s3313 = smul.u32 4, %s38
        %p3314 = scmp.lt.s32.totalorder %s3313, 7
        %s3315 = scalar_select %p3314, %s3313, 7
        %s3316 = smul.addr %s3315, 8
        %s3317 = scalar_lea.vmem %s25, %s3316
      $region136: #{tpu_custom_call.1} parent=127 // pred_fallthru
        _
    $region128: #{tpu_custom_call.1} parent=5 // pred_fallthru
      _
  $region6: #{tpu_custom_call.1} parent=0 // loop_footer
    %s36 = sadd.s32 1, %s32
  $region7: #{tpu_custom_call.1} parent=0 // loop_footer_branch
    %31 = sbr.rel target = $region3
  $region8: #{tpu_custom_call.1} parent=0 // loop_exit
    _

</llo_original>
